<compile_context>
chip_gen: v7x
topology: tpu7x:2x2x1
jax: 0.10.0
libtpu: 0.0.40
codegen_flags: <defaults>
</compile_context>

<pallas_src>
import functools
import math

import jax
import jax.numpy as jnp
from jax.experimental import pallas as pl
from jax.experimental.pallas import tpu as pltpu

# ----------------------------- configuration --------------------------------
HIDDEN = 32
NUM_HEADS = 2
HEAD_DIM = HIDDEN // NUM_HEADS
MLP_HIDDEN = int(HIDDEN * 4.0)
LN_EPS = 1e-6
B, N, M = 2, 8, 8          # batch, image tokens, condition tokens

# Rows of the packed C-wide bias table (b_c).
ROW_SHIFT_MSA, ROW_SCALE_MSA, ROW_GATE_MSA = 0, 1, 2
ROW_SHIFT_MLP, ROW_SCALE_MLP, ROW_GATE_MLP = 3, 4, 5
ROW_B_SA_PROJ, ROW_B_CA_PROJ, ROW_B_FC2 = 6, 7, 8
NUM_C_BIAS_ROWS = 9

# Slab layout of the packed per-head attention weight stacks.
SA_IN_BASE = 0                      # self-attn  q/k/v head slabs (w_ain/b_ain)
CA_IN_BASE = 3 * NUM_HEADS          # cross-attn q/k/v head slabs
SA_OUT_BASE = 0                     # self-attn  per-head output-proj slabs (w_aout)
CA_OUT_BASE = NUM_HEADS             # cross-attn per-head output-proj slabs


# ----------------------------- math helpers ---------------------------------
def _silu(x):
    return x * jax.nn.sigmoid(x)


def _gelu_tanh(x):
    c = math.sqrt(2.0 / math.pi)
    return 0.5 * x * (1.0 + jnp.tanh(c * (x + 0.044715 * x * x * x)))


def _layernorm(x, eps=LN_EPS):
    mean = jnp.mean(x, axis=-1, keepdims=True)
    var = jnp.mean(jnp.square(x - mean), axis=-1, keepdims=True)
    return (x - mean) * jax.lax.rsqrt(var + eps)


def _mha_perhead(q_src, kv_src, w_in_ref, b_in_ref, w_out_ref, in_base, out_base):
    """Exact multi-head attention with per-head (C,d)/(d,C) weight slabs.

    q_src:(Nq,C) bf16, kv_src:(Nk,C) bf16.  Head slabs are indexed along a
    leading stack axis (free), so no sub-128-lane slicing or lane-dim concat is
    ever needed inside the kernel.  Matmuls run bf16->f32; softmax stats are f32.
    Returns  sum_h softmax(q_h k_h^T / sqrt(d)) v_h @ W_out_h  as (Nq, C) f32
    (output-projection bias NOT included).
    """
    H, d = NUM_HEADS, HEAD_DIM
    scale = 1.0 / math.sqrt(d)
    acc = None
    for h in range(H):                                   # static unrolled, H tiny
        iq, ik, iv = in_base + h, in_base + H + h, in_base + 2 * H + h
        q = jnp.dot(q_src, w_in_ref[iq], preferred_element_type=jnp.float32)
        q = (q + b_in_ref[iq:iq + 1, :]) * scale         # fold 1/sqrt(d) into q
        k = jnp.dot(kv_src, w_in_ref[ik], preferred_element_type=jnp.float32)
        k = k + b_in_ref[ik:ik + 1, :]
        v = jnp.dot(kv_src, w_in_ref[iv], preferred_element_type=jnp.float32)
        v = v + b_in_ref[iv:iv + 1, :]

        s = jnp.einsum('qd,kd->qk',
                       q.astype(jnp.bfloat16), k.astype(jnp.bfloat16),
                       preferred_element_type=jnp.float32)      # (Nq, Nk) f32
        s = s - jnp.max(s, axis=-1, keepdims=True)
        probs = jnp.exp(s)
        probs = probs * pl.reciprocal(jnp.sum(probs, axis=-1, keepdims=True),
                                      approx=True)              # EUP slot (epilogue)
        o = jnp.dot(probs.astype(jnp.bfloat16), v.astype(jnp.bfloat16),
                    preferred_element_type=jnp.float32)          # (Nq, d)
        part = jnp.dot(o.astype(jnp.bfloat16), w_out_ref[out_base + h],
                       preferred_element_type=jnp.float32)       # (Nq, C)
        acc = part if acc is None else acc + part
    return acc


# ------------------------------ fused kernel ---------------------------------
def sana_block_kernel(x_ref, y_ref, t_ref,
                      w_mod_ref, w_ain_ref, w_aout_ref, w_fc1_ref, w_fc2_ref,
                      b_c_ref, b_ain_ref, b_fc1_ref,
                      o_ref):
    b = pl.program_id(0)
    x = x_ref[...]                               # (N, C) f32: this batch element
    y = y_ref[...].astype(jnp.bfloat16)          # (B*M, C): mask=None -> kv tokens
                                                 # flattened across the batch
    t_row = t_ref[pl.ds(b, 1), :]                # (1, C) f32
    silu_t = _silu(t_row).astype(jnp.bfloat16)

    def mod_vec(i):                              # adaLN chunk i -> (1, C) f32
        return (jnp.dot(silu_t, w_mod_ref[i], preferred_element_type=jnp.float32)
                + b_c_ref[i:i + 1, :])

    shift_msa, scale_msa, gate_msa = mod_vec(0), mod_vec(1), mod_vec(2)
    shift_mlp, scale_mlp, gate_mlp = mod_vec(3), mod_vec(4), mod_vec(5)

    # ---- self-attention branch (per batch element: no (T,T) mask needed) -----
    xm = (_layernorm(x) * (1.0 + scale_msa) + shift_msa).astype(jnp.bfloat16)
    sa = _mha_perhead(xm, xm, w_ain_ref, b_ain_ref, w_aout_ref,
                      SA_IN_BASE, SA_OUT_BASE)
    sa = sa + b_c_ref[ROW_B_SA_PROJ:ROW_B_SA_PROJ + 1, :]
    x = x + gate_msa * sa

    # ---- cross-attention branch (PyTorch mask=None semantics) ----------------
    # TODO(synk): k/v projections of y are recomputed once per batch step; at
    # larger B hoist them (compute once into scratch / a separate grid phase).
    ca = _mha_perhead(x.astype(jnp.bfloat16), y,
                      w_ain_ref, b_ain_ref, w_aout_ref,
                      CA_IN_BASE, CA_OUT_BASE)
    ca = ca + b_c_ref[ROW_B_CA_PROJ:ROW_B_CA_PROJ + 1, :]
    x = x + ca

    # ---- MLP branch (GELU tanh) -----------------------------------------------
    xm = (_layernorm(x) * (1.0 + scale_mlp) + shift_mlp).astype(jnp.bfloat16)
    h = _gelu_tanh(jnp.dot(xm, w_fc1_ref[...],
                           preferred_element_type=jnp.float32) + b_fc1_ref[...])
    mlp = (jnp.dot(h.astype(jnp.bfloat16), w_fc2_ref[...],
                   preferred_element_type=jnp.float32)
           + b_c_ref[ROW_B_FC2:ROW_B_FC2 + 1, :])
    o_ref[...] = x + gate_mlp * mlp


# ------------------------- host-side parameter packing -------------------------
def pack_params(p):
    """One-time repack of the module parameters for the kernel.

    * fused qkv / kv / adaLN tables split into per-chunk / per-head slabs stacked
      along a leading axis (no non-128-aligned lane slicing inside the kernel),
    * matmul weights cast to bf16 (f32 accumulation in-kernel),
    * the ten bias vectors consolidated into three packed operands.
    """
    C, H, d = HIDDEN, NUM_HEADS, HEAD_DIM
    w_qkv, b_qkv = p["w_qkv"], p["b_qkv"].reshape(-1)
    w_kv, b_kv = p["w_kv"], p["b_kv"].reshape(-1)
    b_q = p["b_q"].reshape(-1)

    w_mod = jnp.stack([p["w_t"][:, i * C:(i + 1) * C] for i in range(6)], 0)

    w_in, b_in = [], []
    for j in range(3):                                   # self-attn q, k, v
        for h in range(H):
            w_in.append(w_qkv[:, j * C + h * d: j * C + (h + 1) * d])
            b_in.append(b_qkv[j * C + h * d: j * C + (h + 1) * d])
    for h in range(H):                                   # cross-attn q
        w_in.append(p["w_q"][:, h * d:(h + 1) * d])
        b_in.append(b_q[h * d:(h + 1) * d])
    for j in range(2):                                   # cross-attn k, v
        for h in range(H):
            w_in.append(w_kv[:, j * C + h * d: j * C + (h + 1) * d])
            b_in.append(b_kv[j * C + h * d: j * C + (h + 1) * d])
    w_ain = jnp.stack(w_in, 0)                           # (12, C, d)
    b_ain = jnp.stack(b_in, 0)                           # (12, d)

    w_aout = jnp.stack([p["w_proj"][h * d:(h + 1) * d, :] for h in range(H)]
                       + [p["w_cproj"][h * d:(h + 1) * d, :] for h in range(H)],
                       0)                                # (4, d, C)

    b_c = jnp.concatenate([p["b_t"].reshape(6, C),
                           p["b_proj"].reshape(1, C),
                           p["b_cproj"].reshape(1, C),
                           p["b_fc2"].reshape(1, C)], 0)  # (9, C)

    bf16 = jnp.bfloat16
    return dict(w_mod=w_mod.astype(bf16), w_ain=w_ain.astype(bf16),
                w_aout=w_aout.astype(bf16),
                w_fc1=p["w_fc1"].astype(bf16), w_fc2=p["w_fc2"].astype(bf16),
                b_c=b_c.astype(jnp.float32), b_ain=b_ain.astype(jnp.float32),
                b_fc1=p["b_fc1"].astype(jnp.float32))


# ------------------------------- wrapper --------------------------------------
@functools.partial(jax.jit, donate_argnums=(0,))
def sana_ms_adaln_block(x, y, t, q):
    """Full SanaMSAdaLNBlock forward: one pallas_call, grid over the batch."""
    Bv, Nv, C = x.shape
    d = HEAD_DIM
    y_flat = y.reshape(-1, C)            # mask=None: condition tokens flattened
    n_kv = y_flat.shape[0]

    # TODO(synk): at production sizes (C multiple of 128, N in the thousands),
    # tile tokens flash-style (q-tile x kv-tile grid for attention, token tiles
    # for the MLP), keep the residual stream lane-dense, use 256-class tiles on
    # v6e/v7x (128 on v5e), and set pltpu.CompilerParams(vmem_limit_bytes=...)
    # for v7x's 64 MiB VMEM.  At this toy size one batch element per grid step
    # is fully VMEM resident, so no inner tiling is needed.
    return pl.pallas_call(
        sana_block_kernel,
        out_shape=jax.ShapeDtypeStruct((Bv, Nv, C), jnp.float32),
        grid_spec=pltpu.PrefetchScalarGridSpec(
            num_scalar_prefetch=0,
            grid=(Bv,),
            in_specs=[
                pl.BlockSpec((None, Nv, C), lambda b: (b, 0, 0)),          # x (this batch)
                pl.BlockSpec((n_kv, C), lambda b: (0, 0)),                 # y (all batches)
                pl.BlockSpec((Bv, C), lambda b: (0, 0)),                   # t
                pl.BlockSpec((6, C, C), lambda b: (0, 0, 0)),              # w_mod
                pl.BlockSpec((6 * NUM_HEADS, C, d), lambda b: (0, 0, 0)),  # w_ain
                pl.BlockSpec((2 * NUM_HEADS, d, C), lambda b: (0, 0, 0)),  # w_aout
                pl.BlockSpec((C, MLP_HIDDEN), lambda b: (0, 0)),           # w_fc1
                pl.BlockSpec((MLP_HIDDEN, C), lambda b: (0, 0)),           # w_fc2
                pl.BlockSpec((NUM_C_BIAS_ROWS, C), lambda b: (0, 0)),      # b_c
                pl.BlockSpec((6 * NUM_HEADS, d), lambda b: (0, 0)),        # b_ain
                pl.BlockSpec((1, MLP_HIDDEN), lambda b: (0, 0)),           # b_fc1
            ],
            out_specs=pl.BlockSpec((None, Nv, C), lambda b: (b, 0, 0)),
        ),
        input_output_aliases={0: 0},     # residual stream updated in place
        compiler_params=pltpu.CompilerParams(
            dimension_semantics=("parallel",),     # batch -> both TCs on v7x
        ),
    )(x, y_flat, t,
      q["w_mod"], q["w_ain"], q["w_aout"], q["w_fc1"], q["w_fc2"],
      q["b_c"], q["b_ain"], q["b_fc1"])


# ----------------------------- pure-JAX reference ------------------------------
def reference_forward(x, y, t, p):
    """Exact (f32) module semantics, used only for the correctness check."""
    Bv, Nv, C = x.shape
    Mv = y.shape[1]
    H, d = NUM_HEADS, HEAD_DIM

    mod = _silu(t) @ p["w_t"] + p["b_t"]
    (shift_msa, scale_msa, gate_msa,
     shift_mlp, scale_mlp, gate_mlp) = [mod[:, i * C:(i + 1) * C][:, None, :]
                                        for i in range(6)]

    # self-attention (per batch element, as in the PyTorch FlashAttention module)
    xm = _layernorm(x) * (1.0 + scale_msa) + shift_msa
    qkv = xm @ p["w_qkv"] + p["b_qkv"]
    q, k, v = qkv[..., :C], qkv[..., C:2 * C], qkv[..., 2 * C:]
    qh = q.reshape(Bv, Nv, H, d)
    kh = k.reshape(Bv, Nv, H, d)
    vh = v.reshape(Bv, Nv, H, d)
    s = jnp.einsum('bqhd,bkhd->bhqk', qh, kh) / math.sqrt(d)
    pr = jax.nn.softmax(s, axis=-1)
    o = jnp.einsum('bhqk,bkhd->bqhd', pr, vh).reshape(Bv, Nv, C)
    o = o @ p["w_proj"] + p["b_proj"]
    x = x + gate_msa * o

    # cross-attention with mask=None: queries/keys flattened over the batch
    xf = x.reshape(Bv * Nv, C)
    yf = y.reshape(Bv * Mv, C)
    qc = xf @ p["w_q"] + p["b_q"]
    kv = yf @ p["w_kv"] + p["b_kv"]
    kc, vc = kv[:, :C], kv[:, C:]
    qh = qc.reshape(-1, H, d)
    kh = kc.reshape(-1, H, d)
    vh = vc.reshape(-1, H, d)
    s = jnp.einsum('qhd,khd->hqk', qh, kh) / math.sqrt(d)
    pr = jax.nn.softmax(s, axis=-1)
    ca = jnp.einsum('hqk,khd->qhd', pr, vh).reshape(-1, C)
    ca = ca @ p["w_cproj"] + p["b_cproj"]
    x = x + ca.reshape(Bv, Nv, C)

    # MLP (GELU tanh)
    xm = _layernorm(x) * (1.0 + scale_mlp) + shift_mlp
    h = _gelu_tanh(xm @ p["w_fc1"] + p["b_fc1"])
    o = h @ p["w_fc2"] + p["b_fc2"]
    return x + gate_mlp * o


# --------------------------------- main -----------------------------------------
if __name__ == "__main__":
    key = jax.random.PRNGKey(0)
    kx, ky, kt = jax.random.split(key, 3)
    x = jax.random.normal(kx, (B, N, HIDDEN), jnp.float32)
    y = jax.random.normal(ky, (B, M, HIDDEN), jnp.float32)
    t = jax.random.normal(kt, (B, HIDDEN), jnp.float32)

    # deterministic synthetic parameters (module __init__ shapes, (in, out) layout)
    wkeys = iter(jax.random.split(jax.random.PRNGKey(42), 16))

    def init(shape, s=0.05):
        return jax.random.normal(next(wkeys), shape, jnp.float32) * s

    params = dict(
        w_t=init((HIDDEN, 6 * HIDDEN)),     b_t=init((1, 6 * HIDDEN)),
        w_qkv=init((HIDDEN, 3 * HIDDEN)),   b_qkv=init((1, 3 * HIDDEN)),
        w_proj=init((HIDDEN, HIDDEN)),      b_proj=init((1, HIDDEN)),
        w_q=init((HIDDEN, HIDDEN)),         b_q=init((1, HIDDEN)),
        w_kv=init((HIDDEN, 2 * HIDDEN)),    b_kv=init((1, 2 * HIDDEN)),
        w_cproj=init((HIDDEN, HIDDEN)),     b_cproj=init((1, HIDDEN)),
        w_fc1=init((HIDDEN, MLP_HIDDEN)),   b_fc1=init((1, MLP_HIDDEN)),
        w_fc2=init((MLP_HIDDEN, HIDDEN)),   b_fc2=init((1, HIDDEN)),
    )

    packed = pack_params(params)

    # Reference BEFORE the kernel call: x is donated/aliased into the output.
    ref = jax.block_until_ready(reference_forward(x, y, t, params))

    out = jax.block_until_ready(sana_ms_adaln_block(x, y, t, packed))

    assert out.shape == (B, N, HIDDEN)
    assert bool(jnp.all(jnp.isfinite(out)))
    # bf16 matmul operands (f32 accumulation) + the approximate softmax
    # reciprocal bound the deviation well below 1e-2 at these magnitudes.
    max_err = float(jnp.max(jnp.abs(out - ref)))
    assert max_err < 1e-2, f"mismatch vs reference: {max_err}"

    # TODO(synk): DropPath / dropout layers are identities at p=0 and are omitted.
    print("KERNEL_OK")
</pallas_src>

<mosaic_0001>
module attributes {stable_mosaic.version = 11 : i64} {
  func.func @sana_block_kernel(%arg0: i32, %arg1: memref<1x8x32xf32, #tpu.memory_space<vmem>>, %arg2: memref<16x32xf32, #tpu.memory_space<vmem>>, %arg3: memref<2x32xf32, #tpu.memory_space<vmem>>, %arg4: memref<6x32x32xbf16, #tpu.memory_space<vmem>>, %arg5: memref<12x32x16xbf16, #tpu.memory_space<vmem>>, %arg6: memref<4x16x32xbf16, #tpu.memory_space<vmem>>, %arg7: memref<32x128xbf16, #tpu.memory_space<vmem>>, %arg8: memref<128x32xbf16, #tpu.memory_space<vmem>>, %arg9: memref<9x32xf32, #tpu.memory_space<vmem>>, %arg10: memref<12x16xf32, #tpu.memory_space<vmem>>, %arg11: memref<1x128xf32, #tpu.memory_space<vmem>>, %arg12: memref<1x8x32xf32, #tpu.memory_space<vmem>>) attributes {dimension_semantics = [#tpu.dimension_semantics<parallel>], iteration_bounds = array<i64: 2>, scalar_prefetch = 0 : i64, scratch_operands = 0 : i64, tpu.core_type = #tpu.core_type<tc>, window_params = [{transform_indices = @transform_0, window_bounds = array<i64: 1, 8, 32>}, {pipeline_mode = #tpu.pipeline_mode<synchronous>, transform_indices = @transform_1, window_bounds = array<i64: 16, 32>}, {pipeline_mode = #tpu.pipeline_mode<synchronous>, transform_indices = @transform_2, window_bounds = array<i64: 2, 32>}, {pipeline_mode = #tpu.pipeline_mode<synchronous>, transform_indices = @transform_3, window_bounds = array<i64: 6, 32, 32>}, {pipeline_mode = #tpu.pipeline_mode<synchronous>, transform_indices = @transform_4, window_bounds = array<i64: 12, 32, 16>}, {pipeline_mode = #tpu.pipeline_mode<synchronous>, transform_indices = @transform_5, window_bounds = array<i64: 4, 16, 32>}, {pipeline_mode = #tpu.pipeline_mode<synchronous>, transform_indices = @transform_6, window_bounds = array<i64: 32, 128>}, {pipeline_mode = #tpu.pipeline_mode<synchronous>, transform_indices = @transform_7, window_bounds = array<i64: 128, 32>}, {pipeline_mode = #tpu.pipeline_mode<synchronous>, transform_indices = @transform_8, window_bounds = array<i64: 9, 32>}, {pipeline_mode = #tpu.pipeline_mode<synchronous>, transform_indices = @transform_9, window_bounds = array<i64: 12, 16>}, {pipeline_mode = #tpu.pipeline_mode<synchronous>, transform_indices = @transform_10, window_bounds = array<i64: 1, 128>}, {transform_indices = @transform_11, window_bounds = array<i64: 1, 8, 32>}]} {
    %c0 = arith.constant 0 : index
    %c0_0 = arith.constant 0 : index
    %c0_1 = arith.constant 0 : index
    %0 = vector.load %arg1[%c0, %c0_0, %c0_1] : memref<1x8x32xf32, #tpu.memory_space<vmem>>, vector<1x8x32xf32>
    %1 = vector.shape_cast %0 : vector<1x8x32xf32> to vector<8x32xf32>
    %c0_2 = arith.constant 0 : index
    %c0_3 = arith.constant 0 : index
    %2 = vector.load %arg2[%c0_2, %c0_3] : memref<16x32xf32, #tpu.memory_space<vmem>>, vector<16x32xf32>
    %3 = arith.truncf %2 : vector<16x32xf32> to vector<16x32xbf16>
    %4 = arith.index_cast %arg0 : i32 to index
    %c0_4 = arith.constant 0 : index
    %5 = vector.load %arg3[%4, %c0_4] : memref<2x32xf32, #tpu.memory_space<vmem>>, vector<1x32xf32>
    %6 = arith.negf %5 : vector<1x32xf32>
    %7 = math.exp %6 : vector<1x32xf32>
    %cst = arith.constant 1.000000e+00 : f32
    %8 = vector.broadcast %cst : f32 to vector<1x32xf32>
    %9 = arith.addf %8, %7 : vector<1x32xf32>
    %10 = arith.divf %8, %9 : vector<1x32xf32>
    %11 = arith.mulf %5, %10 : vector<1x32xf32>
    %12 = arith.truncf %11 : vector<1x32xf32> to vector<1x32xbf16>
    %c0_5 = arith.constant 0 : index
    %c0_6 = arith.constant 0 : index
    %c0_7 = arith.constant 0 : index
    %13 = vector.load %arg4[%c0_5, %c0_6, %c0_7] : memref<6x32x32xbf16, #tpu.memory_space<vmem>>, vector<1x32x32xbf16>
    %14 = vector.shape_cast %13 : vector<1x32x32xbf16> to vector<32x32xbf16>
    %cst_8 = arith.constant dense<0.000000e+00> : vector<1x32xf32>
    %15 = tpu.matmul %12, %14, %cst_8 {dimension_numbers = #tpu.dot_dimension_numbers<[1], [0], [0], [1], [0, 0, 1, 1], [], []>} : vector<1x32xbf16>, vector<32x32xbf16>, vector<1x32xf32> -> vector<1x32xf32>
    %c0_9 = arith.constant 0 : index
    %c0_10 = arith.constant 0 : index
    %16 = vector.load %arg9[%c0_9, %c0_10] : memref<9x32xf32, #tpu.memory_space<vmem>>, vector<1x32xf32>
    %17 = arith.addf %15, %16 : vector<1x32xf32>
    %c1 = arith.constant 1 : index
    %c0_11 = arith.constant 0 : index
    %c0_12 = arith.constant 0 : index
    %18 = vector.load %arg4[%c1, %c0_11, %c0_12] : memref<6x32x32xbf16, #tpu.memory_space<vmem>>, vector<1x32x32xbf16>
    %19 = vector.shape_cast %18 : vector<1x32x32xbf16> to vector<32x32xbf16>
    %cst_13 = arith.constant dense<0.000000e+00> : vector<1x32xf32>
    %20 = tpu.matmul %12, %19, %cst_13 {dimension_numbers = #tpu.dot_dimension_numbers<[1], [0], [0], [1], [0, 0, 1, 1], [], []>} : vector<1x32xbf16>, vector<32x32xbf16>, vector<1x32xf32> -> vector<1x32xf32>
    %c1_14 = arith.constant 1 : index
    %c0_15 = arith.constant 0 : index
    %21 = vector.load %arg9[%c1_14, %c0_15] : memref<9x32xf32, #tpu.memory_space<vmem>>, vector<1x32xf32>
    %22 = arith.addf %20, %21 : vector<1x32xf32>
    %c2 = arith.constant 2 : index
    %c0_16 = arith.constant 0 : index
    %c0_17 = arith.constant 0 : index
    %23 = vector.load %arg4[%c2, %c0_16, %c0_17] : memref<6x32x32xbf16, #tpu.memory_space<vmem>>, vector<1x32x32xbf16>
    %24 = vector.shape_cast %23 : vector<1x32x32xbf16> to vector<32x32xbf16>
    %cst_18 = arith.constant dense<0.000000e+00> : vector<1x32xf32>
    %25 = tpu.matmul %12, %24, %cst_18 {dimension_numbers = #tpu.dot_dimension_numbers<[1], [0], [0], [1], [0, 0, 1, 1], [], []>} : vector<1x32xbf16>, vector<32x32xbf16>, vector<1x32xf32> -> vector<1x32xf32>
    %c2_19 = arith.constant 2 : index
    %c0_20 = arith.constant 0 : index
    %26 = vector.load %arg9[%c2_19, %c0_20] : memref<9x32xf32, #tpu.memory_space<vmem>>, vector<1x32xf32>
    %27 = arith.addf %25, %26 : vector<1x32xf32>
    %c3 = arith.constant 3 : index
    %c0_21 = arith.constant 0 : index
    %c0_22 = arith.constant 0 : index
    %28 = vector.load %arg4[%c3, %c0_21, %c0_22] : memref<6x32x32xbf16, #tpu.memory_space<vmem>>, vector<1x32x32xbf16>
    %29 = vector.shape_cast %28 : vector<1x32x32xbf16> to vector<32x32xbf16>
    %cst_23 = arith.constant dense<0.000000e+00> : vector<1x32xf32>
    %30 = tpu.matmul %12, %29, %cst_23 {dimension_numbers = #tpu.dot_dimension_numbers<[1], [0], [0], [1], [0, 0, 1, 1], [], []>} : vector<1x32xbf16>, vector<32x32xbf16>, vector<1x32xf32> -> vector<1x32xf32>
    %c3_24 = arith.constant 3 : index
    %c0_25 = arith.constant 0 : index
    %31 = vector.load %arg9[%c3_24, %c0_25] : memref<9x32xf32, #tpu.memory_space<vmem>>, vector<1x32xf32>
    %32 = arith.addf %30, %31 : vector<1x32xf32>
    %c4 = arith.constant 4 : index
    %c0_26 = arith.constant 0 : index
    %c0_27 = arith.constant 0 : index
    %33 = vector.load %arg4[%c4, %c0_26, %c0_27] : memref<6x32x32xbf16, #tpu.memory_space<vmem>>, vector<1x32x32xbf16>
    %34 = vector.shape_cast %33 : vector<1x32x32xbf16> to vector<32x32xbf16>
    %cst_28 = arith.constant dense<0.000000e+00> : vector<1x32xf32>
    %35 = tpu.matmul %12, %34, %cst_28 {dimension_numbers = #tpu.dot_dimension_numbers<[1], [0], [0], [1], [0, 0, 1, 1], [], []>} : vector<1x32xbf16>, vector<32x32xbf16>, vector<1x32xf32> -> vector<1x32xf32>
    %c4_29 = arith.constant 4 : index
    %c0_30 = arith.constant 0 : index
    %36 = vector.load %arg9[%c4_29, %c0_30] : memref<9x32xf32, #tpu.memory_space<vmem>>, vector<1x32xf32>
    %37 = arith.addf %35, %36 : vector<1x32xf32>
    %c5 = arith.constant 5 : index
    %c0_31 = arith.constant 0 : index
    %c0_32 = arith.constant 0 : index
    %38 = vector.load %arg4[%c5, %c0_31, %c0_32] : memref<6x32x32xbf16, #tpu.memory_space<vmem>>, vector<1x32x32xbf16>
    %39 = vector.shape_cast %38 : vector<1x32x32xbf16> to vector<32x32xbf16>
    %cst_33 = arith.constant dense<0.000000e+00> : vector<1x32xf32>
    %40 = tpu.matmul %12, %39, %cst_33 {dimension_numbers = #tpu.dot_dimension_numbers<[1], [0], [0], [1], [0, 0, 1, 1], [], []>} : vector<1x32xbf16>, vector<32x32xbf16>, vector<1x32xf32> -> vector<1x32xf32>
    %c5_34 = arith.constant 5 : index
    %c0_35 = arith.constant 0 : index
    %41 = vector.load %arg9[%c5_34, %c0_35] : memref<9x32xf32, #tpu.memory_space<vmem>>, vector<1x32xf32>
    %42 = arith.addf %40, %41 : vector<1x32xf32>
    %cst_36 = arith.constant dense<0.000000e+00> : vector<8xf32>
    %43 = vector.multi_reduction <add>, %1, %cst_36 [1] : vector<8x32xf32> to vector<8xf32>
    %44 = vector.shape_cast %43 : vector<8xf32> to vector<8x1xf32>
    %cst_37 = arith.constant 3.200000e+01 : f32
    %45 = vector.broadcast %cst_37 : f32 to vector<8x1xf32>
    %46 = arith.divf %44, %45 : vector<8x1xf32>
    %47 = vector.broadcast %46 : vector<8x1xf32> to vector<8x32xf32>
    %48 = arith.subf %1, %47 : vector<8x32xf32>
    %49 = arith.mulf %48, %48 : vector<8x32xf32>
    %cst_38 = arith.constant dense<0.000000e+00> : vector<8xf32>
    %50 = vector.multi_reduction <add>, %49, %cst_38 [1] : vector<8x32xf32> to vector<8xf32>
    %51 = vector.shape_cast %50 : vector<8xf32> to vector<8x1xf32>
    %cst_39 = arith.constant 3.200000e+01 : f32
    %52 = vector.broadcast %cst_39 : f32 to vector<8x1xf32>
    %53 = arith.divf %51, %52 : vector<8x1xf32>
    %54 = vector.broadcast %46 : vector<8x1xf32> to vector<8x32xf32>
    %55 = arith.subf %1, %54 : vector<8x32xf32>
    %cst_40 = arith.constant 9.99999997E-7 : f32
    %56 = vector.broadcast %cst_40 : f32 to vector<8x1xf32>
    %57 = arith.addf %53, %56 : vector<8x1xf32>
    %58 = math.rsqrt %57 : vector<8x1xf32>
    %59 = vector.broadcast %58 : vector<8x1xf32> to vector<8x32xf32>
    %60 = arith.mulf %55, %59 : vector<8x32xf32>
    %cst_41 = arith.constant 1.000000e+00 : f32
    %61 = vector.broadcast %cst_41 : f32 to vector<1x32xf32>
    %62 = arith.addf %61, %22 : vector<1x32xf32>
    %63 = vector.broadcast %62 : vector<1x32xf32> to vector<8x32xf32>
    %64 = arith.mulf %60, %63 : vector<8x32xf32>
    %65 = vector.broadcast %17 : vector<1x32xf32> to vector<8x32xf32>
    %66 = arith.addf %64, %65 : vector<8x32xf32>
    %67 = arith.truncf %66 : vector<8x32xf32> to vector<8x32xbf16>
    %c0_42 = arith.constant 0 : index
    %c0_43 = arith.constant 0 : index
    %c0_44 = arith.constant 0 : index
    %68 = vector.load %arg5[%c0_42, %c0_43, %c0_44] : memref<12x32x16xbf16, #tpu.memory_space<vmem>>, vector<1x32x16xbf16>
    %69 = vector.shape_cast %68 : vector<1x32x16xbf16> to vector<32x16xbf16>
    %cst_45 = arith.constant dense<0.000000e+00> : vector<8x16xf32>
    %70 = tpu.matmul %67, %69, %cst_45 {dimension_numbers = #tpu.dot_dimension_numbers<[1], [0], [0], [1], [0, 0, 1, 1], [], []>} : vector<8x32xbf16>, vector<32x16xbf16>, vector<8x16xf32> -> vector<8x16xf32>
    %c0_46 = arith.constant 0 : index
    %c0_47 = arith.constant 0 : index
    %71 = vector.load %arg10[%c0_46, %c0_47] : memref<12x16xf32, #tpu.memory_space<vmem>>, vector<1x16xf32>
    %72 = vector.broadcast %71 : vector<1x16xf32> to vector<8x16xf32>
    %73 = arith.addf %70, %72 : vector<8x16xf32>
    %cst_48 = arith.constant 2.500000e-01 : f32
    %74 = vector.broadcast %cst_48 : f32 to vector<8x16xf32>
    %75 = arith.mulf %73, %74 : vector<8x16xf32>
    %c2_49 = arith.constant 2 : index
    %c0_50 = arith.constant 0 : index
    %c0_51 = arith.constant 0 : index
    %76 = vector.load %arg5[%c2_49, %c0_50, %c0_51] : memref<12x32x16xbf16, #tpu.memory_space<vmem>>, vector<1x32x16xbf16>
    %77 = vector.shape_cast %76 : vector<1x32x16xbf16> to vector<32x16xbf16>
    %cst_52 = arith.constant dense<0.000000e+00> : vector<8x16xf32>
    %78 = tpu.matmul %67, %77, %cst_52 {dimension_numbers = #tpu.dot_dimension_numbers<[1], [0], [0], [1], [0, 0, 1, 1], [], []>} : vector<8x32xbf16>, vector<32x16xbf16>, vector<8x16xf32> -> vector<8x16xf32>
    %c2_53 = arith.constant 2 : index
    %c0_54 = arith.constant 0 : index
    %79 = vector.load %arg10[%c2_53, %c0_54] : memref<12x16xf32, #tpu.memory_space<vmem>>, vector<1x16xf32>
    %80 = vector.broadcast %79 : vector<1x16xf32> to vector<8x16xf32>
    %81 = arith.addf %78, %80 : vector<8x16xf32>
    %c4_55 = arith.constant 4 : index
    %c0_56 = arith.constant 0 : index
    %c0_57 = arith.constant 0 : index
    %82 = vector.load %arg5[%c4_55, %c0_56, %c0_57] : memref<12x32x16xbf16, #tpu.memory_space<vmem>>, vector<1x32x16xbf16>
    %83 = vector.shape_cast %82 : vector<1x32x16xbf16> to vector<32x16xbf16>
    %cst_58 = arith.constant dense<0.000000e+00> : vector<8x16xf32>
    %84 = tpu.matmul %67, %83, %cst_58 {dimension_numbers = #tpu.dot_dimension_numbers<[1], [0], [0], [1], [0, 0, 1, 1], [], []>} : vector<8x32xbf16>, vector<32x16xbf16>, vector<8x16xf32> -> vector<8x16xf32>
    %c4_59 = arith.constant 4 : index
    %c0_60 = arith.constant 0 : index
    %85 = vector.load %arg10[%c4_59, %c0_60] : memref<12x16xf32, #tpu.memory_space<vmem>>, vector<1x16xf32>
    %86 = vector.broadcast %85 : vector<1x16xf32> to vector<8x16xf32>
    %87 = arith.addf %84, %86 : vector<8x16xf32>
    %88 = arith.truncf %75 : vector<8x16xf32> to vector<8x16xbf16>
    %89 = arith.truncf %81 : vector<8x16xf32> to vector<8x16xbf16>
    "tpu.trace_start"() <{level = 10 : i32, message = "qd,kd->qk"}> : () -> ()
    %cst_61 = arith.constant dense<0.000000e+00> : vector<8x8xf32>
    %90 = tpu.matmul %88, %89, %cst_61 {dimension_numbers = #tpu.dot_dimension_numbers<[1], [1], [0], [0], [0, 0, 1, 0], [], []>} : vector<8x16xbf16>, vector<8x16xbf16>, vector<8x8xf32> -> vector<8x8xf32>
    "tpu.trace_stop"() : () -> ()
    %cst_62 = arith.constant dense<0xFF800000> : vector<8xf32>
    %91 = vector.multi_reduction <maximumf>, %90, %cst_62 [1] : vector<8x8xf32> to vector<8xf32>
    %92 = vector.shape_cast %91 : vector<8xf32> to vector<8x1xf32>
    %93 = vector.broadcast %92 : vector<8x1xf32> to vector<8x8xf32>
    %94 = arith.subf %90, %93 : vector<8x8xf32>
    %95 = math.exp %94 : vector<8x8xf32>
    %cst_63 = arith.constant dense<0.000000e+00> : vector<8xf32>
    %96 = vector.multi_reduction <add>, %95, %cst_63 [1] : vector<8x8xf32> to vector<8xf32>
    %97 = vector.shape_cast %96 : vector<8xf32> to vector<8x1xf32>
    %98 = tpu.reciprocal %97 {approx = true} : vector<8x1xf32> -> vector<8x1xf32>
    %99 = vector.broadcast %98 : vector<8x1xf32> to vector<8x8xf32>
    %100 = arith.mulf %95, %99 : vector<8x8xf32>
    %101 = arith.truncf %100 : vector<8x8xf32> to vector<8x8xbf16>
    %102 = arith.truncf %87 : vector<8x16xf32> to vector<8x16xbf16>
    %cst_64 = arith.constant dense<0.000000e+00> : vector<8x16xf32>
    %103 = tpu.matmul %101, %102, %cst_64 {dimension_numbers = #tpu.dot_dimension_numbers<[1], [0], [0], [1], [0, 0, 1, 1], [], []>} : vector<8x8xbf16>, vector<8x16xbf16>, vector<8x16xf32> -> vector<8x16xf32>
    %104 = arith.truncf %103 : vector<8x16xf32> to vector<8x16xbf16>
    %c0_65 = arith.constant 0 : index
    %c0_66 = arith.constant 0 : index
    %c0_67 = arith.constant 0 : index
    %105 = vector.load %arg6[%c0_65, %c0_66, %c0_67] : memref<4x16x32xbf16, #tpu.memory_space<vmem>>, vector<1x16x32xbf16>
    %106 = vector.shape_cast %105 : vector<1x16x32xbf16> to vector<16x32xbf16>
    %cst_68 = arith.constant dense<0.000000e+00> : vector<8x32xf32>
    %107 = tpu.matmul %104, %106, %cst_68 {dimension_numbers = #tpu.dot_dimension_numbers<[1], [0], [0], [1], [0, 0, 1, 1], [], []>} : vector<8x16xbf16>, vector<16x32xbf16>, vector<8x32xf32> -> vector<8x32xf32>
    %c1_69 = arith.constant 1 : index
    %c0_70 = arith.constant 0 : index
    %c0_71 = arith.constant 0 : index
    %108 = vector.load %arg5[%c1_69, %c0_70, %c0_71] : memref<12x32x16xbf16, #tpu.memory_space<vmem>>, vector<1x32x16xbf16>
    %109 = vector.shape_cast %108 : vector<1x32x16xbf16> to vector<32x16xbf16>
    %cst_72 = arith.constant dense<0.000000e+00> : vector<8x16xf32>
    %110 = tpu.matmul %67, %109, %cst_72 {dimension_numbers = #tpu.dot_dimension_numbers<[1], [0], [0], [1], [0, 0, 1, 1], [], []>} : vector<8x32xbf16>, vector<32x16xbf16>, vector<8x16xf32> -> vector<8x16xf32>
    %c1_73 = arith.constant 1 : index
    %c0_74 = arith.constant 0 : index
    %111 = vector.load %arg10[%c1_73, %c0_74] : memref<12x16xf32, #tpu.memory_space<vmem>>, vector<1x16xf32>
    %112 = vector.broadcast %111 : vector<1x16xf32> to vector<8x16xf32>
    %113 = arith.addf %110, %112 : vector<8x16xf32>
    %cst_75 = arith.constant 2.500000e-01 : f32
    %114 = vector.broadcast %cst_75 : f32 to vector<8x16xf32>
    %115 = arith.mulf %113, %114 : vector<8x16xf32>
    %c3_76 = arith.constant 3 : index
    %c0_77 = arith.constant 0 : index
    %c0_78 = arith.constant 0 : index
    %116 = vector.load %arg5[%c3_76, %c0_77, %c0_78] : memref<12x32x16xbf16, #tpu.memory_space<vmem>>, vector<1x32x16xbf16>
    %117 = vector.shape_cast %116 : vector<1x32x16xbf16> to vector<32x16xbf16>
    %cst_79 = arith.constant dense<0.000000e+00> : vector<8x16xf32>
    %118 = tpu.matmul %67, %117, %cst_79 {dimension_numbers = #tpu.dot_dimension_numbers<[1], [0], [0], [1], [0, 0, 1, 1], [], []>} : vector<8x32xbf16>, vector<32x16xbf16>, vector<8x16xf32> -> vector<8x16xf32>
    %c3_80 = arith.constant 3 : index
    %c0_81 = arith.constant 0 : index
    %119 = vector.load %arg10[%c3_80, %c0_81] : memref<12x16xf32, #tpu.memory_space<vmem>>, vector<1x16xf32>
    %120 = vector.broadcast %119 : vector<1x16xf32> to vector<8x16xf32>
    %121 = arith.addf %118, %120 : vector<8x16xf32>
    %c5_82 = arith.constant 5 : index
    %c0_83 = arith.constant 0 : index
    %c0_84 = arith.constant 0 : index
    %122 = vector.load %arg5[%c5_82, %c0_83, %c0_84] : memref<12x32x16xbf16, #tpu.memory_space<vmem>>, vector<1x32x16xbf16>
    %123 = vector.shape_cast %122 : vector<1x32x16xbf16> to vector<32x16xbf16>
    %cst_85 = arith.constant dense<0.000000e+00> : vector<8x16xf32>
    %124 = tpu.matmul %67, %123, %cst_85 {dimension_numbers = #tpu.dot_dimension_numbers<[1], [0], [0], [1], [0, 0, 1, 1], [], []>} : vector<8x32xbf16>, vector<32x16xbf16>, vector<8x16xf32> -> vector<8x16xf32>
    %c5_86 = arith.constant 5 : index
    %c0_87 = arith.constant 0 : index
    %125 = vector.load %arg10[%c5_86, %c0_87] : memref<12x16xf32, #tpu.memory_space<vmem>>, vector<1x16xf32>
    %126 = vector.broadcast %125 : vector<1x16xf32> to vector<8x16xf32>
    %127 = arith.addf %124, %126 : vector<8x16xf32>
    %128 = arith.truncf %115 : vector<8x16xf32> to vector<8x16xbf16>
    %129 = arith.truncf %121 : vector<8x16xf32> to vector<8x16xbf16>
    "tpu.trace_start"() <{level = 10 : i32, message = "qd,kd->qk"}> : () -> ()
    %cst_88 = arith.constant dense<0.000000e+00> : vector<8x8xf32>
    %130 = tpu.matmul %128, %129, %cst_88 {dimension_numbers = #tpu.dot_dimension_numbers<[1], [1], [0], [0], [0, 0, 1, 0], [], []>} : vector<8x16xbf16>, vector<8x16xbf16>, vector<8x8xf32> -> vector<8x8xf32>
    "tpu.trace_stop"() : () -> ()
    %cst_89 = arith.constant dense<0xFF800000> : vector<8xf32>
    %131 = vector.multi_reduction <maximumf>, %130, %cst_89 [1] : vector<8x8xf32> to vector<8xf32>
    %132 = vector.shape_cast %131 : vector<8xf32> to vector<8x1xf32>
    %133 = vector.broadcast %132 : vector<8x1xf32> to vector<8x8xf32>
    %134 = arith.subf %130, %133 : vector<8x8xf32>
    %135 = math.exp %134 : vector<8x8xf32>
    %cst_90 = arith.constant dense<0.000000e+00> : vector<8xf32>
    %136 = vector.multi_reduction <add>, %135, %cst_90 [1] : vector<8x8xf32> to vector<8xf32>
    %137 = vector.shape_cast %136 : vector<8xf32> to vector<8x1xf32>
    %138 = tpu.reciprocal %137 {approx = true} : vector<8x1xf32> -> vector<8x1xf32>
    %139 = vector.broadcast %138 : vector<8x1xf32> to vector<8x8xf32>
    %140 = arith.mulf %135, %139 : vector<8x8xf32>
    %141 = arith.truncf %140 : vector<8x8xf32> to vector<8x8xbf16>
    %142 = arith.truncf %127 : vector<8x16xf32> to vector<8x16xbf16>
    %cst_91 = arith.constant dense<0.000000e+00> : vector<8x16xf32>
    %143 = tpu.matmul %141, %142, %cst_91 {dimension_numbers = #tpu.dot_dimension_numbers<[1], [0], [0], [1], [0, 0, 1, 1], [], []>} : vector<8x8xbf16>, vector<8x16xbf16>, vector<8x16xf32> -> vector<8x16xf32>
    %144 = arith.truncf %143 : vector<8x16xf32> to vector<8x16xbf16>
    %c1_92 = arith.constant 1 : index
    %c0_93 = arith.constant 0 : index
    %c0_94 = arith.constant 0 : index
    %145 = vector.load %arg6[%c1_92, %c0_93, %c0_94] : memref<4x16x32xbf16, #tpu.memory_space<vmem>>, vector<1x16x32xbf16>
    %146 = vector.shape_cast %145 : vector<1x16x32xbf16> to vector<16x32xbf16>
    %cst_95 = arith.constant dense<0.000000e+00> : vector<8x32xf32>
    %147 = tpu.matmul %144, %146, %cst_95 {dimension_numbers = #tpu.dot_dimension_numbers<[1], [0], [0], [1], [0, 0, 1, 1], [], []>} : vector<8x16xbf16>, vector<16x32xbf16>, vector<8x32xf32> -> vector<8x32xf32>
    %148 = arith.addf %107, %147 : vector<8x32xf32>
    %c6 = arith.constant 6 : index
    %c0_96 = arith.constant 0 : index
    %149 = vector.load %arg9[%c6, %c0_96] : memref<9x32xf32, #tpu.memory_space<vmem>>, vector<1x32xf32>
    %150 = vector.broadcast %149 : vector<1x32xf32> to vector<8x32xf32>
    %151 = arith.addf %148, %150 : vector<8x32xf32>
    %152 = vector.broadcast %27 : vector<1x32xf32> to vector<8x32xf32>
    %153 = arith.mulf %152, %151 : vector<8x32xf32>
    %154 = arith.addf %1, %153 : vector<8x32xf32>
    %155 = arith.truncf %154 : vector<8x32xf32> to vector<8x32xbf16>
    %c6_97 = arith.constant 6 : index
    %c0_98 = arith.constant 0 : index
    %c0_99 = arith.constant 0 : index
    %156 = vector.load %arg5[%c6_97, %c0_98, %c0_99] : memref<12x32x16xbf16, #tpu.memory_space<vmem>>, vector<1x32x16xbf16>
    %157 = vector.shape_cast %156 : vector<1x32x16xbf16> to vector<32x16xbf16>
    %cst_100 = arith.constant dense<0.000000e+00> : vector<8x16xf32>
    %158 = tpu.matmul %155, %157, %cst_100 {dimension_numbers = #tpu.dot_dimension_numbers<[1], [0], [0], [1], [0, 0, 1, 1], [], []>} : vector<8x32xbf16>, vector<32x16xbf16>, vector<8x16xf32> -> vector<8x16xf32>
    %c6_101 = arith.constant 6 : index
    %c0_102 = arith.constant 0 : index
    %159 = vector.load %arg10[%c6_101, %c0_102] : memref<12x16xf32, #tpu.memory_space<vmem>>, vector<1x16xf32>
    %160 = vector.broadcast %159 : vector<1x16xf32> to vector<8x16xf32>
    %161 = arith.addf %158, %160 : vector<8x16xf32>
    %cst_103 = arith.constant 2.500000e-01 : f32
    %162 = vector.broadcast %cst_103 : f32 to vector<8x16xf32>
    %163 = arith.mulf %161, %162 : vector<8x16xf32>
    %c8 = arith.constant 8 : index
    %c0_104 = arith.constant 0 : index
    %c0_105 = arith.constant 0 : index
    %164 = vector.load %arg5[%c8, %c0_104, %c0_105] : memref<12x32x16xbf16, #tpu.memory_space<vmem>>, vector<1x32x16xbf16>
    %165 = vector.shape_cast %164 : vector<1x32x16xbf16> to vector<32x16xbf16>
    %cst_106 = arith.constant dense<0.000000e+00> : vector<16x16xf32>
    %166 = tpu.matmul %3, %165, %cst_106 {dimension_numbers = #tpu.dot_dimension_numbers<[1], [0], [0], [1], [0, 0, 1, 1], [], []>} : vector<16x32xbf16>, vector<32x16xbf16>, vector<16x16xf32> -> vector<16x16xf32>
    %c8_107 = arith.constant 8 : index
    %c0_108 = arith.constant 0 : index
    %167 = vector.load %arg10[%c8_107, %c0_108] : memref<12x16xf32, #tpu.memory_space<vmem>>, vector<1x16xf32>
    %168 = vector.broadcast %167 : vector<1x16xf32> to vector<16x16xf32>
    %169 = arith.addf %166, %168 : vector<16x16xf32>
    %c10 = arith.constant 10 : index
    %c0_109 = arith.constant 0 : index
    %c0_110 = arith.constant 0 : index
    %170 = vector.load %arg5[%c10, %c0_109, %c0_110] : memref<12x32x16xbf16, #tpu.memory_space<vmem>>, vector<1x32x16xbf16>
    %171 = vector.shape_cast %170 : vector<1x32x16xbf16> to vector<32x16xbf16>
    %cst_111 = arith.constant dense<0.000000e+00> : vector<16x16xf32>
    %172 = tpu.matmul %3, %171, %cst_111 {dimension_numbers = #tpu.dot_dimension_numbers<[1], [0], [0], [1], [0, 0, 1, 1], [], []>} : vector<16x32xbf16>, vector<32x16xbf16>, vector<16x16xf32> -> vector<16x16xf32>
    %c10_112 = arith.constant 10 : index
    %c0_113 = arith.constant 0 : index
    %173 = vector.load %arg10[%c10_112, %c0_113] : memref<12x16xf32, #tpu.memory_space<vmem>>, vector<1x16xf32>
    %174 = vector.broadcast %173 : vector<1x16xf32> to vector<16x16xf32>
    %175 = arith.addf %172, %174 : vector<16x16xf32>
    %176 = arith.truncf %163 : vector<8x16xf32> to vector<8x16xbf16>
    %177 = arith.truncf %169 : vector<16x16xf32> to vector<16x16xbf16>
    "tpu.trace_start"() <{level = 10 : i32, message = "qd,kd->qk"}> : () -> ()
    %cst_114 = arith.constant dense<0.000000e+00> : vector<8x16xf32>
    %178 = tpu.matmul %176, %177, %cst_114 {dimension_numbers = #tpu.dot_dimension_numbers<[1], [1], [0], [0], [0, 0, 1, 0], [], []>} : vector<8x16xbf16>, vector<16x16xbf16>, vector<8x16xf32> -> vector<8x16xf32>
    "tpu.trace_stop"() : () -> ()
    %cst_115 = arith.constant dense<0xFF800000> : vector<8xf32>
    %179 = vector.multi_reduction <maximumf>, %178, %cst_115 [1] : vector<8x16xf32> to vector<8xf32>
    %180 = vector.shape_cast %179 : vector<8xf32> to vector<8x1xf32>
    %181 = vector.broadcast %180 : vector<8x1xf32> to vector<8x16xf32>
    %182 = arith.subf %178, %181 : vector<8x16xf32>
    %183 = math.exp %182 : vector<8x16xf32>
    %cst_116 = arith.constant dense<0.000000e+00> : vector<8xf32>
    %184 = vector.multi_reduction <add>, %183, %cst_116 [1] : vector<8x16xf32> to vector<8xf32>
    %185 = vector.shape_cast %184 : vector<8xf32> to vector<8x1xf32>
    %186 = tpu.reciprocal %185 {approx = true} : vector<8x1xf32> -> vector<8x1xf32>
    %187 = vector.broadcast %186 : vector<8x1xf32> to vector<8x16xf32>
    %188 = arith.mulf %183, %187 : vector<8x16xf32>
    %189 = arith.truncf %188 : vector<8x16xf32> to vector<8x16xbf16>
    %190 = arith.truncf %175 : vector<16x16xf32> to vector<16x16xbf16>
    %cst_117 = arith.constant dense<0.000000e+00> : vector<8x16xf32>
    %191 = tpu.matmul %189, %190, %cst_117 {dimension_numbers = #tpu.dot_dimension_numbers<[1], [0], [0], [1], [0, 0, 1, 1], [], []>} : vector<8x16xbf16>, vector<16x16xbf16>, vector<8x16xf32> -> vector<8x16xf32>
    %192 = arith.truncf %191 : vector<8x16xf32> to vector<8x16xbf16>
    %c2_118 = arith.constant 2 : index
    %c0_119 = arith.constant 0 : index
    %c0_120 = arith.constant 0 : index
    %193 = vector.load %arg6[%c2_118, %c0_119, %c0_120] : memref<4x16x32xbf16, #tpu.memory_space<vmem>>, vector<1x16x32xbf16>
    %194 = vector.shape_cast %193 : vector<1x16x32xbf16> to vector<16x32xbf16>
    %cst_121 = arith.constant dense<0.000000e+00> : vector<8x32xf32>
    %195 = tpu.matmul %192, %194, %cst_121 {dimension_numbers = #tpu.dot_dimension_numbers<[1], [0], [0], [1], [0, 0, 1, 1], [], []>} : vector<8x16xbf16>, vector<16x32xbf16>, vector<8x32xf32> -> vector<8x32xf32>
    %c7 = arith.constant 7 : index
    %c0_122 = arith.constant 0 : index
    %c0_123 = arith.constant 0 : index
    %196 = vector.load %arg5[%c7, %c0_122, %c0_123] : memref<12x32x16xbf16, #tpu.memory_space<vmem>>, vector<1x32x16xbf16>
    %197 = vector.shape_cast %196 : vector<1x32x16xbf16> to vector<32x16xbf16>
    %cst_124 = arith.constant dense<0.000000e+00> : vector<8x16xf32>
    %198 = tpu.matmul %155, %197, %cst_124 {dimension_numbers = #tpu.dot_dimension_numbers<[1], [0], [0], [1], [0, 0, 1, 1], [], []>} : vector<8x32xbf16>, vector<32x16xbf16>, vector<8x16xf32> -> vector<8x16xf32>
    %c7_125 = arith.constant 7 : index
    %c0_126 = arith.constant 0 : index
    %199 = vector.load %arg10[%c7_125, %c0_126] : memref<12x16xf32, #tpu.memory_space<vmem>>, vector<1x16xf32>
    %200 = vector.broadcast %199 : vector<1x16xf32> to vector<8x16xf32>
    %201 = arith.addf %198, %200 : vector<8x16xf32>
    %cst_127 = arith.constant 2.500000e-01 : f32
    %202 = vector.broadcast %cst_127 : f32 to vector<8x16xf32>
    %203 = arith.mulf %201, %202 : vector<8x16xf32>
    %c9 = arith.constant 9 : index
    %c0_128 = arith.constant 0 : index
    %c0_129 = arith.constant 0 : index
    %204 = vector.load %arg5[%c9, %c0_128, %c0_129] : memref<12x32x16xbf16, #tpu.memory_space<vmem>>, vector<1x32x16xbf16>
    %205 = vector.shape_cast %204 : vector<1x32x16xbf16> to vector<32x16xbf16>
    %cst_130 = arith.constant dense<0.000000e+00> : vector<16x16xf32>
    %206 = tpu.matmul %3, %205, %cst_130 {dimension_numbers = #tpu.dot_dimension_numbers<[1], [0], [0], [1], [0, 0, 1, 1], [], []>} : vector<16x32xbf16>, vector<32x16xbf16>, vector<16x16xf32> -> vector<16x16xf32>
    %c9_131 = arith.constant 9 : index
    %c0_132 = arith.constant 0 : index
    %207 = vector.load %arg10[%c9_131, %c0_132] : memref<12x16xf32, #tpu.memory_space<vmem>>, vector<1x16xf32>
    %208 = vector.broadcast %207 : vector<1x16xf32> to vector<16x16xf32>
    %209 = arith.addf %206, %208 : vector<16x16xf32>
    %c11 = arith.constant 11 : index
    %c0_133 = arith.constant 0 : index
    %c0_134 = arith.constant 0 : index
    %210 = vector.load %arg5[%c11, %c0_133, %c0_134] : memref<12x32x16xbf16, #tpu.memory_space<vmem>>, vector<1x32x16xbf16>
    %211 = vector.shape_cast %210 : vector<1x32x16xbf16> to vector<32x16xbf16>
    %cst_135 = arith.constant dense<0.000000e+00> : vector<16x16xf32>
    %212 = tpu.matmul %3, %211, %cst_135 {dimension_numbers = #tpu.dot_dimension_numbers<[1], [0], [0], [1], [0, 0, 1, 1], [], []>} : vector<16x32xbf16>, vector<32x16xbf16>, vector<16x16xf32> -> vector<16x16xf32>
    %c11_136 = arith.constant 11 : index
    %c0_137 = arith.constant 0 : index
    %213 = vector.load %arg10[%c11_136, %c0_137] : memref<12x16xf32, #tpu.memory_space<vmem>>, vector<1x16xf32>
    %214 = vector.broadcast %213 : vector<1x16xf32> to vector<16x16xf32>
    %215 = arith.addf %212, %214 : vector<16x16xf32>
    %216 = arith.truncf %203 : vector<8x16xf32> to vector<8x16xbf16>
    %217 = arith.truncf %209 : vector<16x16xf32> to vector<16x16xbf16>
    "tpu.trace_start"() <{level = 10 : i32, message = "qd,kd->qk"}> : () -> ()
    %cst_138 = arith.constant dense<0.000000e+00> : vector<8x16xf32>
    %218 = tpu.matmul %216, %217, %cst_138 {dimension_numbers = #tpu.dot_dimension_numbers<[1], [1], [0], [0], [0, 0, 1, 0], [], []>} : vector<8x16xbf16>, vector<16x16xbf16>, vector<8x16xf32> -> vector<8x16xf32>
    "tpu.trace_stop"() : () -> ()
    %cst_139 = arith.constant dense<0xFF800000> : vector<8xf32>
    %219 = vector.multi_reduction <maximumf>, %218, %cst_139 [1] : vector<8x16xf32> to vector<8xf32>
    %220 = vector.shape_cast %219 : vector<8xf32> to vector<8x1xf32>
    %221 = vector.broadcast %220 : vector<8x1xf32> to vector<8x16xf32>
    %222 = arith.subf %218, %221 : vector<8x16xf32>
    %223 = math.exp %222 : vector<8x16xf32>
    %cst_140 = arith.constant dense<0.000000e+00> : vector<8xf32>
    %224 = vector.multi_reduction <add>, %223, %cst_140 [1] : vector<8x16xf32> to vector<8xf32>
    %225 = vector.shape_cast %224 : vector<8xf32> to vector<8x1xf32>
    %226 = tpu.reciprocal %225 {approx = true} : vector<8x1xf32> -> vector<8x1xf32>
    %227 = vector.broadcast %226 : vector<8x1xf32> to vector<8x16xf32>
    %228 = arith.mulf %223, %227 : vector<8x16xf32>
    %229 = arith.truncf %228 : vector<8x16xf32> to vector<8x16xbf16>
    %230 = arith.truncf %215 : vector<16x16xf32> to vector<16x16xbf16>
    %cst_141 = arith.constant dense<0.000000e+00> : vector<8x16xf32>
    %231 = tpu.matmul %229, %230, %cst_141 {dimension_numbers = #tpu.dot_dimension_numbers<[1], [0], [0], [1], [0, 0, 1, 1], [], []>} : vector<8x16xbf16>, vector<16x16xbf16>, vector<8x16xf32> -> vector<8x16xf32>
    %232 = arith.truncf %231 : vector<8x16xf32> to vector<8x16xbf16>
    %c3_142 = arith.constant 3 : index
    %c0_143 = arith.constant 0 : index
    %c0_144 = arith.constant 0 : index
    %233 = vector.load %arg6[%c3_142, %c0_143, %c0_144] : memref<4x16x32xbf16, #tpu.memory_space<vmem>>, vector<1x16x32xbf16>
    %234 = vector.shape_cast %233 : vector<1x16x32xbf16> to vector<16x32xbf16>
    %cst_145 = arith.constant dense<0.000000e+00> : vector<8x32xf32>
    %235 = tpu.matmul %232, %234, %cst_145 {dimension_numbers = #tpu.dot_dimension_numbers<[1], [0], [0], [1], [0, 0, 1, 1], [], []>} : vector<8x16xbf16>, vector<16x32xbf16>, vector<8x32xf32> -> vector<8x32xf32>
    %236 = arith.addf %195, %235 : vector<8x32xf32>
    %c7_146 = arith.constant 7 : index
    %c0_147 = arith.constant 0 : index
    %237 = vector.load %arg9[%c7_146, %c0_147] : memref<9x32xf32, #tpu.memory_space<vmem>>, vector<1x32xf32>
    %238 = vector.broadcast %237 : vector<1x32xf32> to vector<8x32xf32>
    %239 = arith.addf %236, %238 : vector<8x32xf32>
    %240 = arith.addf %154, %239 : vector<8x32xf32>
    %cst_148 = arith.constant dense<0.000000e+00> : vector<8xf32>
    %241 = vector.multi_reduction <add>, %240, %cst_148 [1] : vector<8x32xf32> to vector<8xf32>
    %242 = vector.shape_cast %241 : vector<8xf32> to vector<8x1xf32>
    %cst_149 = arith.constant 3.200000e+01 : f32
    %243 = vector.broadcast %cst_149 : f32 to vector<8x1xf32>
    %244 = arith.divf %242, %243 : vector<8x1xf32>
    %245 = vector.broadcast %244 : vector<8x1xf32> to vector<8x32xf32>
    %246 = arith.subf %240, %245 : vector<8x32xf32>
    %247 = arith.mulf %246, %246 : vector<8x32xf32>
    %cst_150 = arith.constant dense<0.000000e+00> : vector<8xf32>
    %248 = vector.multi_reduction <add>, %247, %cst_150 [1] : vector<8x32xf32> to vector<8xf32>
    %249 = vector.shape_cast %248 : vector<8xf32> to vector<8x1xf32>
    %cst_151 = arith.constant 3.200000e+01 : f32
    %250 = vector.broadcast %cst_151 : f32 to vector<8x1xf32>
    %251 = arith.divf %249, %250 : vector<8x1xf32>
    %252 = vector.broadcast %244 : vector<8x1xf32> to vector<8x32xf32>
    %253 = arith.subf %240, %252 : vector<8x32xf32>
    %cst_152 = arith.constant 9.99999997E-7 : f32
    %254 = vector.broadcast %cst_152 : f32 to vector<8x1xf32>
    %255 = arith.addf %251, %254 : vector<8x1xf32>
    %256 = math.rsqrt %255 : vector<8x1xf32>
    %257 = vector.broadcast %256 : vector<8x1xf32> to vector<8x32xf32>
    %258 = arith.mulf %253, %257 : vector<8x32xf32>
    %cst_153 = arith.constant 1.000000e+00 : f32
    %259 = vector.broadcast %cst_153 : f32 to vector<1x32xf32>
    %260 = arith.addf %259, %37 : vector<1x32xf32>
    %261 = vector.broadcast %260 : vector<1x32xf32> to vector<8x32xf32>
    %262 = arith.mulf %258, %261 : vector<8x32xf32>
    %263 = vector.broadcast %32 : vector<1x32xf32> to vector<8x32xf32>
    %264 = arith.addf %262, %263 : vector<8x32xf32>
    %265 = arith.truncf %264 : vector<8x32xf32> to vector<8x32xbf16>
    %c0_154 = arith.constant 0 : index
    %c0_155 = arith.constant 0 : index
    %266 = vector.load %arg7[%c0_154, %c0_155] : memref<32x128xbf16, #tpu.memory_space<vmem>>, vector<32x128xbf16>
    %cst_156 = arith.constant dense<0.000000e+00> : vector<8x128xf32>
    %267 = tpu.matmul %265, %266, %cst_156 {dimension_numbers = #tpu.dot_dimension_numbers<[1], [0], [0], [1], [0, 0, 1, 1], [], []>} : vector<8x32xbf16>, vector<32x128xbf16>, vector<8x128xf32> -> vector<8x128xf32>
    %c0_157 = arith.constant 0 : index
    %c0_158 = arith.constant 0 : index
    %268 = vector.load %arg11[%c0_157, %c0_158] : memref<1x128xf32, #tpu.memory_space<vmem>>, vector<1x128xf32>
    %269 = vector.broadcast %268 : vector<1x128xf32> to vector<8x128xf32>
    %270 = arith.addf %267, %269 : vector<8x128xf32>
    %cst_159 = arith.constant 5.000000e-01 : f32
    %271 = vector.broadcast %cst_159 : f32 to vector<8x128xf32>
    %272 = arith.mulf %271, %270 : vector<8x128xf32>
    %cst_160 = arith.constant 4.471500e-02 : f32
    %273 = vector.broadcast %cst_160 : f32 to vector<8x128xf32>
    %274 = arith.mulf %273, %270 : vector<8x128xf32>
    %275 = arith.mulf %274, %270 : vector<8x128xf32>
    %276 = arith.mulf %275, %270 : vector<8x128xf32>
    %277 = arith.addf %270, %276 : vector<8x128xf32>
    %cst_161 = arith.constant 0.797884583 : f32
    %278 = vector.broadcast %cst_161 : f32 to vector<8x128xf32>
    %279 = arith.mulf %278, %277 : vector<8x128xf32>
    %280 = math.tanh %279 : vector<8x128xf32>
    %cst_162 = arith.constant 1.000000e+00 : f32
    %281 = vector.broadcast %cst_162 : f32 to vector<8x128xf32>
    %282 = arith.addf %281, %280 : vector<8x128xf32>
    %283 = arith.mulf %272, %282 : vector<8x128xf32>
    %284 = arith.truncf %283 : vector<8x128xf32> to vector<8x128xbf16>
    %c0_163 = arith.constant 0 : index
    %c0_164 = arith.constant 0 : index
    %285 = vector.load %arg8[%c0_163, %c0_164] : memref<128x32xbf16, #tpu.memory_space<vmem>>, vector<128x32xbf16>
    %cst_165 = arith.constant dense<0.000000e+00> : vector<8x32xf32>
    %286 = tpu.matmul %284, %285, %cst_165 {dimension_numbers = #tpu.dot_dimension_numbers<[1], [0], [0], [1], [0, 0, 1, 1], [], []>} : vector<8x128xbf16>, vector<128x32xbf16>, vector<8x32xf32> -> vector<8x32xf32>
    %c8_166 = arith.constant 8 : index
    %c0_167 = arith.constant 0 : index
    %287 = vector.load %arg9[%c8_166, %c0_167] : memref<9x32xf32, #tpu.memory_space<vmem>>, vector<1x32xf32>
    %288 = vector.broadcast %287 : vector<1x32xf32> to vector<8x32xf32>
    %289 = arith.addf %286, %288 : vector<8x32xf32>
    %290 = vector.broadcast %42 : vector<1x32xf32> to vector<8x32xf32>
    %291 = arith.mulf %290, %289 : vector<8x32xf32>
    %292 = arith.addf %240, %291 : vector<8x32xf32>
    %c0_168 = arith.constant 0 : index
    %c0_169 = arith.constant 0 : index
    %c0_170 = arith.constant 0 : index
    %293 = vector.load %arg12[%c0_168, %c0_169, %c0_170] : memref<1x8x32xf32, #tpu.memory_space<vmem>>, vector<1x8x32xf32>
    %294 = vector.shape_cast %293 : vector<1x8x32xf32> to vector<8x32xf32>
    %295 = vector.shape_cast %292 : vector<8x32xf32> to vector<1x8x32xf32>
    tpu.vector_store %arg12[%c0_168, %c0_169, %c0_170], %295 {strides = array<i32>} : memref<1x8x32xf32, #tpu.memory_space<vmem>>, vector<1x8x32xf32>,
    return
  }
  func.func @transform_0(%arg0: i32) -> (i32, i32, i32) {
    %c0_i32 = arith.constant 0 : i32
    %c0_i32_0 = arith.constant 0 : i32
    %c0_i32_1 = arith.constant 0 : i32
    return %arg0, %c0_i32, %c0_i32_0 : i32, i32, i32
  }
  func.func @transform_1(%arg0: i32) -> (i32, i32) {
    %c0_i32 = arith.constant 0 : i32
    %c0_i32_0 = arith.constant 0 : i32
    %c0_i32_1 = arith.constant 0 : i32
    return %c0_i32, %c0_i32_0 : i32, i32
  }
  func.func @transform_2(%arg0: i32) -> (i32, i32) {
    %c0_i32 = arith.constant 0 : i32
    %c0_i32_0 = arith.constant 0 : i32
    %c0_i32_1 = arith.constant 0 : i32
    return %c0_i32, %c0_i32_0 : i32, i32
  }
  func.func @transform_3(%arg0: i32) -> (i32, i32, i32) {
    %c0_i32 = arith.constant 0 : i32
    %c0_i32_0 = arith.constant 0 : i32
    %c0_i32_1 = arith.constant 0 : i32
    %c0_i32_2 = arith.constant 0 : i32
    return %c0_i32, %c0_i32_0, %c0_i32_1 : i32, i32, i32
  }
  func.func @transform_4(%arg0: i32) -> (i32, i32, i32) {
    %c0_i32 = arith.constant 0 : i32
    %c0_i32_0 = arith.constant 0 : i32
    %c0_i32_1 = arith.constant 0 : i32
    %c0_i32_2 = arith.constant 0 : i32
    return %c0_i32, %c0_i32_0, %c0_i32_1 : i32, i32, i32
  }
  func.func @transform_5(%arg0: i32) -> (i32, i32, i32) {
    %c0_i32 = arith.constant 0 : i32
    %c0_i32_0 = arith.constant 0 : i32
    %c0_i32_1 = arith.constant 0 : i32
    %c0_i32_2 = arith.constant 0 : i32
    return %c0_i32, %c0_i32_0, %c0_i32_1 : i32, i32, i32
  }
  func.func @transform_6(%arg0: i32) -> (i32, i32) {
    %c0_i32 = arith.constant 0 : i32
    %c0_i32_0 = arith.constant 0 : i32
    %c0_i32_1 = arith.constant 0 : i32
    return %c0_i32, %c0_i32_0 : i32, i32
  }
  func.func @transform_7(%arg0: i32) -> (i32, i32) {
    %c0_i32 = arith.constant 0 : i32
    %c0_i32_0 = arith.constant 0 : i32
    %c0_i32_1 = arith.constant 0 : i32
    return %c0_i32, %c0_i32_0 : i32, i32
  }
  func.func @transform_8(%arg0: i32) -> (i32, i32) {
    %c0_i32 = arith.constant 0 : i32
    %c0_i32_0 = arith.constant 0 : i32
    %c0_i32_1 = arith.constant 0 : i32
    return %c0_i32, %c0_i32_0 : i32, i32
  }
  func.func @transform_9(%arg0: i32) -> (i32, i32) {
    %c0_i32 = arith.constant 0 : i32
    %c0_i32_0 = arith.constant 0 : i32
    %c0_i32_1 = arith.constant 0 : i32
    return %c0_i32, %c0_i32_0 : i32, i32
  }
  func.func @transform_10(%arg0: i32) -> (i32, i32) {
    %c0_i32 = arith.constant 0 : i32
    %c0_i32_0 = arith.constant 0 : i32
    %c0_i32_1 = arith.constant 0 : i32
    return %c0_i32, %c0_i32_0 : i32, i32
  }
  func.func @transform_11(%arg0: i32) -> (i32, i32, i32) {
    %c0_i32 = arith.constant 0 : i32
    %c0_i32_0 = arith.constant 0 : i32
    %c0_i32_1 = arith.constant 0 : i32
    return %arg0, %c0_i32, %c0_i32_0 : i32, i32, i32
  }
}

</mosaic_0001>

<llo_original>
// kernel: sana_ms_adaln_block.1
$region0: #{sana_ms_adaln_block.1}
  #allocation0 [shape = 'u32[]', space=smem, size = 0x4, offset = 0x4, fixed_abs, tag = 'smem constant byte address 0x4 - core index']
  #allocation1 [shape = 'u32[144,128]{1,0:T(1,128)}', space=vmem, size = 0x12000, scoped, tag = 'internal scratch']
  %s0 = inlined_call_operand.hbm [shape: f32[2,8,32], index: 0, kind: input, shape index: {}, may-alias: {0,11}]
  %s1 = inlined_call_operand.vmem [shape: f32[16,32], index: 1, kind: input, shape index: {}]
  %s2 = inlined_call_operand.vmem [shape: f32[2,32], index: 2, kind: input, shape index: {}]
  %s3 = inlined_call_operand.vmem [shape: bf16[6,32,32], index: 3, kind: input, shape index: {}]
  %s4 = inlined_call_operand.vmem [shape: bf16[12,32,16], index: 4, kind: input, shape index: {}]
  %s5 = inlined_call_operand.vmem [shape: bf16[4,16,32], index: 5, kind: input, shape index: {}]
  %s6 = inlined_call_operand.vmem [shape: bf16[32,128], index: 6, kind: input, shape index: {}]
  %s7 = inlined_call_operand.vmem [shape: bf16[128,32], index: 7, kind: input, shape index: {}]
  %s8 = inlined_call_operand.vmem [shape: f32[9,32], index: 8, kind: input, shape index: {}]
  %s9 = inlined_call_operand.vmem [shape: f32[12,16], index: 9, kind: input, shape index: {}]
  %s10 = inlined_call_operand.vmem [shape: f32[1,128], index: 10, kind: input, shape index: {}]
  %s11 = inlined_call_operand.hbm [shape: f32[2,8,32], index: 11, kind: output, shape index: {}, may-alias: {0,11}]
  %s12 = sld [smem:[#allocation0]]
  $region81: #{sana_ms_adaln_block.1} parent=0
    _
  %s14 = ssub.s32 1, %s12
  %s15 = scalar_select 0, %s14, %s12
  $region1: #{sana_ms_adaln_block.1} parent=0
    #allocation2 [shape = 'u8[8192]{0}', space=vmem, size = 0x2000, scoped, tag = 'input window, operand 0']
    #allocation3 [shape = 's32[2]{0}', space=sflag, size = 0x8, scoped, tag = 'scoped memory for sana_ms_adaln_block.1']
    #allocation4 [shape = 's32[2]{0}', space=sflag, size = 0x8, scoped, tag = 'scoped memory for sana_ms_adaln_block.1']
    #allocation5 [shape = 'u8[8192]{0}', space=vmem, size = 0x2000, scoped, tag = 'output window, operand 0']
    %16 = vsyncpa [#allocation3], 0
    %s17 = scalar_lea.sflag [#allocation3], 1
    %18 = vsyncpa %s17, 0
    %19 = vsyncpa [#allocation4], 0
    %s20 = scalar_lea.sflag [#allocation4], 1
    %21 = vsyncpa %s20, 0
    loop: start=0, step=1, limit=4
    $region2: #{sana_ms_adaln_block.1} parent=1 // loop_pre_header
      _
    $region3: #{sana_ms_adaln_block.1} parent=1 // loop_header
      %s23 = sphi 0, %s27
      %p24 = scmp.ge.s32.totalorder %s23, 4
      %s33 = sphi 0, %s35
      %s36 = sphi 0, %s33
      %s37 = sphi 0, %s36
      %s53 = sphi 0, %s37
      %s57 = sphi 0, %s57
      %s59 = sphi 0, %s57
      %s60 = sphi 0, %s59
      %s74 = sphi 0, %s60
      %s78 = sphi 0, %s78
      %s80 = sphi 0, %s78
      %s81 = sphi 0, %s80
      %s95 = sphi 0, %s81
      %s99 = sphi 0, %s99
      %s101 = sphi 0, %s99
      %s102 = sphi 0, %s101
      %s116 = sphi 0, %s102
      %s120 = sphi 0, %s120
      %s122 = sphi 0, %s120
      %s123 = sphi 0, %s122
      %s137 = sphi 0, %s123
      %s141 = sphi 0, %s141
      %s143 = sphi 0, %s141
      %s144 = sphi 0, %s143
      %s158 = sphi 0, %s144
      %s162 = sphi 0, %s162
      %s164 = sphi 0, %s162
      %s165 = sphi 0, %s164
      %s179 = sphi 0, %s165
      %s183 = sphi 0, %s183
      %s185 = sphi 0, %s183
      %s186 = sphi 0, %s185
      %s200 = sphi 0, %s186
      %s204 = sphi 0, %s204
      %s206 = sphi 0, %s204
      %s207 = sphi 0, %s206
      %s221 = sphi 0, %s207
      %s225 = sphi 0, %s225
      %s227 = sphi 0, %s225
      %s228 = sphi 0, %s227
      %s242 = sphi 0, %s228
      %s246 = sphi 0, %s246
      %s248 = sphi 0, %s246
      %s249 = sphi 0, %s248
      %s263 = sphi 0, %s249
      %s269 = sphi 0, %s271
      %s272 = sphi 0, %s269
      %s273 = sphi 0, %s272
      %s289 = sphi 0, %s273
    $region4: #{sana_ms_adaln_block.1} parent=1 // loop_header_branch
      %26 = sbr.rel (%p24) target = $region8
    $region5: #{sana_ms_adaln_block.1} parent=1 // loop_body
      %s28 = ssub.s32 %s23, 1
      %s29 = ssub.s32 %s23, 2
      %s30 = sadd.s32 %s23, 1
      %s31 = ssub.s32 %s23, %s30
      %p32 = scmp.eq.s32.totalorder %s31, 0
      %s34 = sadd.s32 %s33, 1
      %s35 = scalar_select %p32, %s33, %s34
      %p38 = pneg %p32
      %p39 = scmp.eq.s32.totalorder %s23, 1
      %p40 = por %p38, %p39
      %p41 = scmp.ne.s32.totalorder %s33, %s36
      %p42 = scmp.eq.s32.totalorder %s23, 0
      %p43 = por %p41, %p42
      %p44 = scmp.ne.s32.totalorder %s33, %s36
      %p45 = scmp.eq.s32.totalorder %s28, 1
      %p46 = por %p44, %p45
      %p47 = scmp.ne.s32.totalorder %s36, %s37
      %p48 = scmp.eq.s32.totalorder %s28, 0
      %p49 = por %p47, %p48
      %p50 = scmp.ne.s32.totalorder %s36, %s37
      %p51 = scmp.eq.s32.totalorder %s29, 1
      %p52 = por %p50, %p51
      %p54 = scmp.ne.s32.totalorder %s37, %s53
      %p55 = scmp.eq.s32.totalorder %s29, 0
      %p56 = por %p54, %p55
      %s58 = sadd.s32 %s57, 1
      %p61 = scmp.eq.s32.totalorder %s23, 1
      %p62 = scmp.ne.s32.totalorder %s57, %s59
      %p63 = scmp.eq.s32.totalorder %s23, 0
      %p64 = por %p62, %p63
      %p65 = scmp.ne.s32.totalorder %s57, %s59
      %p66 = scmp.eq.s32.totalorder %s28, 1
      %p67 = por %p65, %p66
      %p68 = scmp.ne.s32.totalorder %s59, %s60
      %p69 = scmp.eq.s32.totalorder %s28, 0
      %p70 = por %p68, %p69
      %p71 = scmp.ne.s32.totalorder %s59, %s60
      %p72 = scmp.eq.s32.totalorder %s29, 1
      %p73 = por %p71, %p72
      %p75 = scmp.ne.s32.totalorder %s60, %s74
      %p76 = scmp.eq.s32.totalorder %s29, 0
      %p77 = por %p75, %p76
      %s79 = sadd.s32 %s78, 1
      %p82 = scmp.eq.s32.totalorder %s23, 1
      %p83 = scmp.ne.s32.totalorder %s78, %s80
      %p84 = scmp.eq.s32.totalorder %s23, 0
      %p85 = por %p83, %p84
      %p86 = scmp.ne.s32.totalorder %s78, %s80
      %p87 = scmp.eq.s32.totalorder %s28, 1
      %p88 = por %p86, %p87
      %p89 = scmp.ne.s32.totalorder %s80, %s81
      %p90 = scmp.eq.s32.totalorder %s28, 0
      %p91 = por %p89, %p90
      %p92 = scmp.ne.s32.totalorder %s80, %s81
      %p93 = scmp.eq.s32.totalorder %s29, 1
      %p94 = por %p92, %p93
      %p96 = scmp.ne.s32.totalorder %s81, %s95
      %p97 = scmp.eq.s32.totalorder %s29, 0
      %p98 = por %p96, %p97
      %s100 = sadd.s32 %s99, 1
      %p103 = scmp.eq.s32.totalorder %s23, 1
      %p104 = scmp.ne.s32.totalorder %s99, %s101
      %p105 = scmp.eq.s32.totalorder %s23, 0
      %p106 = por %p104, %p105
      %p107 = scmp.ne.s32.totalorder %s99, %s101
      %p108 = scmp.eq.s32.totalorder %s28, 1
      %p109 = por %p107, %p108
      %p110 = scmp.ne.s32.totalorder %s101, %s102
      %p111 = scmp.eq.s32.totalorder %s28, 0
      %p112 = por %p110, %p111
      %p113 = scmp.ne.s32.totalorder %s101, %s102
      %p114 = scmp.eq.s32.totalorder %s29, 1
      %p115 = por %p113, %p114
      %p117 = scmp.ne.s32.totalorder %s102, %s116
      %p118 = scmp.eq.s32.totalorder %s29, 0
      %p119 = por %p117, %p118
      %s121 = sadd.s32 %s120, 1
      %p124 = scmp.eq.s32.totalorder %s23, 1
      %p125 = scmp.ne.s32.totalorder %s120, %s122
      %p126 = scmp.eq.s32.totalorder %s23, 0
      %p127 = por %p125, %p126
      %p128 = scmp.ne.s32.totalorder %s120, %s122
      %p129 = scmp.eq.s32.totalorder %s28, 1
      %p130 = por %p128, %p129
      %p131 = scmp.ne.s32.totalorder %s122, %s123
      %p132 = scmp.eq.s32.totalorder %s28, 0
      %p133 = por %p131, %p132
      %p134 = scmp.ne.s32.totalorder %s122, %s123
      %p135 = scmp.eq.s32.totalorder %s29, 1
      %p136 = por %p134, %p135
      %p138 = scmp.ne.s32.totalorder %s123, %s137
      %p139 = scmp.eq.s32.totalorder %s29, 0
      %p140 = por %p138, %p139
      %s142 = sadd.s32 %s141, 1
      %p145 = scmp.eq.s32.totalorder %s23, 1
      %p146 = scmp.ne.s32.totalorder %s141, %s143
      %p147 = scmp.eq.s32.totalorder %s23, 0
      %p148 = por %p146, %p147
      %p149 = scmp.ne.s32.totalorder %s141, %s143
      %p150 = scmp.eq.s32.totalorder %s28, 1
      %p151 = por %p149, %p150
      %p152 = scmp.ne.s32.totalorder %s143, %s144
      %p153 = scmp.eq.s32.totalorder %s28, 0
      %p154 = por %p152, %p153
      %p155 = scmp.ne.s32.totalorder %s143, %s144
      %p156 = scmp.eq.s32.totalorder %s29, 1
      %p157 = por %p155, %p156
      %p159 = scmp.ne.s32.totalorder %s144, %s158
      %p160 = scmp.eq.s32.totalorder %s29, 0
      %p161 = por %p159, %p160
      %s163 = sadd.s32 %s162, 1
      %p166 = scmp.eq.s32.totalorder %s23, 1
      %p167 = scmp.ne.s32.totalorder %s162, %s164
      %p168 = scmp.eq.s32.totalorder %s23, 0
      %p169 = por %p167, %p168
      %p170 = scmp.ne.s32.totalorder %s162, %s164
      %p171 = scmp.eq.s32.totalorder %s28, 1
      %p172 = por %p170, %p171
      %p173 = scmp.ne.s32.totalorder %s164, %s165
      %p174 = scmp.eq.s32.totalorder %s28, 0
      %p175 = por %p173, %p174
      %p176 = scmp.ne.s32.totalorder %s164, %s165
      %p177 = scmp.eq.s32.totalorder %s29, 1
      %p178 = por %p176, %p177
      %p180 = scmp.ne.s32.totalorder %s165, %s179
      %p181 = scmp.eq.s32.totalorder %s29, 0
      %p182 = por %p180, %p181
      %s184 = sadd.s32 %s183, 1
      %p187 = scmp.eq.s32.totalorder %s23, 1
      %p188 = scmp.ne.s32.totalorder %s183, %s185
      %p189 = scmp.eq.s32.totalorder %s23, 0
      %p190 = por %p188, %p189
      %p191 = scmp.ne.s32.totalorder %s183, %s185
      %p192 = scmp.eq.s32.totalorder %s28, 1
      %p193 = por %p191, %p192
      %p194 = scmp.ne.s32.totalorder %s185, %s186
      %p195 = scmp.eq.s32.totalorder %s28, 0
      %p196 = por %p194, %p195
      %p197 = scmp.ne.s32.totalorder %s185, %s186
      %p198 = scmp.eq.s32.totalorder %s29, 1
      %p199 = por %p197, %p198
      %p201 = scmp.ne.s32.totalorder %s186, %s200
      %p202 = scmp.eq.s32.totalorder %s29, 0
      %p203 = por %p201, %p202
      %s205 = sadd.s32 %s204, 1
      %p208 = scmp.eq.s32.totalorder %s23, 1
      %p209 = scmp.ne.s32.totalorder %s204, %s206
      %p210 = scmp.eq.s32.totalorder %s23, 0
      %p211 = por %p209, %p210
      %p212 = scmp.ne.s32.totalorder %s204, %s206
      %p213 = scmp.eq.s32.totalorder %s28, 1
      %p214 = por %p212, %p213
      %p215 = scmp.ne.s32.totalorder %s206, %s207
      %p216 = scmp.eq.s32.totalorder %s28, 0
      %p217 = por %p215, %p216
      %p218 = scmp.ne.s32.totalorder %s206, %s207
      %p219 = scmp.eq.s32.totalorder %s29, 1
      %p220 = por %p218, %p219
      %p222 = scmp.ne.s32.totalorder %s207, %s221
      %p223 = scmp.eq.s32.totalorder %s29, 0
      %p224 = por %p222, %p223
      %s226 = sadd.s32 %s225, 1
      %p229 = scmp.eq.s32.totalorder %s23, 1
      %p230 = scmp.ne.s32.totalorder %s225, %s227
      %p231 = scmp.eq.s32.totalorder %s23, 0
      %p232 = por %p230, %p231
      %p233 = scmp.ne.s32.totalorder %s225, %s227
      %p234 = scmp.eq.s32.totalorder %s28, 1
      %p235 = por %p233, %p234
      %p236 = scmp.ne.s32.totalorder %s227, %s228
      %p237 = scmp.eq.s32.totalorder %s28, 0
      %p238 = por %p236, %p237
      %p239 = scmp.ne.s32.totalorder %s227, %s228
      %p240 = scmp.eq.s32.totalorder %s29, 1
      %p241 = por %p239, %p240
      %p243 = scmp.ne.s32.totalorder %s228, %s242
      %p244 = scmp.eq.s32.totalorder %s29, 0
      %p245 = por %p243, %p244
      %s247 = sadd.s32 %s246, 1
      %p250 = scmp.eq.s32.totalorder %s23, 1
      %p251 = scmp.ne.s32.totalorder %s246, %s248
      %p252 = scmp.eq.s32.totalorder %s23, 0
      %p253 = por %p251, %p252
      %p254 = scmp.ne.s32.totalorder %s246, %s248
      %p255 = scmp.eq.s32.totalorder %s28, 1
      %p256 = por %p254, %p255
      %p257 = scmp.ne.s32.totalorder %s248, %s249
      %p258 = scmp.eq.s32.totalorder %s28, 0
      %p259 = por %p257, %p258
      %p260 = scmp.ne.s32.totalorder %s248, %s249
      %p261 = scmp.eq.s32.totalorder %s29, 1
      %p262 = por %p260, %p261
      %p264 = scmp.ne.s32.totalorder %s249, %s263
      %p265 = scmp.eq.s32.totalorder %s29, 0
      %p266 = por %p264, %p265
      %s267 = ssub.s32 %s23, %s30
      %p268 = scmp.eq.s32.totalorder %s267, 0
      %s270 = sadd.s32 %s269, 1
      %s271 = scalar_select %p268, %s269, %s270
      %p274 = pneg %p268
      %p275 = scmp.eq.s32.totalorder %s23, 1
      %p276 = por %p274, %p275
      %p277 = scmp.ne.s32.totalorder %s269, %s272
      %p278 = scmp.eq.s32.totalorder %s23, 0
      %p279 = por %p277, %p278
      %p280 = scmp.ne.s32.totalorder %s269, %s272
      %p281 = scmp.eq.s32.totalorder %s28, 1
      %p282 = por %p280, %p281
      %p283 = scmp.ne.s32.totalorder %s272, %s273
      %p284 = scmp.eq.s32.totalorder %s28, 0
      %p285 = por %p283, %p284
      %p286 = scmp.ne.s32.totalorder %s272, %s273
      %p287 = scmp.eq.s32.totalorder %s29, 1
      %p288 = por %p286, %p287
      %p290 = scmp.ne.s32.totalorder %s273, %s289
      %p291 = scmp.eq.s32.totalorder %s29, 0
      %p292 = por %p290, %p291
      %p293 = scmp.le.s32.totalorder 1, %s23
      %p294 = scmp.lt.s32.totalorder %s23, 3
      %p295 = pnand %p293, %p294
      %p296 = pneg %p295
      // Predicated region
      $region9: #{sana_ms_adaln_block.1} parent=5 // pred_check
        _
      $region10: #{sana_ms_adaln_block.1} parent=5 // pred_check_branch
        %298 = sbr.rel (%p295) target = $region12
      $region11: #{sana_ms_adaln_block.1} parent=5 // pred_region
        %s299 = ssub.s32 %s23, 1
        // Predicated region
        $region13: #{sana_ms_adaln_block.1} parent=11 // pred_check
          %p300 = pneg %p70
        $region14: #{sana_ms_adaln_block.1} parent=11 // pred_check_branch
          %302 = sbr.rel (%p300) target = $region16
        $region15: #{sana_ms_adaln_block.1} parent=11 // pred_region
          _
        $region16: #{sana_ms_adaln_block.1} parent=11 // pred_fallthru
          _
        // Predicated region
        $region17: #{sana_ms_adaln_block.1} parent=11 // pred_check
          %p303 = pneg %p91
        $region18: #{sana_ms_adaln_block.1} parent=11 // pred_check_branch
          %305 = sbr.rel (%p303) target = $region20
        $region19: #{sana_ms_adaln_block.1} parent=11 // pred_region
          _
        $region20: #{sana_ms_adaln_block.1} parent=11 // pred_fallthru
          _
        // Predicated region
        $region21: #{sana_ms_adaln_block.1} parent=11 // pred_check
          %p306 = pneg %p112
        $region22: #{sana_ms_adaln_block.1} parent=11 // pred_check_branch
          %308 = sbr.rel (%p306) target = $region24
        $region23: #{sana_ms_adaln_block.1} parent=11 // pred_region
          _
        $region24: #{sana_ms_adaln_block.1} parent=11 // pred_fallthru
          _
        // Predicated region
        $region25: #{sana_ms_adaln_block.1} parent=11 // pred_check
          %p309 = pneg %p133
        $region26: #{sana_ms_adaln_block.1} parent=11 // pred_check_branch
          %311 = sbr.rel (%p309) target = $region28
        $region27: #{sana_ms_adaln_block.1} parent=11 // pred_region
          _
        $region28: #{sana_ms_adaln_block.1} parent=11 // pred_fallthru
          _
        // Predicated region
        $region29: #{sana_ms_adaln_block.1} parent=11 // pred_check
          %p312 = pneg %p154
        $region30: #{sana_ms_adaln_block.1} parent=11 // pred_check_branch
          %314 = sbr.rel (%p312) target = $region32
        $region31: #{sana_ms_adaln_block.1} parent=11 // pred_region
          _
        $region32: #{sana_ms_adaln_block.1} parent=11 // pred_fallthru
          _
        // Predicated region
        $region33: #{sana_ms_adaln_block.1} parent=11 // pred_check
          %p315 = pneg %p175
        $region34: #{sana_ms_adaln_block.1} parent=11 // pred_check_branch
          %317 = sbr.rel (%p315) target = $region36
        $region35: #{sana_ms_adaln_block.1} parent=11 // pred_region
          _
        $region36: #{sana_ms_adaln_block.1} parent=11 // pred_fallthru
          _
        // Predicated region
        $region37: #{sana_ms_adaln_block.1} parent=11 // pred_check
          %p318 = pneg %p196
        $region38: #{sana_ms_adaln_block.1} parent=11 // pred_check_branch
          %320 = sbr.rel (%p318) target = $region40
        $region39: #{sana_ms_adaln_block.1} parent=11 // pred_region
          _
        $region40: #{sana_ms_adaln_block.1} parent=11 // pred_fallthru
          _
        // Predicated region
        $region41: #{sana_ms_adaln_block.1} parent=11 // pred_check
          %p321 = pneg %p217
        $region42: #{sana_ms_adaln_block.1} parent=11 // pred_check_branch
          %323 = sbr.rel (%p321) target = $region44
        $region43: #{sana_ms_adaln_block.1} parent=11 // pred_region
          _
        $region44: #{sana_ms_adaln_block.1} parent=11 // pred_fallthru
          _
        // Predicated region
        $region45: #{sana_ms_adaln_block.1} parent=11 // pred_check
          %p324 = pneg %p238
        $region46: #{sana_ms_adaln_block.1} parent=11 // pred_check_branch
          %326 = sbr.rel (%p324) target = $region48
        $region47: #{sana_ms_adaln_block.1} parent=11 // pred_region
          _
        $region48: #{sana_ms_adaln_block.1} parent=11 // pred_fallthru
          _
        // Predicated region
        $region49: #{sana_ms_adaln_block.1} parent=11 // pred_check
          %p327 = pneg %p259
        $region50: #{sana_ms_adaln_block.1} parent=11 // pred_check_branch
          %329 = sbr.rel (%p327) target = $region52
        $region51: #{sana_ms_adaln_block.1} parent=11 // pred_region
          _
        $region52: #{sana_ms_adaln_block.1} parent=11 // pred_fallthru
          _
      $region12: #{sana_ms_adaln_block.1} parent=5 // pred_fallthru
        _
      %p330 = scmp.lt.s32.totalorder %s23, 2
      // Predicated region
      $region53: #{sana_ms_adaln_block.1} parent=5 // pred_check
        %p331 = pneg %p330
      $region54: #{sana_ms_adaln_block.1} parent=5 // pred_check_branch
        %333 = sbr.rel (%p331) target = $region56
      $region55: #{sana_ms_adaln_block.1} parent=5 // pred_region
        // Predicated region
        $region57: #{sana_ms_adaln_block.1} parent=55 // pred_check
          %p334 = pneg %p43
        $region58: #{sana_ms_adaln_block.1} parent=55 // pred_check_branch
          %336 = sbr.rel (%p334) target = $region60
        $region59: #{sana_ms_adaln_block.1} parent=55 // pred_region
          %s337 = sand.u32 %s33, 1
          %s338 = scalar_lea.sflag [#allocation3], %s337
          %s339 = sand.u32 %s33, 1
          %s340 = smul.addr %s339, 8
          %s341 = scalar_lea.vmem [#allocation2], %s340
          %s343 = ssub.s32 128, 128
          %344 = vsyncadd %s338, %s343
          %s345 = smul.addr %s23, 128
          %s346 = scalar_lea.hbm %s0, %s345
          %s348 = sshll.u32 %s341, 4
          %s349 = int_to_ptr.vmem [resolvable:$true] %s348
          %351 = dma.hbm_to_vmem [thread:$0]  %s346, 128, %s349, %s338
        $region60: #{sana_ms_adaln_block.1} parent=55 // pred_fallthru
          _
      $region56: #{sana_ms_adaln_block.1} parent=5 // pred_fallthru
        _
      %p352 = scmp.le.s32.totalorder 1, %s23
      %p353 = scmp.lt.s32.totalorder %s23, 3
      %p354 = pnand %p352, %p353
      %p355 = pneg %p354
      // Predicated region
      $region61: #{sana_ms_adaln_block.1} parent=5 // pred_check
        _
      $region62: #{sana_ms_adaln_block.1} parent=5 // pred_check_branch
        %357 = sbr.rel (%p354) target = $region64
      $region63: #{sana_ms_adaln_block.1} parent=5 // pred_region
        %s358 = ssub.s32 %s23, 1
        %s359 = sand.u32 %s36, 1
        %s360 = scalar_lea.sflag [#allocation3], %s359
        %s361 = sand.u32 %s36, 1
        %s362 = smul.addr %s361, 8
        %s363 = scalar_lea.vmem [#allocation2], %s362
        // Predicated region
        $region65: #{sana_ms_adaln_block.1} parent=63 // pred_check
          %p364 = pneg %p49
        $region66: #{sana_ms_adaln_block.1} parent=63 // pred_check_branch
          %366 = sbr.rel (%p364) target = $region68
        $region67: #{sana_ms_adaln_block.1} parent=63 // pred_region
          %367 = dma.done %s360, 128
        $region68: #{sana_ms_adaln_block.1} parent=63 // pred_fallthru
          _
        %s368 = sand.u32 %s36, 1
        %s369 = scalar_lea.sflag [#allocation3], %s368
        %s370 = sand.u32 %s36, 1
        %s371 = smul.addr %s370, 8
        %s372 = scalar_lea.vmem [#allocation2], %s371
        %p373 = pneg %p49
        %p374 = pneg %p46
        %p375 = pneg %p70
        %p376 = pneg %p67
        %p377 = pneg %p91
        %p378 = pneg %p88
        %p379 = pneg %p112
        %p380 = pneg %p109
        %p381 = pneg %p133
        %p382 = pneg %p130
        %p383 = pneg %p154
        %p384 = pneg %p151
        %p385 = pneg %p175
        %p386 = pneg %p172
        %p387 = pneg %p196
        %p388 = pneg %p193
        %p389 = pneg %p217
        %p390 = pneg %p214
        %p391 = pneg %p238
        %p392 = pneg %p235
        %p393 = pneg %p259
        %p394 = pneg %p256
        %p395 = pneg %p285
        %p396 = pneg %p282
        %s397 = sand.u32 %s272, 1
        %s398 = scalar_lea.sflag [#allocation4], %s397
        %s399 = sand.u32 %s272, 1
        %s400 = smul.addr %s399, 8
        %s401 = scalar_lea.vmem [#allocation5], %s400
        %v403 = vld [vmem:[%s363] sm:$0xff]
        %v404 = vld [vmem:[%s1] sm:$0xff]
        %v405 = vld [vmem:[%s1 + $0x8] sm:$0xff]
        %v406 = vpack.c.bf16 %v405, %v404
        %s407 = scalar_lea.vmem %s2, %s28
        %v408 = vld [vmem:[%s407] sm:$0x1]
        %v409 = vxor.u32 %v408, 2147483648
        %v410 = vmul.f32 %v409, 1.442695
        %v411 = vpow.pop %v410
        %v412 = vadd.f32 %v411, 1.0
        %v413 = vrcp.pop %v412
        %v414 = vmul.f32 1.0, %v413
        %v415 = vmul.f32 %v408, %v414
        %v416 = vpack.c.bf16 %v415, %v415
        %v417 = vld [vmem:[%s3] sm:$0xf]
        %v418 = vld [vmem:[%s3 + $0x4] sm:$0xf]
        %v419 = vld [vmem:[%s3 + $0x8] sm:$0xf]
        %v420 = vld [vmem:[%s3 + $0xc] sm:$0xf]
        %v421 = vld [vmem:[%s8] sm:$0x1]
        %v426 = vunpack.c.l.b16 %v417
        %v427 = vunpack.c.l.b16 %v418
        %v428 = vunpack.c.l.b16 %v419
        %v429 = vunpack.c.l.b16 %v420
        %v430 = vpack.c.b16 %v427, %v426
        %v431 = vpack.c.b16 %v429, %v428
        %vm434 = vcmask 261120
        %v436 = vsel %vm434, %v416, 0
        %438 = vmatprep.subr.bf16.mxu0 0
        %439 = vmatpush1.bf16.msra.mxu0 %v430
        %440 = vmatprep.subr.bf16.mxu0 0
        %441 = vmatpush1.bf16.msra.mxu0 %v431
        %442 = vmatprep.subr.bf16.mxu0 0
        %443 = vmatpush1.bf16.msra.mxu0 0
        %444 = vmatprep.subr.bf16.mxu0 0
        %445 = vmatpush1.bf16.msra.mxu0 0
        %446 = vmatprep.subr.bf16.mxu0 0
        %447 = vmatpush1.bf16.msra.mxu0 0
        %448 = vmatprep.subr.bf16.mxu0 0
        %449 = vmatpush1.bf16.msra.mxu0 0
        %450 = vmatprep.subr.bf16.mxu0 0
        %451 = vmatpush1.bf16.msra.mxu0 0
        %452 = vmatprep.subr.bf16.mxu0 0
        %453 = vmatpush1.bf16.msra.mxu0 0
        %454 = vmatprep.subr.bf16.mxu0 0
        %455 = vmatpush1.bf16.msra.mxu0 0
        %456 = vmatprep.subr.bf16.mxu0 0
        %457 = vmatpush1.bf16.msra.mxu0 0
        %458 = vmatprep.subr.bf16.mxu0 0
        %459 = vmatpush1.bf16.msra.mxu0 0
        %460 = vmatprep.subr.bf16.mxu0 0
        %461 = vmatpush1.bf16.msra.mxu0 0
        %462 = vmatprep.subr.bf16.mxu0 0
        %463 = vmatpush1.bf16.msra.mxu0 0
        %464 = vmatprep.subr.bf16.mxu0 0
        %465 = vmatpush1.bf16.msra.mxu0 0
        %466 = vmatprep.subr.bf16.mxu0 0
        %467 = vmatpush1.bf16.msra.mxu0 0
        %468 = vmatprep.subr.bf16.mxu0 0
        %469 = vmatpush1.bf16.msra.mxu0 0
        %470 = vmatprep.mubr.bf16.mxu0 0
        %471 = vmatmul.mubr.bf16.gmra.mrb[0].mxu0 %v436
        %v472 = vpop.f32.mrb[0].mxu0
        %v473 = vadd.f32 %v421, %v472
        %v474 = vpop.f32.mrb[0].mxu0
        %v475 = vpop.f32.mrb[0].mxu0
        %v476 = vpop.f32.mrb[0].mxu0
        %477 = vdwg.mxu0
        %s478 = scalar_lea.vmem %s3, 16
        %v479 = vld [vmem:[%s478] sm:$0xf]
        %v480 = vld [vmem:[%s478 + $0x4] sm:$0xf]
        %v481 = vld [vmem:[%s478 + $0x8] sm:$0xf]
        %v482 = vld [vmem:[%s478 + $0xc] sm:$0xf]
        %v483 = vld [vmem:[%s8 + $0x1] sm:$0x1]
        %v488 = vunpack.c.l.b16 %v479
        %v489 = vunpack.c.l.b16 %v480
        %v490 = vunpack.c.l.b16 %v481
        %v491 = vunpack.c.l.b16 %v482
        %v492 = vpack.c.b16 %v489, %v488
        %v493 = vpack.c.b16 %v491, %v490
        %496 = vmatprep.subr.bf16.mxu0 0
        %497 = vmatpush1.bf16.msra.mxu0 %v492
        %498 = vmatprep.subr.bf16.mxu0 0
        %499 = vmatpush1.bf16.msra.mxu0 %v493
        %500 = vmatprep.subr.bf16.mxu0 0
        %501 = vmatpush1.bf16.msra.mxu0 0
        %502 = vmatprep.subr.bf16.mxu0 0
        %503 = vmatpush1.bf16.msra.mxu0 0
        %504 = vmatprep.subr.bf16.mxu0 0
        %505 = vmatpush1.bf16.msra.mxu0 0
        %506 = vmatprep.subr.bf16.mxu0 0
        %507 = vmatpush1.bf16.msra.mxu0 0
        %508 = vmatprep.subr.bf16.mxu0 0
        %509 = vmatpush1.bf16.msra.mxu0 0
        %510 = vmatprep.subr.bf16.mxu0 0
        %511 = vmatpush1.bf16.msra.mxu0 0
        %512 = vmatprep.subr.bf16.mxu0 0
        %513 = vmatpush1.bf16.msra.mxu0 0
        %514 = vmatprep.subr.bf16.mxu0 0
        %515 = vmatpush1.bf16.msra.mxu0 0
        %516 = vmatprep.subr.bf16.mxu0 0
        %517 = vmatpush1.bf16.msra.mxu0 0
        %518 = vmatprep.subr.bf16.mxu0 0
        %519 = vmatpush1.bf16.msra.mxu0 0
        %520 = vmatprep.subr.bf16.mxu0 0
        %521 = vmatpush1.bf16.msra.mxu0 0
        %522 = vmatprep.subr.bf16.mxu0 0
        %523 = vmatpush1.bf16.msra.mxu0 0
        %524 = vmatprep.subr.bf16.mxu0 0
        %525 = vmatpush1.bf16.msra.mxu0 0
        %526 = vmatprep.subr.bf16.mxu0 0
        %527 = vmatpush1.bf16.msra.mxu0 0
        %528 = vmatprep.mubr.bf16.mxu0 0
        %529 = vmatmul.mubr.bf16.gmra.mrb[0].mxu0 %v436
        %v530 = vpop.f32.mrb[0].mxu0
        %v531 = vadd.f32 %v483, %v530
        %v532 = vpop.f32.mrb[0].mxu0
        %v533 = vpop.f32.mrb[0].mxu0
        %v534 = vpop.f32.mrb[0].mxu0
        %535 = vdwg.mxu0
        %s536 = scalar_lea.vmem %s3, 32
        %v537 = vld [vmem:[%s536] sm:$0xf]
        %v538 = vld [vmem:[%s536 + $0x4] sm:$0xf]
        %v539 = vld [vmem:[%s536 + $0x8] sm:$0xf]
        %v540 = vld [vmem:[%s536 + $0xc] sm:$0xf]
        %v541 = vld [vmem:[%s8 + $0x2] sm:$0x1]
        %v546 = vunpack.c.l.b16 %v537
        %v547 = vunpack.c.l.b16 %v538
        %v548 = vunpack.c.l.b16 %v539
        %v549 = vunpack.c.l.b16 %v540
        %v550 = vpack.c.b16 %v547, %v546
        %v551 = vpack.c.b16 %v549, %v548
        %554 = vmatprep.subr.bf16.mxu0 0
        %555 = vmatpush1.bf16.msra.mxu0 %v550
        %556 = vmatprep.subr.bf16.mxu0 0
        %557 = vmatpush1.bf16.msra.mxu0 %v551
        %558 = vmatprep.subr.bf16.mxu0 0
        %559 = vmatpush1.bf16.msra.mxu0 0
        %560 = vmatprep.subr.bf16.mxu0 0
        %561 = vmatpush1.bf16.msra.mxu0 0
        %562 = vmatprep.subr.bf16.mxu0 0
        %563 = vmatpush1.bf16.msra.mxu0 0
        %564 = vmatprep.subr.bf16.mxu0 0
        %565 = vmatpush1.bf16.msra.mxu0 0
        %566 = vmatprep.subr.bf16.mxu0 0
        %567 = vmatpush1.bf16.msra.mxu0 0
        %568 = vmatprep.subr.bf16.mxu0 0
        %569 = vmatpush1.bf16.msra.mxu0 0
        %570 = vmatprep.subr.bf16.mxu0 0
        %571 = vmatpush1.bf16.msra.mxu0 0
        %572 = vmatprep.subr.bf16.mxu0 0
        %573 = vmatpush1.bf16.msra.mxu0 0
        %574 = vmatprep.subr.bf16.mxu0 0
        %575 = vmatpush1.bf16.msra.mxu0 0
        %576 = vmatprep.subr.bf16.mxu0 0
        %577 = vmatpush1.bf16.msra.mxu0 0
        %578 = vmatprep.subr.bf16.mxu0 0
        %579 = vmatpush1.bf16.msra.mxu0 0
        %580 = vmatprep.subr.bf16.mxu0 0
        %581 = vmatpush1.bf16.msra.mxu0 0
        %582 = vmatprep.subr.bf16.mxu0 0
        %583 = vmatpush1.bf16.msra.mxu0 0
        %584 = vmatprep.subr.bf16.mxu0 0
        %585 = vmatpush1.bf16.msra.mxu0 0
        %586 = vmatprep.mubr.bf16.mxu0 0
        %587 = vmatmul.mubr.bf16.gmra.mrb[0].mxu0 %v436
        %v588 = vpop.f32.mrb[0].mxu0
        %v589 = vadd.f32 %v541, %v588
        %v590 = vpop.f32.mrb[0].mxu0
        %v591 = vpop.f32.mrb[0].mxu0
        %v592 = vpop.f32.mrb[0].mxu0
        %593 = vdwg.mxu0
        %s594 = scalar_lea.vmem %s3, 48
        %v595 = vld [vmem:[%s594] sm:$0xf]
        %v596 = vld [vmem:[%s594 + $0x4] sm:$0xf]
        %v597 = vld [vmem:[%s594 + $0x8] sm:$0xf]
        %v598 = vld [vmem:[%s594 + $0xc] sm:$0xf]
        %v599 = vld [vmem:[%s8 + $0x3] sm:$0x1]
        %v604 = vunpack.c.l.b16 %v595
        %v605 = vunpack.c.l.b16 %v596
        %v606 = vunpack.c.l.b16 %v597
        %v607 = vunpack.c.l.b16 %v598
        %v608 = vpack.c.b16 %v605, %v604
        %v609 = vpack.c.b16 %v607, %v606
        %612 = vmatprep.subr.bf16.mxu0 0
        %613 = vmatpush1.bf16.msra.mxu0 %v608
        %614 = vmatprep.subr.bf16.mxu0 0
        %615 = vmatpush1.bf16.msra.mxu0 %v609
        %616 = vmatprep.subr.bf16.mxu0 0
        %617 = vmatpush1.bf16.msra.mxu0 0
        %618 = vmatprep.subr.bf16.mxu0 0
        %619 = vmatpush1.bf16.msra.mxu0 0
        %620 = vmatprep.subr.bf16.mxu0 0
        %621 = vmatpush1.bf16.msra.mxu0 0
        %622 = vmatprep.subr.bf16.mxu0 0
        %623 = vmatpush1.bf16.msra.mxu0 0
        %624 = vmatprep.subr.bf16.mxu0 0
        %625 = vmatpush1.bf16.msra.mxu0 0
        %626 = vmatprep.subr.bf16.mxu0 0
        %627 = vmatpush1.bf16.msra.mxu0 0
        %628 = vmatprep.subr.bf16.mxu0 0
        %629 = vmatpush1.bf16.msra.mxu0 0
        %630 = vmatprep.subr.bf16.mxu0 0
        %631 = vmatpush1.bf16.msra.mxu0 0
        %632 = vmatprep.subr.bf16.mxu0 0
        %633 = vmatpush1.bf16.msra.mxu0 0
        %634 = vmatprep.subr.bf16.mxu0 0
        %635 = vmatpush1.bf16.msra.mxu0 0
        %636 = vmatprep.subr.bf16.mxu0 0
        %637 = vmatpush1.bf16.msra.mxu0 0
        %638 = vmatprep.subr.bf16.mxu0 0
        %639 = vmatpush1.bf16.msra.mxu0 0
        %640 = vmatprep.subr.bf16.mxu0 0
        %641 = vmatpush1.bf16.msra.mxu0 0
        %642 = vmatprep.subr.bf16.mxu0 0
        %643 = vmatpush1.bf16.msra.mxu0 0
        %644 = vmatprep.mubr.bf16.mxu0 0
        %645 = vmatmul.mubr.bf16.gmra.mrb[0].mxu0 %v436
        %v646 = vpop.f32.mrb[0].mxu0
        %v647 = vadd.f32 %v599, %v646
        %v648 = vpop.f32.mrb[0].mxu0
        %v649 = vpop.f32.mrb[0].mxu0
        %v650 = vpop.f32.mrb[0].mxu0
        %651 = vdwg.mxu0
        %s652 = scalar_lea.vmem %s3, 64
        %v653 = vld [vmem:[%s652] sm:$0xf]
        %v654 = vld [vmem:[%s652 + $0x4] sm:$0xf]
        %v655 = vld [vmem:[%s652 + $0x8] sm:$0xf]
        %v656 = vld [vmem:[%s652 + $0xc] sm:$0xf]
        %v657 = vld [vmem:[%s8 + $0x4] sm:$0x1]
        %v662 = vunpack.c.l.b16 %v653
        %v663 = vunpack.c.l.b16 %v654
        %v664 = vunpack.c.l.b16 %v655
        %v665 = vunpack.c.l.b16 %v656
        %v666 = vpack.c.b16 %v663, %v662
        %v667 = vpack.c.b16 %v665, %v664
        %670 = vmatprep.subr.bf16.mxu0 0
        %671 = vmatpush1.bf16.msra.mxu0 %v666
        %672 = vmatprep.subr.bf16.mxu0 0
        %673 = vmatpush1.bf16.msra.mxu0 %v667
        %674 = vmatprep.subr.bf16.mxu0 0
        %675 = vmatpush1.bf16.msra.mxu0 0
        %676 = vmatprep.subr.bf16.mxu0 0
        %677 = vmatpush1.bf16.msra.mxu0 0
        %678 = vmatprep.subr.bf16.mxu0 0
        %679 = vmatpush1.bf16.msra.mxu0 0
        %680 = vmatprep.subr.bf16.mxu0 0
        %681 = vmatpush1.bf16.msra.mxu0 0
        %682 = vmatprep.subr.bf16.mxu0 0
        %683 = vmatpush1.bf16.msra.mxu0 0
        %684 = vmatprep.subr.bf16.mxu0 0
        %685 = vmatpush1.bf16.msra.mxu0 0
        %686 = vmatprep.subr.bf16.mxu0 0
        %687 = vmatpush1.bf16.msra.mxu0 0
        %688 = vmatprep.subr.bf16.mxu0 0
        %689 = vmatpush1.bf16.msra.mxu0 0
        %690 = vmatprep.subr.bf16.mxu0 0
        %691 = vmatpush1.bf16.msra.mxu0 0
        %692 = vmatprep.subr.bf16.mxu0 0
        %693 = vmatpush1.bf16.msra.mxu0 0
        %694 = vmatprep.subr.bf16.mxu0 0
        %695 = vmatpush1.bf16.msra.mxu0 0
        %696 = vmatprep.subr.bf16.mxu0 0
        %697 = vmatpush1.bf16.msra.mxu0 0
        %698 = vmatprep.subr.bf16.mxu0 0
        %699 = vmatpush1.bf16.msra.mxu0 0
        %700 = vmatprep.subr.bf16.mxu0 0
        %701 = vmatpush1.bf16.msra.mxu0 0
        %702 = vmatprep.mubr.bf16.mxu0 0
        %703 = vmatmul.mubr.bf16.gmra.mrb[0].mxu0 %v436
        %v704 = vpop.f32.mrb[0].mxu0
        %v705 = vadd.f32 %v657, %v704
        %v706 = vpop.f32.mrb[0].mxu0
        %v707 = vpop.f32.mrb[0].mxu0
        %v708 = vpop.f32.mrb[0].mxu0
        %709 = vdwg.mxu0
        %s710 = scalar_lea.vmem %s3, 80
        %v711 = vld [vmem:[%s710] sm:$0xf]
        %v712 = vld [vmem:[%s710 + $0x4] sm:$0xf]
        %v713 = vld [vmem:[%s710 + $0x8] sm:$0xf]
        %v714 = vld [vmem:[%s710 + $0xc] sm:$0xf]
        %v715 = vld [vmem:[%s8 + $0x5] sm:$0x1]
        %v720 = vunpack.c.l.b16 %v711
        %v721 = vunpack.c.l.b16 %v712
        %v722 = vunpack.c.l.b16 %v713
        %v723 = vunpack.c.l.b16 %v714
        %v724 = vpack.c.b16 %v721, %v720
        %v725 = vpack.c.b16 %v723, %v722
        %728 = vmatprep.subr.bf16.mxu0 0
        %729 = vmatpush1.bf16.msra.mxu0 %v724
        %730 = vmatprep.subr.bf16.mxu0 0
        %731 = vmatpush1.bf16.msra.mxu0 %v725
        %732 = vmatprep.subr.bf16.mxu0 0
        %733 = vmatpush1.bf16.msra.mxu0 0
        %734 = vmatprep.subr.bf16.mxu0 0
        %735 = vmatpush1.bf16.msra.mxu0 0
        %736 = vmatprep.subr.bf16.mxu0 0
        %737 = vmatpush1.bf16.msra.mxu0 0
        %738 = vmatprep.subr.bf16.mxu0 0
        %739 = vmatpush1.bf16.msra.mxu0 0
        %740 = vmatprep.subr.bf16.mxu0 0
        %741 = vmatpush1.bf16.msra.mxu0 0
        %742 = vmatprep.subr.bf16.mxu0 0
        %743 = vmatpush1.bf16.msra.mxu0 0
        %744 = vmatprep.subr.bf16.mxu0 0
        %745 = vmatpush1.bf16.msra.mxu0 0
        %746 = vmatprep.subr.bf16.mxu0 0
        %747 = vmatpush1.bf16.msra.mxu0 0
        %748 = vmatprep.subr.bf16.mxu0 0
        %749 = vmatpush1.bf16.msra.mxu0 0
        %750 = vmatprep.subr.bf16.mxu0 0
        %751 = vmatpush1.bf16.msra.mxu0 0
        %752 = vmatprep.subr.bf16.mxu0 0
        %753 = vmatpush1.bf16.msra.mxu0 0
        %754 = vmatprep.subr.bf16.mxu0 0
        %755 = vmatpush1.bf16.msra.mxu0 0
        %756 = vmatprep.subr.bf16.mxu0 0
        %757 = vmatpush1.bf16.msra.mxu0 0
        %758 = vmatprep.subr.bf16.mxu0 0
        %759 = vmatpush1.bf16.msra.mxu0 0
        %760 = vmatprep.mubr.bf16.mxu0 0
        %761 = vmatmul.mubr.bf16.gmra.mrb[0].mxu0 %v436
        %v762 = vpop.f32.mrb[0].mxu0
        %v763 = vadd.f32 %v715, %v762
        %v764 = vpop.f32.mrb[0].mxu0
        %v765 = vpop.f32.mrb[0].mxu0
        %v766 = vpop.f32.mrb[0].mxu0
        %767 = vdwg.mxu0
        %v768 = vsel %vm434, %v403, 0.0
        %769 = vadd.xlane.f32.xlu0 %v768
        %v770 = vpop.xlane.xlu0 %769
        %v771 = vrcp.pop 32.0
        %v772 = vmul.f32 %v770, %v771
        %v773 = vsub.f32 %v403, %v772
        %v774 = vmul.f32 %v773, %v773
        %v775 = vsel %vm434, %v774, 0.0
        %776 = vadd.xlane.f32.xlu0 %v775
        %v777 = vpop.xlane.xlu0 %776
        %v778 = vmul.f32 %v777, %v771
        %v779 = vadd.f32 %v778, 1e-06
        %v780 = vrsqrt.pop %v779
        %v781 = vmul.f32 %v773, %v780
        %v782 = vadd.f32 %v531, 1.0
        %v783 = vlaneseq
        %v784 = vshrl.u32 %v783, 7
        %v785 = vsub.s32 0, %v784
        %v786 = vrot.slane %v782, %v785
        %v787 = vmul.f32 %v781, %v786
        %v788 = vlaneseq
        %v789 = vshrl.u32 %v788, 7
        %v790 = vsub.s32 0, %v789
        %v791 = vrot.slane %v473, %v790
        %v792 = vadd.f32 %v787, %v791
        %v793 = vpack.c.bf16 %v792, %v792
        %v794 = vld [vmem:[%s4] sm:$0xf]
        %v795 = vld [vmem:[%s4 + $0x4] sm:$0xf]
        %v796 = vld [vmem:[%s4 + $0x8] sm:$0xf]
        %v797 = vld [vmem:[%s4 + $0xc] sm:$0xf]
        %v798 = vld [vmem:[%s9] sm:$0x1]
        %v799 = vlaneseq
        %v800 = vshrl.u32 %v799, 7
        %v801 = vsub.s32 0, %v800
        %v802 = vrot.slane %v798, %v801
        %v807 = vunpack.c.l.b16 %v794
        %v808 = vunpack.c.l.b16 %v795
        %v809 = vunpack.c.l.b16 %v796
        %v810 = vunpack.c.l.b16 %v797
        %v811 = vpack.c.b16 %v808, %v807
        %v812 = vpack.c.b16 %v810, %v809
        %v816 = vsel %vm434, %v793, 0
        %818 = vmatprep.subr.bf16.mxu0 0
        %819 = vmatpush1.bf16.msra.mxu0 %v811
        %820 = vmatprep.subr.bf16.mxu0 0
        %821 = vmatpush1.bf16.msra.mxu0 %v812
        %822 = vmatprep.subr.bf16.mxu0 0
        %823 = vmatpush1.bf16.msra.mxu0 0
        %824 = vmatprep.subr.bf16.mxu0 0
        %825 = vmatpush1.bf16.msra.mxu0 0
        %826 = vmatprep.subr.bf16.mxu0 0
        %827 = vmatpush1.bf16.msra.mxu0 0
        %828 = vmatprep.subr.bf16.mxu0 0
        %829 = vmatpush1.bf16.msra.mxu0 0
        %830 = vmatprep.subr.bf16.mxu0 0
        %831 = vmatpush1.bf16.msra.mxu0 0
        %832 = vmatprep.subr.bf16.mxu0 0
        %833 = vmatpush1.bf16.msra.mxu0 0
        %834 = vmatprep.subr.bf16.mxu0 0
        %835 = vmatpush1.bf16.msra.mxu0 0
        %836 = vmatprep.subr.bf16.mxu0 0
        %837 = vmatpush1.bf16.msra.mxu0 0
        %838 = vmatprep.subr.bf16.mxu0 0
        %839 = vmatpush1.bf16.msra.mxu0 0
        %840 = vmatprep.subr.bf16.mxu0 0
        %841 = vmatpush1.bf16.msra.mxu0 0
        %842 = vmatprep.subr.bf16.mxu0 0
        %843 = vmatpush1.bf16.msra.mxu0 0
        %844 = vmatprep.subr.bf16.mxu0 0
        %845 = vmatpush1.bf16.msra.mxu0 0
        %846 = vmatprep.subr.bf16.mxu0 0
        %847 = vmatpush1.bf16.msra.mxu0 0
        %848 = vmatprep.subr.bf16.mxu0 0
        %849 = vmatpush1.bf16.msra.mxu0 0
        %850 = vmatprep.mubr.bf16.mxu0 0
        %851 = vmatmul.mubr.bf16.gmra.mrb[0].mxu0 %v816
        %v852 = vpop.f32.mrb[0].mxu0
        %v853 = vadd.f32 %v802, %v852
        %v854 = vpop.f32.mrb[0].mxu0
        %v855 = vpop.f32.mrb[0].mxu0
        %v856 = vpop.f32.mrb[0].mxu0
        %857 = vdwg.mxu0
        %v858 = vmul.f32 %v853, 0.25
        %s859 = scalar_lea.vmem %s4, 32
        %v860 = vld [vmem:[%s859] sm:$0xf]
        %v861 = vld [vmem:[%s859 + $0x4] sm:$0xf]
        %v862 = vld [vmem:[%s859 + $0x8] sm:$0xf]
        %v863 = vld [vmem:[%s859 + $0xc] sm:$0xf]
        %v864 = vld [vmem:[%s9 + $0x2] sm:$0x1]
        %v865 = vlaneseq
        %v866 = vshrl.u32 %v865, 7
        %v867 = vsub.s32 0, %v866
        %v868 = vrot.slane %v864, %v867
        %v873 = vunpack.c.l.b16 %v860
        %v874 = vunpack.c.l.b16 %v861
        %v875 = vunpack.c.l.b16 %v862
        %v876 = vunpack.c.l.b16 %v863
        %v877 = vpack.c.b16 %v874, %v873
        %v878 = vpack.c.b16 %v876, %v875
        %881 = vmatprep.subr.bf16.mxu0 0
        %882 = vmatpush1.bf16.msra.mxu0 %v877
        %883 = vmatprep.subr.bf16.mxu0 0
        %884 = vmatpush1.bf16.msra.mxu0 %v878
        %885 = vmatprep.subr.bf16.mxu0 0
        %886 = vmatpush1.bf16.msra.mxu0 0
        %887 = vmatprep.subr.bf16.mxu0 0
        %888 = vmatpush1.bf16.msra.mxu0 0
        %889 = vmatprep.subr.bf16.mxu0 0
        %890 = vmatpush1.bf16.msra.mxu0 0
        %891 = vmatprep.subr.bf16.mxu0 0
        %892 = vmatpush1.bf16.msra.mxu0 0
        %893 = vmatprep.subr.bf16.mxu0 0
        %894 = vmatpush1.bf16.msra.mxu0 0
        %895 = vmatprep.subr.bf16.mxu0 0
        %896 = vmatpush1.bf16.msra.mxu0 0
        %897 = vmatprep.subr.bf16.mxu0 0
        %898 = vmatpush1.bf16.msra.mxu0 0
        %899 = vmatprep.subr.bf16.mxu0 0
        %900 = vmatpush1.bf16.msra.mxu0 0
        %901 = vmatprep.subr.bf16.mxu0 0
        %902 = vmatpush1.bf16.msra.mxu0 0
        %903 = vmatprep.subr.bf16.mxu0 0
        %904 = vmatpush1.bf16.msra.mxu0 0
        %905 = vmatprep.subr.bf16.mxu0 0
        %906 = vmatpush1.bf16.msra.mxu0 0
        %907 = vmatprep.subr.bf16.mxu0 0
        %908 = vmatpush1.bf16.msra.mxu0 0
        %909 = vmatprep.subr.bf16.mxu0 0
        %910 = vmatpush1.bf16.msra.mxu0 0
        %911 = vmatprep.subr.bf16.mxu0 0
        %912 = vmatpush1.bf16.msra.mxu0 0
        %913 = vmatprep.mubr.bf16.mxu0 0
        %914 = vmatmul.mubr.bf16.gmra.mrb[0].mxu0 %v816
        %v915 = vpop.f32.mrb[0].mxu0
        %v916 = vadd.f32 %v868, %v915
        %v917 = vpop.f32.mrb[0].mxu0
        %v918 = vpop.f32.mrb[0].mxu0
        %v919 = vpop.f32.mrb[0].mxu0
        %920 = vdwg.mxu0
        %s921 = scalar_lea.vmem %s4, 64
        %v922 = vld [vmem:[%s921] sm:$0xf]
        %v923 = vld [vmem:[%s921 + $0x4] sm:$0xf]
        %v924 = vld [vmem:[%s921 + $0x8] sm:$0xf]
        %v925 = vld [vmem:[%s921 + $0xc] sm:$0xf]
        %v926 = vld [vmem:[%s9 + $0x4] sm:$0x1]
        %v927 = vlaneseq
        %v928 = vshrl.u32 %v927, 7
        %v929 = vsub.s32 0, %v928
        %v930 = vrot.slane %v926, %v929
        %v935 = vunpack.c.l.b16 %v922
        %v936 = vunpack.c.l.b16 %v923
        %v937 = vunpack.c.l.b16 %v924
        %v938 = vunpack.c.l.b16 %v925
        %v939 = vpack.c.b16 %v936, %v935
        %v940 = vpack.c.b16 %v938, %v937
        %943 = vmatprep.subr.bf16.mxu0 0
        %944 = vmatpush1.bf16.msra.mxu0 %v939
        %945 = vmatprep.subr.bf16.mxu0 0
        %946 = vmatpush1.bf16.msra.mxu0 %v940
        %947 = vmatprep.subr.bf16.mxu0 0
        %948 = vmatpush1.bf16.msra.mxu0 0
        %949 = vmatprep.subr.bf16.mxu0 0
        %950 = vmatpush1.bf16.msra.mxu0 0
        %951 = vmatprep.subr.bf16.mxu0 0
        %952 = vmatpush1.bf16.msra.mxu0 0
        %953 = vmatprep.subr.bf16.mxu0 0
        %954 = vmatpush1.bf16.msra.mxu0 0
        %955 = vmatprep.subr.bf16.mxu0 0
        %956 = vmatpush1.bf16.msra.mxu0 0
        %957 = vmatprep.subr.bf16.mxu0 0
        %958 = vmatpush1.bf16.msra.mxu0 0
        %959 = vmatprep.subr.bf16.mxu0 0
        %960 = vmatpush1.bf16.msra.mxu0 0
        %961 = vmatprep.subr.bf16.mxu0 0
        %962 = vmatpush1.bf16.msra.mxu0 0
        %963 = vmatprep.subr.bf16.mxu0 0
        %964 = vmatpush1.bf16.msra.mxu0 0
        %965 = vmatprep.subr.bf16.mxu0 0
        %966 = vmatpush1.bf16.msra.mxu0 0
        %967 = vmatprep.subr.bf16.mxu0 0
        %968 = vmatpush1.bf16.msra.mxu0 0
        %969 = vmatprep.subr.bf16.mxu0 0
        %970 = vmatpush1.bf16.msra.mxu0 0
        %971 = vmatprep.subr.bf16.mxu0 0
        %972 = vmatpush1.bf16.msra.mxu0 0
        %973 = vmatprep.subr.bf16.mxu0 0
        %974 = vmatpush1.bf16.msra.mxu0 0
        %975 = vmatprep.mubr.bf16.mxu0 0
        %976 = vmatmul.mubr.bf16.gmra.mrb[0].mxu0 %v816
        %v977 = vpop.f32.mrb[0].mxu0
        %v978 = vadd.f32 %v930, %v977
        %v979 = vpop.f32.mrb[0].mxu0
        %v980 = vpop.f32.mrb[0].mxu0
        %v981 = vpop.f32.mrb[0].mxu0
        %982 = vdwg.mxu0
        %v983 = vpack.c.bf16 %v858, %v858
        %v984 = vpack.c.bf16 %v916, %v916
        %vm985 = vcmask 130048
        %v987 = vsel %vm985, %v983, 0
        %v990 = vsel %vm985, %v984, 0
        %992 = vmatprep.subr.bf16.mxu0 0
        %993 = vmatpush1.bf16.xpose.msra.mxu0 %v990
        %994 = vmatprep.subr.bf16.mxu0 0
        %995 = vmatpush1.bf16.xpose.msra.mxu0 0
        %996 = vmatprep.subr.bf16.mxu0 0
        %997 = vmatpush1.bf16.xpose.msra.mxu0 0
        %998 = vmatprep.subr.bf16.mxu0 0
        %999 = vmatpush1.bf16.xpose.msra.mxu0 0
        %1000 = vmatprep.subr.bf16.mxu0 0
        %1001 = vmatpush1.bf16.xpose.msra.mxu0 0
        %1002 = vmatprep.subr.bf16.mxu0 0
        %1003 = vmatpush1.bf16.xpose.msra.mxu0 0
        %1004 = vmatprep.subr.bf16.mxu0 0
        %1005 = vmatpush1.bf16.xpose.msra.mxu0 0
        %1006 = vmatprep.subr.bf16.mxu0 0
        %1007 = vmatpush1.bf16.xpose.msra.mxu0 0
        %1008 = vmatprep.subr.bf16.mxu0 0
        %1009 = vmatpush1.bf16.xpose.msra.mxu0 0
        %1010 = vmatprep.subr.bf16.mxu0 0
        %1011 = vmatpush1.bf16.xpose.msra.mxu0 0
        %1012 = vmatprep.subr.bf16.mxu0 0
        %1013 = vmatpush1.bf16.xpose.msra.mxu0 0
        %1014 = vmatprep.subr.bf16.mxu0 0
        %1015 = vmatpush1.bf16.xpose.msra.mxu0 0
        %1016 = vmatprep.subr.bf16.mxu0 0
        %1017 = vmatpush1.bf16.xpose.msra.mxu0 0
        %1018 = vmatprep.subr.bf16.mxu0 0
        %1019 = vmatpush1.bf16.xpose.msra.mxu0 0
        %1020 = vmatprep.subr.bf16.mxu0 0
        %1021 = vmatpush1.bf16.xpose.msra.mxu0 0
        %1022 = vmatprep.subr.bf16.mxu0 0
        %1023 = vmatpush1.bf16.xpose.msra.mxu0 0
        %1024 = vmatprep.mubr.bf16.mxu0 0
        %1025 = vmatmul.mubr.bf16.gmra.mrb[0].mxu0 %v987
        %v1026 = vpop.f32.mrb[0].mxu0
        %v1027 = vadd.f32 0.0, %v1026
        %v1028 = vpop.f32.mrb[0].mxu0
        %v1029 = vpop.f32.mrb[0].mxu0
        %v1030 = vpop.f32.mrb[0].mxu0
        %1031 = vdwg.mxu0
        %vm1032 = vcmask 64512
        %v1033 = vsel %vm1032, %v1027, -inf
        %1034 = vmax.xlane.f32.xlu0 %v1033
        %v1035 = vpop.xlane.xlu0 %1034
        %v1036 = vsub.f32 %v1027, %v1035
        %v1037 = vmul.f32 %v1036, 1.442695
        %v1038 = vpow.pop %v1037
        %v1039 = vsel %vm1032, %v1038, 0.0
        %1040 = vadd.xlane.f32.xlu0 %v1039
        %v1041 = vpop.xlane.xlu0 %1040
        %v1042 = vrcp.pop %v1041
        %v1043 = vmul.f32 %v1038, %v1042
        %v1044 = vpack.c.bf16 %v1043, %v1043
        %v1045 = vpack.c.bf16 %v978, %v978
        %v1047 = vsel %vm1032, %v1044, 0
        %vm1049 = vcmask 1043456
        %v1051 = vsel %vm1049, %v1045, 0
        %1053 = vmatprep.subr.bf16.mxu0 0
        %1054 = vmatpush1.bf16.msra.mxu0 %v1051
        %1055 = vmatprep.subr.bf16.mxu0 0
        %1056 = vmatpush1.bf16.msra.mxu0 0
        %1057 = vmatprep.subr.bf16.mxu0 0
        %1058 = vmatpush1.bf16.msra.mxu0 0
        %1059 = vmatprep.subr.bf16.mxu0 0
        %1060 = vmatpush1.bf16.msra.mxu0 0
        %1061 = vmatprep.subr.bf16.mxu0 0
        %1062 = vmatpush1.bf16.msra.mxu0 0
        %1063 = vmatprep.subr.bf16.mxu0 0
        %1064 = vmatpush1.bf16.msra.mxu0 0
        %1065 = vmatprep.subr.bf16.mxu0 0
        %1066 = vmatpush1.bf16.msra.mxu0 0
        %1067 = vmatprep.subr.bf16.mxu0 0
        %1068 = vmatpush1.bf16.msra.mxu0 0
        %1069 = vmatprep.subr.bf16.mxu0 0
        %1070 = vmatpush1.bf16.msra.mxu0 0
        %1071 = vmatprep.subr.bf16.mxu0 0
        %1072 = vmatpush1.bf16.msra.mxu0 0
        %1073 = vmatprep.subr.bf16.mxu0 0
        %1074 = vmatpush1.bf16.msra.mxu0 0
        %1075 = vmatprep.subr.bf16.mxu0 0
        %1076 = vmatpush1.bf16.msra.mxu0 0
        %1077 = vmatprep.subr.bf16.mxu0 0
        %1078 = vmatpush1.bf16.msra.mxu0 0
        %1079 = vmatprep.subr.bf16.mxu0 0
        %1080 = vmatpush1.bf16.msra.mxu0 0
        %1081 = vmatprep.subr.bf16.mxu0 0
        %1082 = vmatpush1.bf16.msra.mxu0 0
        %1083 = vmatprep.subr.bf16.mxu0 0
        %1084 = vmatpush1.bf16.msra.mxu0 0
        %1085 = vmatprep.mubr.bf16.mxu0 0
        %1086 = vmatmul.mubr.bf16.gmra.mrb[0].mxu0 %v1047
        %v1087 = vpop.f32.mrb[0].mxu0
        %v1088 = vadd.f32 0.0, %v1087
        %v1089 = vpop.f32.mrb[0].mxu0
        %v1090 = vpop.f32.mrb[0].mxu0
        %v1091 = vpop.f32.mrb[0].mxu0
        %1092 = vdwg.mxu0
        %v1093 = vpack.c.bf16 %v1088, %v1088
        %v1094 = vld [vmem:[%s5] sm:$0xf]
        %v1095 = vld [vmem:[%s5 + $0x4] sm:$0xf]
        %s1096 = scalar_lea.vmem %s4, 16
        %v1097 = vld [vmem:[%s1096] sm:$0xf]
        %v1098 = vld [vmem:[%s1096 + $0x4] sm:$0xf]
        %v1099 = vld [vmem:[%s1096 + $0x8] sm:$0xf]
        %v1100 = vld [vmem:[%s1096 + $0xc] sm:$0xf]
        %v1101 = vld [vmem:[%s9 + $0x1] sm:$0x1]
        %v1102 = vlaneseq
        %v1103 = vshrl.u32 %v1102, 7
        %v1104 = vsub.s32 0, %v1103
        %v1105 = vrot.slane %v1101, %v1104
        %v1110 = vunpack.c.l.b16 %v1097
        %v1111 = vunpack.c.l.b16 %v1098
        %v1112 = vunpack.c.l.b16 %v1099
        %v1113 = vunpack.c.l.b16 %v1100
        %v1114 = vpack.c.b16 %v1111, %v1110
        %v1115 = vpack.c.b16 %v1113, %v1112
        %1118 = vmatprep.subr.bf16.mxu0 0
        %1119 = vmatpush1.bf16.msra.mxu0 %v1114
        %1120 = vmatprep.subr.bf16.mxu0 0
        %1121 = vmatpush1.bf16.msra.mxu0 %v1115
        %1122 = vmatprep.subr.bf16.mxu0 0
        %1123 = vmatpush1.bf16.msra.mxu0 0
        %1124 = vmatprep.subr.bf16.mxu0 0
        %1125 = vmatpush1.bf16.msra.mxu0 0
        %1126 = vmatprep.subr.bf16.mxu0 0
        %1127 = vmatpush1.bf16.msra.mxu0 0
        %1128 = vmatprep.subr.bf16.mxu0 0
        %1129 = vmatpush1.bf16.msra.mxu0 0
        %1130 = vmatprep.subr.bf16.mxu0 0
        %1131 = vmatpush1.bf16.msra.mxu0 0
        %1132 = vmatprep.subr.bf16.mxu0 0
        %1133 = vmatpush1.bf16.msra.mxu0 0
        %1134 = vmatprep.subr.bf16.mxu0 0
        %1135 = vmatpush1.bf16.msra.mxu0 0
        %1136 = vmatprep.subr.bf16.mxu0 0
        %1137 = vmatpush1.bf16.msra.mxu0 0
        %1138 = vmatprep.subr.bf16.mxu0 0
        %1139 = vmatpush1.bf16.msra.mxu0 0
        %1140 = vmatprep.subr.bf16.mxu0 0
        %1141 = vmatpush1.bf16.msra.mxu0 0
        %1142 = vmatprep.subr.bf16.mxu0 0
        %1143 = vmatpush1.bf16.msra.mxu0 0
        %1144 = vmatprep.subr.bf16.mxu0 0
        %1145 = vmatpush1.bf16.msra.mxu0 0
        %1146 = vmatprep.subr.bf16.mxu0 0
        %1147 = vmatpush1.bf16.msra.mxu0 0
        %1148 = vmatprep.subr.bf16.mxu0 0
        %1149 = vmatpush1.bf16.msra.mxu0 0
        %1150 = vmatprep.mubr.bf16.mxu0 0
        %1151 = vmatmul.mubr.bf16.gmra.mrb[0].mxu0 %v816
        %v1152 = vpop.f32.mrb[0].mxu0
        %v1153 = vadd.f32 %v1105, %v1152
        %v1154 = vpop.f32.mrb[0].mxu0
        %v1155 = vpop.f32.mrb[0].mxu0
        %v1156 = vpop.f32.mrb[0].mxu0
        %1157 = vdwg.mxu0
        %v1158 = vmul.f32 %v1153, 0.25
        %s1159 = scalar_lea.vmem %s4, 48
        %v1160 = vld [vmem:[%s1159] sm:$0xf]
        %v1161 = vld [vmem:[%s1159 + $0x4] sm:$0xf]
        %v1162 = vld [vmem:[%s1159 + $0x8] sm:$0xf]
        %v1163 = vld [vmem:[%s1159 + $0xc] sm:$0xf]
        %v1164 = vld [vmem:[%s9 + $0x3] sm:$0x1]
        %v1165 = vlaneseq
        %v1166 = vshrl.u32 %v1165, 7
        %v1167 = vsub.s32 0, %v1166
        %v1168 = vrot.slane %v1164, %v1167
        %v1173 = vunpack.c.l.b16 %v1160
        %v1174 = vunpack.c.l.b16 %v1161
        %v1175 = vunpack.c.l.b16 %v1162
        %v1176 = vunpack.c.l.b16 %v1163
        %v1177 = vpack.c.b16 %v1174, %v1173
        %v1178 = vpack.c.b16 %v1176, %v1175
        %1181 = vmatprep.subr.bf16.mxu0 0
        %1182 = vmatpush1.bf16.msra.mxu0 %v1177
        %1183 = vmatprep.subr.bf16.mxu0 0
        %1184 = vmatpush1.bf16.msra.mxu0 %v1178
        %1185 = vmatprep.subr.bf16.mxu0 0
        %1186 = vmatpush1.bf16.msra.mxu0 0
        %1187 = vmatprep.subr.bf16.mxu0 0
        %1188 = vmatpush1.bf16.msra.mxu0 0
        %1189 = vmatprep.subr.bf16.mxu0 0
        %1190 = vmatpush1.bf16.msra.mxu0 0
        %1191 = vmatprep.subr.bf16.mxu0 0
        %1192 = vmatpush1.bf16.msra.mxu0 0
        %1193 = vmatprep.subr.bf16.mxu0 0
        %1194 = vmatpush1.bf16.msra.mxu0 0
        %1195 = vmatprep.subr.bf16.mxu0 0
        %1196 = vmatpush1.bf16.msra.mxu0 0
        %1197 = vmatprep.subr.bf16.mxu0 0
        %1198 = vmatpush1.bf16.msra.mxu0 0
        %1199 = vmatprep.subr.bf16.mxu0 0
        %1200 = vmatpush1.bf16.msra.mxu0 0
        %1201 = vmatprep.subr.bf16.mxu0 0
        %1202 = vmatpush1.bf16.msra.mxu0 0
        %1203 = vmatprep.subr.bf16.mxu0 0
        %1204 = vmatpush1.bf16.msra.mxu0 0
        %1205 = vmatprep.subr.bf16.mxu0 0
        %1206 = vmatpush1.bf16.msra.mxu0 0
        %1207 = vmatprep.subr.bf16.mxu0 0
        %1208 = vmatpush1.bf16.msra.mxu0 0
        %1209 = vmatprep.subr.bf16.mxu0 0
        %1210 = vmatpush1.bf16.msra.mxu0 0
        %1211 = vmatprep.subr.bf16.mxu0 0
        %1212 = vmatpush1.bf16.msra.mxu0 0
        %1213 = vmatprep.mubr.bf16.mxu0 0
        %1214 = vmatmul.mubr.bf16.gmra.mrb[0].mxu0 %v816
        %v1215 = vpop.f32.mrb[0].mxu0
        %v1216 = vadd.f32 %v1168, %v1215
        %v1217 = vpop.f32.mrb[0].mxu0
        %v1218 = vpop.f32.mrb[0].mxu0
        %v1219 = vpop.f32.mrb[0].mxu0
        %1220 = vdwg.mxu0
        %s1221 = scalar_lea.vmem %s4, 80
        %v1222 = vld [vmem:[%s1221] sm:$0xf]
        %v1223 = vld [vmem:[%s1221 + $0x4] sm:$0xf]
        %v1224 = vld [vmem:[%s1221 + $0x8] sm:$0xf]
        %v1225 = vld [vmem:[%s1221 + $0xc] sm:$0xf]
        %v1226 = vld [vmem:[%s9 + $0x5] sm:$0x1]
        %v1227 = vlaneseq
        %v1228 = vshrl.u32 %v1227, 7
        %v1229 = vsub.s32 0, %v1228
        %v1230 = vrot.slane %v1226, %v1229
        %v1235 = vunpack.c.l.b16 %v1222
        %v1236 = vunpack.c.l.b16 %v1223
        %v1237 = vunpack.c.l.b16 %v1224
        %v1238 = vunpack.c.l.b16 %v1225
        %v1239 = vpack.c.b16 %v1236, %v1235
        %v1240 = vpack.c.b16 %v1238, %v1237
        %1243 = vmatprep.subr.bf16.mxu0 0
        %1244 = vmatpush1.bf16.msra.mxu0 %v1239
        %1245 = vmatprep.subr.bf16.mxu0 0
        %1246 = vmatpush1.bf16.msra.mxu0 %v1240
        %1247 = vmatprep.subr.bf16.mxu0 0
        %1248 = vmatpush1.bf16.msra.mxu0 0
        %1249 = vmatprep.subr.bf16.mxu0 0
        %1250 = vmatpush1.bf16.msra.mxu0 0
        %1251 = vmatprep.subr.bf16.mxu0 0
        %1252 = vmatpush1.bf16.msra.mxu0 0
        %1253 = vmatprep.subr.bf16.mxu0 0
        %1254 = vmatpush1.bf16.msra.mxu0 0
        %1255 = vmatprep.subr.bf16.mxu0 0
        %1256 = vmatpush1.bf16.msra.mxu0 0
        %1257 = vmatprep.subr.bf16.mxu0 0
        %1258 = vmatpush1.bf16.msra.mxu0 0
        %1259 = vmatprep.subr.bf16.mxu0 0
        %1260 = vmatpush1.bf16.msra.mxu0 0
        %1261 = vmatprep.subr.bf16.mxu0 0
        %1262 = vmatpush1.bf16.msra.mxu0 0
        %1263 = vmatprep.subr.bf16.mxu0 0
        %1264 = vmatpush1.bf16.msra.mxu0 0
        %1265 = vmatprep.subr.bf16.mxu0 0
        %1266 = vmatpush1.bf16.msra.mxu0 0
        %1267 = vmatprep.subr.bf16.mxu0 0
        %1268 = vmatpush1.bf16.msra.mxu0 0
        %1269 = vmatprep.subr.bf16.mxu0 0
        %1270 = vmatpush1.bf16.msra.mxu0 0
        %1271 = vmatprep.subr.bf16.mxu0 0
        %1272 = vmatpush1.bf16.msra.mxu0 0
        %1273 = vmatprep.subr.bf16.mxu0 0
        %1274 = vmatpush1.bf16.msra.mxu0 0
        %1275 = vmatprep.mubr.bf16.mxu0 0
        %1276 = vmatmul.mubr.bf16.gmra.mrb[0].mxu0 %v816
        %v1277 = vpop.f32.mrb[0].mxu0
        %v1278 = vadd.f32 %v1230, %v1277
        %v1279 = vpop.f32.mrb[0].mxu0
        %v1280 = vpop.f32.mrb[0].mxu0
        %v1281 = vpop.f32.mrb[0].mxu0
        %1282 = vdwg.mxu0
        %v1283 = vpack.c.bf16 %v1158, %v1158
        %v1284 = vpack.c.bf16 %v1216, %v1216
        %v1286 = vsel %vm985, %v1283, 0
        %v1289 = vsel %vm985, %v1284, 0
        %1291 = vmatprep.subr.bf16.mxu0 0
        %1292 = vmatpush1.bf16.xpose.msra.mxu0 %v1289
        %1293 = vmatprep.subr.bf16.mxu0 0
        %1294 = vmatpush1.bf16.xpose.msra.mxu0 0
        %1295 = vmatprep.subr.bf16.mxu0 0
        %1296 = vmatpush1.bf16.xpose.msra.mxu0 0
        %1297 = vmatprep.subr.bf16.mxu0 0
        %1298 = vmatpush1.bf16.xpose.msra.mxu0 0
        %1299 = vmatprep.subr.bf16.mxu0 0
        %1300 = vmatpush1.bf16.xpose.msra.mxu0 0
        %1301 = vmatprep.subr.bf16.mxu0 0
        %1302 = vmatpush1.bf16.xpose.msra.mxu0 0
        %1303 = vmatprep.subr.bf16.mxu0 0
        %1304 = vmatpush1.bf16.xpose.msra.mxu0 0
        %1305 = vmatprep.subr.bf16.mxu0 0
        %1306 = vmatpush1.bf16.xpose.msra.mxu0 0
        %1307 = vmatprep.subr.bf16.mxu0 0
        %1308 = vmatpush1.bf16.xpose.msra.mxu0 0
        %1309 = vmatprep.subr.bf16.mxu0 0
        %1310 = vmatpush1.bf16.xpose.msra.mxu0 0
        %1311 = vmatprep.subr.bf16.mxu0 0
        %1312 = vmatpush1.bf16.xpose.msra.mxu0 0
        %1313 = vmatprep.subr.bf16.mxu0 0
        %1314 = vmatpush1.bf16.xpose.msra.mxu0 0
        %1315 = vmatprep.subr.bf16.mxu0 0
        %1316 = vmatpush1.bf16.xpose.msra.mxu0 0
        %1317 = vmatprep.subr.bf16.mxu0 0
        %1318 = vmatpush1.bf16.xpose.msra.mxu0 0
        %1319 = vmatprep.subr.bf16.mxu0 0
        %1320 = vmatpush1.bf16.xpose.msra.mxu0 0
        %1321 = vmatprep.subr.bf16.mxu0 0
        %1322 = vmatpush1.bf16.xpose.msra.mxu0 0
        %1323 = vmatprep.mubr.bf16.mxu0 0
        %1324 = vmatmul.mubr.bf16.gmra.mrb[0].mxu0 %v1286
        %v1325 = vpop.f32.mrb[0].mxu0
        %v1326 = vadd.f32 0.0, %v1325
        %v1327 = vpop.f32.mrb[0].mxu0
        %v1328 = vpop.f32.mrb[0].mxu0
        %v1329 = vpop.f32.mrb[0].mxu0
        %1330 = vdwg.mxu0
        %v1331 = vsel %vm1032, %v1326, -inf
        %1332 = vmax.xlane.f32.xlu0 %v1331
        %v1333 = vpop.xlane.xlu0 %1332
        %v1334 = vsub.f32 %v1326, %v1333
        %v1335 = vmul.f32 %v1334, 1.442695
        %v1336 = vpow.pop %v1335
        %v1337 = vsel %vm1032, %v1336, 0.0
        %1338 = vadd.xlane.f32.xlu0 %v1337
        %v1339 = vpop.xlane.xlu0 %1338
        %v1340 = vrcp.pop %v1339
        %v1341 = vmul.f32 %v1336, %v1340
        %v1342 = vpack.c.bf16 %v1341, %v1341
        %v1343 = vpack.c.bf16 %v1278, %v1278
        %v1345 = vsel %vm1032, %v1342, 0
        %v1348 = vsel %vm1049, %v1343, 0
        %1350 = vmatprep.subr.bf16.mxu0 0
        %1351 = vmatpush1.bf16.msra.mxu0 %v1348
        %1352 = vmatprep.subr.bf16.mxu0 0
        %1353 = vmatpush1.bf16.msra.mxu0 0
        %1354 = vmatprep.subr.bf16.mxu0 0
        %1355 = vmatpush1.bf16.msra.mxu0 0
        %1356 = vmatprep.subr.bf16.mxu0 0
        %1357 = vmatpush1.bf16.msra.mxu0 0
        %1358 = vmatprep.subr.bf16.mxu0 0
        %1359 = vmatpush1.bf16.msra.mxu0 0
        %1360 = vmatprep.subr.bf16.mxu0 0
        %1361 = vmatpush1.bf16.msra.mxu0 0
        %1362 = vmatprep.subr.bf16.mxu0 0
        %1363 = vmatpush1.bf16.msra.mxu0 0
        %1364 = vmatprep.subr.bf16.mxu0 0
        %1365 = vmatpush1.bf16.msra.mxu0 0
        %1366 = vmatprep.subr.bf16.mxu0 0
        %1367 = vmatpush1.bf16.msra.mxu0 0
        %1368 = vmatprep.subr.bf16.mxu0 0
        %1369 = vmatpush1.bf16.msra.mxu0 0
        %1370 = vmatprep.subr.bf16.mxu0 0
        %1371 = vmatpush1.bf16.msra.mxu0 0
        %1372 = vmatprep.subr.bf16.mxu0 0
        %1373 = vmatpush1.bf16.msra.mxu0 0
        %1374 = vmatprep.subr.bf16.mxu0 0
        %1375 = vmatpush1.bf16.msra.mxu0 0
        %1376 = vmatprep.subr.bf16.mxu0 0
        %1377 = vmatpush1.bf16.msra.mxu0 0
        %1378 = vmatprep.subr.bf16.mxu0 0
        %1379 = vmatpush1.bf16.msra.mxu0 0
        %1380 = vmatprep.subr.bf16.mxu0 0
        %1381 = vmatpush1.bf16.msra.mxu0 0
        %1382 = vmatprep.mubr.bf16.mxu0 0
        %1383 = vmatmul.mubr.bf16.gmra.mrb[0].mxu0 %v1345
        %v1384 = vpop.f32.mrb[0].mxu0
        %v1385 = vadd.f32 0.0, %v1384
        %v1386 = vpop.f32.mrb[0].mxu0
        %v1387 = vpop.f32.mrb[0].mxu0
        %v1388 = vpop.f32.mrb[0].mxu0
        %1389 = vdwg.mxu0
        %v1390 = vpack.c.bf16 %v1385, %v1385
        %s1391 = scalar_lea.vmem %s5, 8
        %v1392 = vld [vmem:[%s1391] sm:$0xf]
        %v1393 = vld [vmem:[%s1391 + $0x4] sm:$0xf]
        %v1396 = vunpack.c.l.b16 %v1392
        %v1397 = vunpack.c.l.b16 %v1393
        %v1398 = vpack.c.b16 %v1397, %v1396
        %v1401 = vsel %vm985, %v1390, 0
        %1403 = vmatprep.subr.bf16.mxu0 0
        %1404 = vmatpush1.bf16.msra.mxu0 %v1398
        %1405 = vmatprep.subr.bf16.mxu0 0
        %1406 = vmatpush1.bf16.msra.mxu0 0
        %1407 = vmatprep.subr.bf16.mxu0 0
        %1408 = vmatpush1.bf16.msra.mxu0 0
        %1409 = vmatprep.subr.bf16.mxu0 0
        %1410 = vmatpush1.bf16.msra.mxu0 0
        %1411 = vmatprep.subr.bf16.mxu0 0
        %1412 = vmatpush1.bf16.msra.mxu0 0
        %1413 = vmatprep.subr.bf16.mxu0 0
        %1414 = vmatpush1.bf16.msra.mxu0 0
        %1415 = vmatprep.subr.bf16.mxu0 0
        %1416 = vmatpush1.bf16.msra.mxu0 0
        %1417 = vmatprep.subr.bf16.mxu0 0
        %1418 = vmatpush1.bf16.msra.mxu0 0
        %1419 = vmatprep.subr.bf16.mxu0 0
        %1420 = vmatpush1.bf16.msra.mxu0 0
        %1421 = vmatprep.subr.bf16.mxu0 0
        %1422 = vmatpush1.bf16.msra.mxu0 0
        %1423 = vmatprep.subr.bf16.mxu0 0
        %1424 = vmatpush1.bf16.msra.mxu0 0
        %1425 = vmatprep.subr.bf16.mxu0 0
        %1426 = vmatpush1.bf16.msra.mxu0 0
        %1427 = vmatprep.subr.bf16.mxu0 0
        %1428 = vmatpush1.bf16.msra.mxu0 0
        %1429 = vmatprep.subr.bf16.mxu0 0
        %1430 = vmatpush1.bf16.msra.mxu0 0
        %1431 = vmatprep.subr.bf16.mxu0 0
        %1432 = vmatpush1.bf16.msra.mxu0 0
        %1433 = vmatprep.subr.bf16.mxu0 0
        %1434 = vmatpush1.bf16.msra.mxu0 0
        %1435 = vmatprep.mubr.bf16.mxu0 0
        %1436 = vmatmul.mubr.bf16.gmra.mrb[0].mxu0 %v1401
        %v1437 = vpop.f32.mrb[0].mxu0
        %v1438 = vadd.f32 0.0, %v1437
        %v1439 = vpop.f32.mrb[0].mxu0
        %v1440 = vpop.f32.mrb[0].mxu0
        %v1441 = vpop.f32.mrb[0].mxu0
        %1442 = vdwg.mxu0
        %v1445 = vunpack.c.l.b16 %v1094
        %v1446 = vunpack.c.l.b16 %v1095
        %v1447 = vpack.c.b16 %v1446, %v1445
        %v1450 = vsel %vm985, %v1093, 0
        %1452 = vmatprep.subr.bf16.mxu0 0
        %1453 = vmatpush1.bf16.msra.mxu0 %v1447
        %1454 = vmatprep.subr.bf16.mxu0 0
        %1455 = vmatpush1.bf16.msra.mxu0 0
        %1456 = vmatprep.subr.bf16.mxu0 0
        %1457 = vmatpush1.bf16.msra.mxu0 0
        %1458 = vmatprep.subr.bf16.mxu0 0
        %1459 = vmatpush1.bf16.msra.mxu0 0
        %1460 = vmatprep.subr.bf16.mxu0 0
        %1461 = vmatpush1.bf16.msra.mxu0 0
        %1462 = vmatprep.subr.bf16.mxu0 0
        %1463 = vmatpush1.bf16.msra.mxu0 0
        %1464 = vmatprep.subr.bf16.mxu0 0
        %1465 = vmatpush1.bf16.msra.mxu0 0
        %1466 = vmatprep.subr.bf16.mxu0 0
        %1467 = vmatpush1.bf16.msra.mxu0 0
        %1468 = vmatprep.subr.bf16.mxu0 0
        %1469 = vmatpush1.bf16.msra.mxu0 0
        %1470 = vmatprep.subr.bf16.mxu0 0
        %1471 = vmatpush1.bf16.msra.mxu0 0
        %1472 = vmatprep.subr.bf16.mxu0 0
        %1473 = vmatpush1.bf16.msra.mxu0 0
        %1474 = vmatprep.subr.bf16.mxu0 0
        %1475 = vmatpush1.bf16.msra.mxu0 0
        %1476 = vmatprep.subr.bf16.mxu0 0
        %1477 = vmatpush1.bf16.msra.mxu0 0
        %1478 = vmatprep.subr.bf16.mxu0 0
        %1479 = vmatpush1.bf16.msra.mxu0 0
        %1480 = vmatprep.subr.bf16.mxu0 0
        %1481 = vmatpush1.bf16.msra.mxu0 0
        %1482 = vmatprep.subr.bf16.mxu0 0
        %1483 = vmatpush1.bf16.msra.mxu0 0
        %1484 = vmatprep.mubr.bf16.mxu0 0
        %1485 = vmatmul.mubr.bf16.gmra.mrb[0].mxu0 %v1450
        %v1486 = vpop.f32.mrb[0].mxu0
        %v1487 = vadd.f32 %v1438, %v1486
        %v1488 = vpop.f32.mrb[0].mxu0
        %v1489 = vpop.f32.mrb[0].mxu0
        %v1490 = vpop.f32.mrb[0].mxu0
        %1491 = vdwg.mxu0
        %v1492 = vld [vmem:[%s8 + $0x6] sm:$0x1]
        %v1493 = vlaneseq
        %v1494 = vshrl.u32 %v1493, 7
        %v1495 = vsub.s32 0, %v1494
        %v1496 = vrot.slane %v1492, %v1495
        %v1497 = vadd.f32 %v1487, %v1496
        %v1498 = vlaneseq
        %v1499 = vshrl.u32 %v1498, 7
        %v1500 = vsub.s32 0, %v1499
        %v1501 = vrot.slane %v589, %v1500
        %v1502 = vmul.f32 %v1501, %v1497
        %v1503 = vadd.f32 %v403, %v1502
        %v1504 = vpack.c.bf16 %v1503, %v1503
        %s1505 = scalar_lea.vmem %s4, 96
        %v1506 = vld [vmem:[%s1505] sm:$0xf]
        %v1507 = vld [vmem:[%s1505 + $0x4] sm:$0xf]
        %v1508 = vld [vmem:[%s1505 + $0x8] sm:$0xf]
        %v1509 = vld [vmem:[%s1505 + $0xc] sm:$0xf]
        %v1510 = vld [vmem:[%s9 + $0x6] sm:$0x1]
        %v1511 = vlaneseq
        %v1512 = vshrl.u32 %v1511, 7
        %v1513 = vsub.s32 0, %v1512
        %v1514 = vrot.slane %v1510, %v1513
        %v1519 = vunpack.c.l.b16 %v1506
        %v1520 = vunpack.c.l.b16 %v1507
        %v1521 = vunpack.c.l.b16 %v1508
        %v1522 = vunpack.c.l.b16 %v1509
        %v1523 = vpack.c.b16 %v1520, %v1519
        %v1524 = vpack.c.b16 %v1522, %v1521
        %v1528 = vsel %vm434, %v1504, 0
        %1530 = vmatprep.subr.bf16.mxu0 0
        %1531 = vmatpush1.bf16.msra.mxu0 %v1523
        %1532 = vmatprep.subr.bf16.mxu0 0
        %1533 = vmatpush1.bf16.msra.mxu0 %v1524
        %1534 = vmatprep.subr.bf16.mxu0 0
        %1535 = vmatpush1.bf16.msra.mxu0 0
        %1536 = vmatprep.subr.bf16.mxu0 0
        %1537 = vmatpush1.bf16.msra.mxu0 0
        %1538 = vmatprep.subr.bf16.mxu0 0
        %1539 = vmatpush1.bf16.msra.mxu0 0
        %1540 = vmatprep.subr.bf16.mxu0 0
        %1541 = vmatpush1.bf16.msra.mxu0 0
        %1542 = vmatprep.subr.bf16.mxu0 0
        %1543 = vmatpush1.bf16.msra.mxu0 0
        %1544 = vmatprep.subr.bf16.mxu0 0
        %1545 = vmatpush1.bf16.msra.mxu0 0
        %1546 = vmatprep.subr.bf16.mxu0 0
        %1547 = vmatpush1.bf16.msra.mxu0 0
        %1548 = vmatprep.subr.bf16.mxu0 0
        %1549 = vmatpush1.bf16.msra.mxu0 0
        %1550 = vmatprep.subr.bf16.mxu0 0
        %1551 = vmatpush1.bf16.msra.mxu0 0
        %1552 = vmatprep.subr.bf16.mxu0 0
        %1553 = vmatpush1.bf16.msra.mxu0 0
        %1554 = vmatprep.subr.bf16.mxu0 0
        %1555 = vmatpush1.bf16.msra.mxu0 0
        %1556 = vmatprep.subr.bf16.mxu0 0
        %1557 = vmatpush1.bf16.msra.mxu0 0
        %1558 = vmatprep.subr.bf16.mxu0 0
        %1559 = vmatpush1.bf16.msra.mxu0 0
        %1560 = vmatprep.subr.bf16.mxu0 0
        %1561 = vmatpush1.bf16.msra.mxu0 0
        %1562 = vmatprep.mubr.bf16.mxu0 0
        %1563 = vmatmul.mubr.bf16.gmra.mrb[0].mxu0 %v1528
        %v1564 = vpop.f32.mrb[0].mxu0
        %v1565 = vadd.f32 %v1514, %v1564
        %v1566 = vpop.f32.mrb[0].mxu0
        %v1567 = vpop.f32.mrb[0].mxu0
        %v1568 = vpop.f32.mrb[0].mxu0
        %1569 = vdwg.mxu0
        %v1570 = vmul.f32 %v1565, 0.25
        %s1571 = scalar_lea.vmem %s4, 128
        %v1572 = vld [vmem:[%s1571] sm:$0xf]
        %v1573 = vld [vmem:[%s1571 + $0x4] sm:$0xf]
        %v1574 = vld [vmem:[%s1571 + $0x8] sm:$0xf]
        %v1575 = vld [vmem:[%s1571 + $0xc] sm:$0xf]
        %v1576 = vld [vmem:[%s9 + $0x8] sm:$0x1]
        %v1577 = vlaneseq
        %v1578 = vshrl.u32 %v1577, 7
        %v1579 = vsub.s32 0, %v1578
        %v1580 = vrot.slane %v1576, %v1579
        %v1585 = vunpack.c.l.b16 %v1572
        %v1586 = vunpack.c.l.b16 %v1573
        %v1587 = vunpack.c.l.b16 %v1574
        %v1588 = vunpack.c.l.b16 %v1575
        %v1589 = vpack.c.b16 %v1586, %v1585
        %v1590 = vpack.c.b16 %v1588, %v1587
        %v1594 = vsel %vm434, %v406, 0
        %1596 = vmatprep.subr.bf16.mxu0 0
        %1597 = vmatpush1.bf16.msra.mxu0 %v1589
        %1598 = vmatprep.subr.bf16.mxu0 0
        %1599 = vmatpush1.bf16.msra.mxu0 %v1590
        %1600 = vmatprep.subr.bf16.mxu0 0
        %1601 = vmatpush1.bf16.msra.mxu0 0
        %1602 = vmatprep.subr.bf16.mxu0 0
        %1603 = vmatpush1.bf16.msra.mxu0 0
        %1604 = vmatprep.subr.bf16.mxu0 0
        %1605 = vmatpush1.bf16.msra.mxu0 0
        %1606 = vmatprep.subr.bf16.mxu0 0
        %1607 = vmatpush1.bf16.msra.mxu0 0
        %1608 = vmatprep.subr.bf16.mxu0 0
        %1609 = vmatpush1.bf16.msra.mxu0 0
        %1610 = vmatprep.subr.bf16.mxu0 0
        %1611 = vmatpush1.bf16.msra.mxu0 0
        %1612 = vmatprep.subr.bf16.mxu0 0
        %1613 = vmatpush1.bf16.msra.mxu0 0
        %1614 = vmatprep.subr.bf16.mxu0 0
        %1615 = vmatpush1.bf16.msra.mxu0 0
        %1616 = vmatprep.subr.bf16.mxu0 0
        %1617 = vmatpush1.bf16.msra.mxu0 0
        %1618 = vmatprep.subr.bf16.mxu0 0
        %1619 = vmatpush1.bf16.msra.mxu0 0
        %1620 = vmatprep.subr.bf16.mxu0 0
        %1621 = vmatpush1.bf16.msra.mxu0 0
        %1622 = vmatprep.subr.bf16.mxu0 0
        %1623 = vmatpush1.bf16.msra.mxu0 0
        %1624 = vmatprep.subr.bf16.mxu0 0
        %1625 = vmatpush1.bf16.msra.mxu0 0
        %1626 = vmatprep.subr.bf16.mxu0 0
        %1627 = vmatpush1.bf16.msra.mxu0 0
        %1628 = vmatprep.mubr.bf16.mxu0 0
        %1629 = vmatmul.mubr.bf16.gmra.mrb[0].mxu0 %v1594
        %v1630 = vpop.f32.mrb[0].mxu0
        %v1631 = vadd.f32 %v1580, %v1630
        %v1632 = vpop.f32.mrb[0].mxu0
        %v1633 = vpop.f32.mrb[0].mxu0
        %v1634 = vadd.f32 %v1580, %v1633
        %v1635 = vpop.f32.mrb[0].mxu0
        %1636 = vdwg.mxu0
        %s1637 = scalar_lea.vmem %s4, 160
        %v1638 = vld [vmem:[%s1637] sm:$0xf]
        %v1639 = vld [vmem:[%s1637 + $0x4] sm:$0xf]
        %v1640 = vld [vmem:[%s1637 + $0x8] sm:$0xf]
        %v1641 = vld [vmem:[%s1637 + $0xc] sm:$0xf]
        %v1642 = vld [vmem:[%s9 + $0xa] sm:$0x1]
        %v1643 = vlaneseq
        %v1644 = vshrl.u32 %v1643, 7
        %v1645 = vsub.s32 0, %v1644
        %v1646 = vrot.slane %v1642, %v1645
        %v1651 = vunpack.c.l.b16 %v1638
        %v1652 = vunpack.c.l.b16 %v1639
        %v1653 = vunpack.c.l.b16 %v1640
        %v1654 = vunpack.c.l.b16 %v1641
        %v1655 = vpack.c.b16 %v1652, %v1651
        %v1656 = vpack.c.b16 %v1654, %v1653
        %1659 = vmatprep.subr.bf16.mxu0 0
        %1660 = vmatpush1.bf16.msra.mxu0 %v1655
        %1661 = vmatprep.subr.bf16.mxu0 0
        %1662 = vmatpush1.bf16.msra.mxu0 %v1656
        %1663 = vmatprep.subr.bf16.mxu0 0
        %1664 = vmatpush1.bf16.msra.mxu0 0
        %1665 = vmatprep.subr.bf16.mxu0 0
        %1666 = vmatpush1.bf16.msra.mxu0 0
        %1667 = vmatprep.subr.bf16.mxu0 0
        %1668 = vmatpush1.bf16.msra.mxu0 0
        %1669 = vmatprep.subr.bf16.mxu0 0
        %1670 = vmatpush1.bf16.msra.mxu0 0
        %1671 = vmatprep.subr.bf16.mxu0 0
        %1672 = vmatpush1.bf16.msra.mxu0 0
        %1673 = vmatprep.subr.bf16.mxu0 0
        %1674 = vmatpush1.bf16.msra.mxu0 0
        %1675 = vmatprep.subr.bf16.mxu0 0
        %1676 = vmatpush1.bf16.msra.mxu0 0
        %1677 = vmatprep.subr.bf16.mxu0 0
        %1678 = vmatpush1.bf16.msra.mxu0 0
        %1679 = vmatprep.subr.bf16.mxu0 0
        %1680 = vmatpush1.bf16.msra.mxu0 0
        %1681 = vmatprep.subr.bf16.mxu0 0
        %1682 = vmatpush1.bf16.msra.mxu0 0
        %1683 = vmatprep.subr.bf16.mxu0 0
        %1684 = vmatpush1.bf16.msra.mxu0 0
        %1685 = vmatprep.subr.bf16.mxu0 0
        %1686 = vmatpush1.bf16.msra.mxu0 0
        %1687 = vmatprep.subr.bf16.mxu0 0
        %1688 = vmatpush1.bf16.msra.mxu0 0
        %1689 = vmatprep.subr.bf16.mxu0 0
        %1690 = vmatpush1.bf16.msra.mxu0 0
        %1691 = vmatprep.mubr.bf16.mxu0 0
        %1692 = vmatmul.mubr.bf16.gmra.mrb[0].mxu0 %v1594
        %v1693 = vpop.f32.mrb[0].mxu0
        %v1694 = vadd.f32 %v1646, %v1693
        %v1695 = vpop.f32.mrb[0].mxu0
        %v1696 = vpop.f32.mrb[0].mxu0
        %v1697 = vadd.f32 %v1646, %v1696
        %v1698 = vpop.f32.mrb[0].mxu0
        %1699 = vdwg.mxu0
        %v1700 = vpack.c.bf16 %v1570, %v1570
        %v1701 = vpack.c.bf16 %v1634, %v1631
        %v1703 = vsel %vm985, %v1700, 0
        %v1706 = vsel %vm985, %v1701, 0
        %1708 = vmatprep.subr.bf16.mxu0 0
        %1709 = vmatpush1.bf16.xpose.msra.mxu0 %v1706
        %1710 = vmatprep.subr.bf16.mxu0 0
        %1711 = vmatpush1.bf16.xpose.msra.mxu0 0
        %1712 = vmatprep.subr.bf16.mxu0 0
        %1713 = vmatpush1.bf16.xpose.msra.mxu0 0
        %1714 = vmatprep.subr.bf16.mxu0 0
        %1715 = vmatpush1.bf16.xpose.msra.mxu0 0
        %1716 = vmatprep.subr.bf16.mxu0 0
        %1717 = vmatpush1.bf16.xpose.msra.mxu0 0
        %1718 = vmatprep.subr.bf16.mxu0 0
        %1719 = vmatpush1.bf16.xpose.msra.mxu0 0
        %1720 = vmatprep.subr.bf16.mxu0 0
        %1721 = vmatpush1.bf16.xpose.msra.mxu0 0
        %1722 = vmatprep.subr.bf16.mxu0 0
        %1723 = vmatpush1.bf16.xpose.msra.mxu0 0
        %1724 = vmatprep.subr.bf16.mxu0 0
        %1725 = vmatpush1.bf16.xpose.msra.mxu0 0
        %1726 = vmatprep.subr.bf16.mxu0 0
        %1727 = vmatpush1.bf16.xpose.msra.mxu0 0
        %1728 = vmatprep.subr.bf16.mxu0 0
        %1729 = vmatpush1.bf16.xpose.msra.mxu0 0
        %1730 = vmatprep.subr.bf16.mxu0 0
        %1731 = vmatpush1.bf16.xpose.msra.mxu0 0
        %1732 = vmatprep.subr.bf16.mxu0 0
        %1733 = vmatpush1.bf16.xpose.msra.mxu0 0
        %1734 = vmatprep.subr.bf16.mxu0 0
        %1735 = vmatpush1.bf16.xpose.msra.mxu0 0
        %1736 = vmatprep.subr.bf16.mxu0 0
        %1737 = vmatpush1.bf16.xpose.msra.mxu0 0
        %1738 = vmatprep.subr.bf16.mxu0 0
        %1739 = vmatpush1.bf16.xpose.msra.mxu0 0
        %1740 = vmatprep.mubr.bf16.mxu0 0
        %1741 = vmatmul.mubr.bf16.gmra.mrb[0].mxu0 %v1703
        %v1742 = vpop.f32.mrb[0].mxu0
        %v1743 = vadd.f32 0.0, %v1742
        %v1744 = vpop.f32.mrb[0].mxu0
        %v1745 = vpop.f32.mrb[0].mxu0
        %v1746 = vpop.f32.mrb[0].mxu0
        %1747 = vdwg.mxu0
        %v1748 = vsel %vm985, %v1743, -inf
        %1749 = vmax.xlane.f32.xlu0 %v1748
        %v1750 = vpop.xlane.xlu0 %1749
        %v1751 = vsub.f32 %v1743, %v1750
        %v1752 = vmul.f32 %v1751, 1.442695
        %v1753 = vpow.pop %v1752
        %v1754 = vsel %vm985, %v1753, 0.0
        %1755 = vadd.xlane.f32.xlu0 %v1754
        %v1756 = vpop.xlane.xlu0 %1755
        %v1757 = vrcp.pop %v1756
        %v1758 = vmul.f32 %v1753, %v1757
        %v1759 = vpack.c.bf16 %v1758, %v1758
        %v1760 = vpack.c.bf16 %v1697, %v1694
        %v1762 = vsel %vm985, %v1759, 0
        %1764 = vmatprep.subr.bf16.mxu0 0
        %1765 = vmatpush1.bf16.msra.mxu0 %v1760
        %1766 = vmatprep.subr.bf16.mxu0 0
        %1767 = vmatpush1.bf16.msra.mxu0 0
        %1768 = vmatprep.subr.bf16.mxu0 0
        %1769 = vmatpush1.bf16.msra.mxu0 0
        %1770 = vmatprep.subr.bf16.mxu0 0
        %1771 = vmatpush1.bf16.msra.mxu0 0
        %1772 = vmatprep.subr.bf16.mxu0 0
        %1773 = vmatpush1.bf16.msra.mxu0 0
        %1774 = vmatprep.subr.bf16.mxu0 0
        %1775 = vmatpush1.bf16.msra.mxu0 0
        %1776 = vmatprep.subr.bf16.mxu0 0
        %1777 = vmatpush1.bf16.msra.mxu0 0
        %1778 = vmatprep.subr.bf16.mxu0 0
        %1779 = vmatpush1.bf16.msra.mxu0 0
        %1780 = vmatprep.subr.bf16.mxu0 0
        %1781 = vmatpush1.bf16.msra.mxu0 0
        %1782 = vmatprep.subr.bf16.mxu0 0
        %1783 = vmatpush1.bf16.msra.mxu0 0
        %1784 = vmatprep.subr.bf16.mxu0 0
        %1785 = vmatpush1.bf16.msra.mxu0 0
        %1786 = vmatprep.subr.bf16.mxu0 0
        %1787 = vmatpush1.bf16.msra.mxu0 0
        %1788 = vmatprep.subr.bf16.mxu0 0
        %1789 = vmatpush1.bf16.msra.mxu0 0
        %1790 = vmatprep.subr.bf16.mxu0 0
        %1791 = vmatpush1.bf16.msra.mxu0 0
        %1792 = vmatprep.subr.bf16.mxu0 0
        %1793 = vmatpush1.bf16.msra.mxu0 0
        %1794 = vmatprep.subr.bf16.mxu0 0
        %1795 = vmatpush1.bf16.msra.mxu0 0
        %1796 = vmatprep.mubr.bf16.mxu0 0
        %1797 = vmatmul.mubr.bf16.gmra.mrb[0].mxu0 %v1762
        %v1798 = vpop.f32.mrb[0].mxu0
        %v1799 = vadd.f32 0.0, %v1798
        %v1800 = vpop.f32.mrb[0].mxu0
        %v1801 = vpop.f32.mrb[0].mxu0
        %v1802 = vpop.f32.mrb[0].mxu0
        %1803 = vdwg.mxu0
        %v1804 = vpack.c.bf16 %v1799, %v1799
        %s1805 = scalar_lea.vmem %s5, 16
        %v1806 = vld [vmem:[%s1805] sm:$0xf]
        %v1807 = vld [vmem:[%s1805 + $0x4] sm:$0xf]
        %s1808 = scalar_lea.vmem %s4, 112
        %v1809 = vld [vmem:[%s1808] sm:$0xf]
        %v1810 = vld [vmem:[%s1808 + $0x4] sm:$0xf]
        %v1811 = vld [vmem:[%s1808 + $0x8] sm:$0xf]
        %v1812 = vld [vmem:[%s1808 + $0xc] sm:$0xf]
        %v1813 = vld [vmem:[%s9 + $0x7] sm:$0x1]
        %v1814 = vlaneseq
        %v1815 = vshrl.u32 %v1814, 7
        %v1816 = vsub.s32 0, %v1815
        %v1817 = vrot.slane %v1813, %v1816
        %v1822 = vunpack.c.l.b16 %v1809
        %v1823 = vunpack.c.l.b16 %v1810
        %v1824 = vunpack.c.l.b16 %v1811
        %v1825 = vunpack.c.l.b16 %v1812
        %v1826 = vpack.c.b16 %v1823, %v1822
        %v1827 = vpack.c.b16 %v1825, %v1824
        %1830 = vmatprep.subr.bf16.mxu0 0
        %1831 = vmatpush1.bf16.msra.mxu0 %v1826
        %1832 = vmatprep.subr.bf16.mxu0 0
        %1833 = vmatpush1.bf16.msra.mxu0 %v1827
        %1834 = vmatprep.subr.bf16.mxu0 0
        %1835 = vmatpush1.bf16.msra.mxu0 0
        %1836 = vmatprep.subr.bf16.mxu0 0
        %1837 = vmatpush1.bf16.msra.mxu0 0
        %1838 = vmatprep.subr.bf16.mxu0 0
        %1839 = vmatpush1.bf16.msra.mxu0 0
        %1840 = vmatprep.subr.bf16.mxu0 0
        %1841 = vmatpush1.bf16.msra.mxu0 0
        %1842 = vmatprep.subr.bf16.mxu0 0
        %1843 = vmatpush1.bf16.msra.mxu0 0
        %1844 = vmatprep.subr.bf16.mxu0 0
        %1845 = vmatpush1.bf16.msra.mxu0 0
        %1846 = vmatprep.subr.bf16.mxu0 0
        %1847 = vmatpush1.bf16.msra.mxu0 0
        %1848 = vmatprep.subr.bf16.mxu0 0
        %1849 = vmatpush1.bf16.msra.mxu0 0
        %1850 = vmatprep.subr.bf16.mxu0 0
        %1851 = vmatpush1.bf16.msra.mxu0 0
        %1852 = vmatprep.subr.bf16.mxu0 0
        %1853 = vmatpush1.bf16.msra.mxu0 0
        %1854 = vmatprep.subr.bf16.mxu0 0
        %1855 = vmatpush1.bf16.msra.mxu0 0
        %1856 = vmatprep.subr.bf16.mxu0 0
        %1857 = vmatpush1.bf16.msra.mxu0 0
        %1858 = vmatprep.subr.bf16.mxu0 0
        %1859 = vmatpush1.bf16.msra.mxu0 0
        %1860 = vmatprep.subr.bf16.mxu0 0
        %1861 = vmatpush1.bf16.msra.mxu0 0
        %1862 = vmatprep.mubr.bf16.mxu0 0
        %1863 = vmatmul.mubr.bf16.gmra.mrb[0].mxu0 %v1528
        %v1864 = vpop.f32.mrb[0].mxu0
        %v1865 = vadd.f32 %v1817, %v1864
        %v1866 = vpop.f32.mrb[0].mxu0
        %v1867 = vpop.f32.mrb[0].mxu0
        %v1868 = vpop.f32.mrb[0].mxu0
        %1869 = vdwg.mxu0
        %v1870 = vmul.f32 %v1865, 0.25
        %s1871 = scalar_lea.vmem %s4, 144
        %v1872 = vld [vmem:[%s1871] sm:$0xf]
        %v1873 = vld [vmem:[%s1871 + $0x4] sm:$0xf]
        %v1874 = vld [vmem:[%s1871 + $0x8] sm:$0xf]
        %v1875 = vld [vmem:[%s1871 + $0xc] sm:$0xf]
        %v1876 = vld [vmem:[%s9 + $0x9] sm:$0x1]
        %v1877 = vlaneseq
        %v1878 = vshrl.u32 %v1877, 7
        %v1879 = vsub.s32 0, %v1878
        %v1880 = vrot.slane %v1876, %v1879
        %v1885 = vunpack.c.l.b16 %v1872
        %v1886 = vunpack.c.l.b16 %v1873
        %v1887 = vunpack.c.l.b16 %v1874
        %v1888 = vunpack.c.l.b16 %v1875
        %v1889 = vpack.c.b16 %v1886, %v1885
        %v1890 = vpack.c.b16 %v1888, %v1887
        %1893 = vmatprep.subr.bf16.mxu0 0
        %1894 = vmatpush1.bf16.msra.mxu0 %v1889
        %1895 = vmatprep.subr.bf16.mxu0 0
        %1896 = vmatpush1.bf16.msra.mxu0 %v1890
        %1897 = vmatprep.subr.bf16.mxu0 0
        %1898 = vmatpush1.bf16.msra.mxu0 0
        %1899 = vmatprep.subr.bf16.mxu0 0
        %1900 = vmatpush1.bf16.msra.mxu0 0
        %1901 = vmatprep.subr.bf16.mxu0 0
        %1902 = vmatpush1.bf16.msra.mxu0 0
        %1903 = vmatprep.subr.bf16.mxu0 0
        %1904 = vmatpush1.bf16.msra.mxu0 0
        %1905 = vmatprep.subr.bf16.mxu0 0
        %1906 = vmatpush1.bf16.msra.mxu0 0
        %1907 = vmatprep.subr.bf16.mxu0 0
        %1908 = vmatpush1.bf16.msra.mxu0 0
        %1909 = vmatprep.subr.bf16.mxu0 0
        %1910 = vmatpush1.bf16.msra.mxu0 0
        %1911 = vmatprep.subr.bf16.mxu0 0
        %1912 = vmatpush1.bf16.msra.mxu0 0
        %1913 = vmatprep.subr.bf16.mxu0 0
        %1914 = vmatpush1.bf16.msra.mxu0 0
        %1915 = vmatprep.subr.bf16.mxu0 0
        %1916 = vmatpush1.bf16.msra.mxu0 0
        %1917 = vmatprep.subr.bf16.mxu0 0
        %1918 = vmatpush1.bf16.msra.mxu0 0
        %1919 = vmatprep.subr.bf16.mxu0 0
        %1920 = vmatpush1.bf16.msra.mxu0 0
        %1921 = vmatprep.subr.bf16.mxu0 0
        %1922 = vmatpush1.bf16.msra.mxu0 0
        %1923 = vmatprep.subr.bf16.mxu0 0
        %1924 = vmatpush1.bf16.msra.mxu0 0
        %1925 = vmatprep.mubr.bf16.mxu0 0
        %1926 = vmatmul.mubr.bf16.gmra.mrb[0].mxu0 %v1594
        %v1927 = vpop.f32.mrb[0].mxu0
        %v1928 = vadd.f32 %v1880, %v1927
        %v1929 = vpop.f32.mrb[0].mxu0
        %v1930 = vpop.f32.mrb[0].mxu0
        %v1931 = vadd.f32 %v1880, %v1930
        %v1932 = vpop.f32.mrb[0].mxu0
        %1933 = vdwg.mxu0
        %s1934 = scalar_lea.vmem %s4, 176
        %v1935 = vld [vmem:[%s1934] sm:$0xf]
        %v1936 = vld [vmem:[%s1934 + $0x4] sm:$0xf]
        %v1937 = vld [vmem:[%s1934 + $0x8] sm:$0xf]
        %v1938 = vld [vmem:[%s1934 + $0xc] sm:$0xf]
        %v1939 = vld [vmem:[%s9 + $0xb] sm:$0x1]
        %v1940 = vlaneseq
        %v1941 = vshrl.u32 %v1940, 7
        %v1942 = vsub.s32 0, %v1941
        %v1943 = vrot.slane %v1939, %v1942
        %v1948 = vunpack.c.l.b16 %v1935
        %v1949 = vunpack.c.l.b16 %v1936
        %v1950 = vunpack.c.l.b16 %v1937
        %v1951 = vunpack.c.l.b16 %v1938
        %v1952 = vpack.c.b16 %v1949, %v1948
        %v1953 = vpack.c.b16 %v1951, %v1950
        %1956 = vmatprep.subr.bf16.mxu0 0
        %1957 = vmatpush1.bf16.msra.mxu0 %v1952
        %1958 = vmatprep.subr.bf16.mxu0 0
        %1959 = vmatpush1.bf16.msra.mxu0 %v1953
        %1960 = vmatprep.subr.bf16.mxu0 0
        %1961 = vmatpush1.bf16.msra.mxu0 0
        %1962 = vmatprep.subr.bf16.mxu0 0
        %1963 = vmatpush1.bf16.msra.mxu0 0
        %1964 = vmatprep.subr.bf16.mxu0 0
        %1965 = vmatpush1.bf16.msra.mxu0 0
        %1966 = vmatprep.subr.bf16.mxu0 0
        %1967 = vmatpush1.bf16.msra.mxu0 0
        %1968 = vmatprep.subr.bf16.mxu0 0
        %1969 = vmatpush1.bf16.msra.mxu0 0
        %1970 = vmatprep.subr.bf16.mxu0 0
        %1971 = vmatpush1.bf16.msra.mxu0 0
        %1972 = vmatprep.subr.bf16.mxu0 0
        %1973 = vmatpush1.bf16.msra.mxu0 0
        %1974 = vmatprep.subr.bf16.mxu0 0
        %1975 = vmatpush1.bf16.msra.mxu0 0
        %1976 = vmatprep.subr.bf16.mxu0 0
        %1977 = vmatpush1.bf16.msra.mxu0 0
        %1978 = vmatprep.subr.bf16.mxu0 0
        %1979 = vmatpush1.bf16.msra.mxu0 0
        %1980 = vmatprep.subr.bf16.mxu0 0
        %1981 = vmatpush1.bf16.msra.mxu0 0
        %1982 = vmatprep.subr.bf16.mxu0 0
        %1983 = vmatpush1.bf16.msra.mxu0 0
        %1984 = vmatprep.subr.bf16.mxu0 0
        %1985 = vmatpush1.bf16.msra.mxu0 0
        %1986 = vmatprep.subr.bf16.mxu0 0
        %1987 = vmatpush1.bf16.msra.mxu0 0
        %1988 = vmatprep.mubr.bf16.mxu0 0
        %1989 = vmatmul.mubr.bf16.gmra.mrb[0].mxu0 %v1594
        %v1990 = vpop.f32.mrb[0].mxu0
        %v1991 = vadd.f32 %v1943, %v1990
        %v1992 = vpop.f32.mrb[0].mxu0
        %v1993 = vpop.f32.mrb[0].mxu0
        %v1994 = vadd.f32 %v1943, %v1993
        %v1995 = vpop.f32.mrb[0].mxu0
        %1996 = vdwg.mxu0
        %v1997 = vpack.c.bf16 %v1870, %v1870
        %v1998 = vpack.c.bf16 %v1931, %v1928
        %v2000 = vsel %vm985, %v1997, 0
        %v2003 = vsel %vm985, %v1998, 0
        %2005 = vmatprep.subr.bf16.mxu0 0
        %2006 = vmatpush1.bf16.xpose.msra.mxu0 %v2003
        %2007 = vmatprep.subr.bf16.mxu0 0
        %2008 = vmatpush1.bf16.xpose.msra.mxu0 0
        %2009 = vmatprep.subr.bf16.mxu0 0
        %2010 = vmatpush1.bf16.xpose.msra.mxu0 0
        %2011 = vmatprep.subr.bf16.mxu0 0
        %2012 = vmatpush1.bf16.xpose.msra.mxu0 0
        %2013 = vmatprep.subr.bf16.mxu0 0
        %2014 = vmatpush1.bf16.xpose.msra.mxu0 0
        %2015 = vmatprep.subr.bf16.mxu0 0
        %2016 = vmatpush1.bf16.xpose.msra.mxu0 0
        %2017 = vmatprep.subr.bf16.mxu0 0
        %2018 = vmatpush1.bf16.xpose.msra.mxu0 0
        %2019 = vmatprep.subr.bf16.mxu0 0
        %2020 = vmatpush1.bf16.xpose.msra.mxu0 0
        %2021 = vmatprep.subr.bf16.mxu0 0
        %2022 = vmatpush1.bf16.xpose.msra.mxu0 0
        %2023 = vmatprep.subr.bf16.mxu0 0
        %2024 = vmatpush1.bf16.xpose.msra.mxu0 0
        %2025 = vmatprep.subr.bf16.mxu0 0
        %2026 = vmatpush1.bf16.xpose.msra.mxu0 0
        %2027 = vmatprep.subr.bf16.mxu0 0
        %2028 = vmatpush1.bf16.xpose.msra.mxu0 0
        %2029 = vmatprep.subr.bf16.mxu0 0
        %2030 = vmatpush1.bf16.xpose.msra.mxu0 0
        %2031 = vmatprep.subr.bf16.mxu0 0
        %2032 = vmatpush1.bf16.xpose.msra.mxu0 0
        %2033 = vmatprep.subr.bf16.mxu0 0
        %2034 = vmatpush1.bf16.xpose.msra.mxu0 0
        %2035 = vmatprep.subr.bf16.mxu0 0
        %2036 = vmatpush1.bf16.xpose.msra.mxu0 0
        %2037 = vmatprep.mubr.bf16.mxu0 0
        %2038 = vmatmul.mubr.bf16.gmra.mrb[0].mxu0 %v2000
        %v2039 = vpop.f32.mrb[0].mxu0
        %v2040 = vadd.f32 0.0, %v2039
        %v2041 = vpop.f32.mrb[0].mxu0
        %v2042 = vpop.f32.mrb[0].mxu0
        %v2043 = vpop.f32.mrb[0].mxu0
        %2044 = vdwg.mxu0
        %v2045 = vsel %vm985, %v2040, -inf
        %2046 = vmax.xlane.f32.xlu0 %v2045
        %v2047 = vpop.xlane.xlu0 %2046
        %v2048 = vsub.f32 %v2040, %v2047
        %v2049 = vmul.f32 %v2048, 1.442695
        %v2050 = vpow.pop %v2049
        %v2051 = vsel %vm985, %v2050, 0.0
        %2052 = vadd.xlane.f32.xlu0 %v2051
        %v2053 = vpop.xlane.xlu0 %2052
        %v2054 = vrcp.pop %v2053
        %v2055 = vmul.f32 %v2050, %v2054
        %v2056 = vpack.c.bf16 %v2055, %v2055
        %v2057 = vpack.c.bf16 %v1994, %v1991
        %v2059 = vsel %vm985, %v2056, 0
        %2061 = vmatprep.subr.bf16.mxu0 0
        %2062 = vmatpush1.bf16.msra.mxu0 %v2057
        %2063 = vmatprep.subr.bf16.mxu0 0
        %2064 = vmatpush1.bf16.msra.mxu0 0
        %2065 = vmatprep.subr.bf16.mxu0 0
        %2066 = vmatpush1.bf16.msra.mxu0 0
        %2067 = vmatprep.subr.bf16.mxu0 0
        %2068 = vmatpush1.bf16.msra.mxu0 0
        %2069 = vmatprep.subr.bf16.mxu0 0
        %2070 = vmatpush1.bf16.msra.mxu0 0
        %2071 = vmatprep.subr.bf16.mxu0 0
        %2072 = vmatpush1.bf16.msra.mxu0 0
        %2073 = vmatprep.subr.bf16.mxu0 0
        %2074 = vmatpush1.bf16.msra.mxu0 0
        %2075 = vmatprep.subr.bf16.mxu0 0
        %2076 = vmatpush1.bf16.msra.mxu0 0
        %2077 = vmatprep.subr.bf16.mxu0 0
        %2078 = vmatpush1.bf16.msra.mxu0 0
        %2079 = vmatprep.subr.bf16.mxu0 0
        %2080 = vmatpush1.bf16.msra.mxu0 0
        %2081 = vmatprep.subr.bf16.mxu0 0
        %2082 = vmatpush1.bf16.msra.mxu0 0
        %2083 = vmatprep.subr.bf16.mxu0 0
        %2084 = vmatpush1.bf16.msra.mxu0 0
        %2085 = vmatprep.subr.bf16.mxu0 0
        %2086 = vmatpush1.bf16.msra.mxu0 0
        %2087 = vmatprep.subr.bf16.mxu0 0
        %2088 = vmatpush1.bf16.msra.mxu0 0
        %2089 = vmatprep.subr.bf16.mxu0 0
        %2090 = vmatpush1.bf16.msra.mxu0 0
        %2091 = vmatprep.subr.bf16.mxu0 0
        %2092 = vmatpush1.bf16.msra.mxu0 0
        %2093 = vmatprep.mubr.bf16.mxu0 0
        %2094 = vmatmul.mubr.bf16.gmra.mrb[0].mxu0 %v2059
        %v2095 = vpop.f32.mrb[0].mxu0
        %v2096 = vadd.f32 0.0, %v2095
        %v2097 = vpop.f32.mrb[0].mxu0
        %v2098 = vpop.f32.mrb[0].mxu0
        %v2099 = vpop.f32.mrb[0].mxu0
        %2100 = vdwg.mxu0
        %v2101 = vpack.c.bf16 %v2096, %v2096
        %s2102 = scalar_lea.vmem %s5, 24
        %v2103 = vld [vmem:[%s2102] sm:$0xf]
        %v2104 = vld [vmem:[%s2102 + $0x4] sm:$0xf]
        %v2107 = vunpack.c.l.b16 %v2103
        %v2108 = vunpack.c.l.b16 %v2104
        %v2109 = vpack.c.b16 %v2108, %v2107
        %v2112 = vsel %vm985, %v2101, 0
        %2114 = vmatprep.subr.bf16.mxu0 0
        %2115 = vmatpush1.bf16.msra.mxu0 %v2109
        %2116 = vmatprep.subr.bf16.mxu0 0
        %2117 = vmatpush1.bf16.msra.mxu0 0
        %2118 = vmatprep.subr.bf16.mxu0 0
        %2119 = vmatpush1.bf16.msra.mxu0 0
        %2120 = vmatprep.subr.bf16.mxu0 0
        %2121 = vmatpush1.bf16.msra.mxu0 0
        %2122 = vmatprep.subr.bf16.mxu0 0
        %2123 = vmatpush1.bf16.msra.mxu0 0
        %2124 = vmatprep.subr.bf16.mxu0 0
        %2125 = vmatpush1.bf16.msra.mxu0 0
        %2126 = vmatprep.subr.bf16.mxu0 0
        %2127 = vmatpush1.bf16.msra.mxu0 0
        %2128 = vmatprep.subr.bf16.mxu0 0
        %2129 = vmatpush1.bf16.msra.mxu0 0
        %2130 = vmatprep.subr.bf16.mxu0 0
        %2131 = vmatpush1.bf16.msra.mxu0 0
        %2132 = vmatprep.subr.bf16.mxu0 0
        %2133 = vmatpush1.bf16.msra.mxu0 0
        %2134 = vmatprep.subr.bf16.mxu0 0
        %2135 = vmatpush1.bf16.msra.mxu0 0
        %2136 = vmatprep.subr.bf16.mxu0 0
        %2137 = vmatpush1.bf16.msra.mxu0 0
        %2138 = vmatprep.subr.bf16.mxu0 0
        %2139 = vmatpush1.bf16.msra.mxu0 0
        %2140 = vmatprep.subr.bf16.mxu0 0
        %2141 = vmatpush1.bf16.msra.mxu0 0
        %2142 = vmatprep.subr.bf16.mxu0 0
        %2143 = vmatpush1.bf16.msra.mxu0 0
        %2144 = vmatprep.subr.bf16.mxu0 0
        %2145 = vmatpush1.bf16.msra.mxu0 0
        %2146 = vmatprep.mubr.bf16.mxu0 0
        %2147 = vmatmul.mubr.bf16.gmra.mrb[0].mxu0 %v2112
        %v2148 = vpop.f32.mrb[0].mxu0
        %v2149 = vadd.f32 0.0, %v2148
        %v2150 = vpop.f32.mrb[0].mxu0
        %v2151 = vpop.f32.mrb[0].mxu0
        %v2152 = vpop.f32.mrb[0].mxu0
        %2153 = vdwg.mxu0
        %v2156 = vunpack.c.l.b16 %v1806
        %v2157 = vunpack.c.l.b16 %v1807
        %v2158 = vpack.c.b16 %v2157, %v2156
        %v2161 = vsel %vm985, %v1804, 0
        %2163 = vmatprep.subr.bf16.mxu0 0
        %2164 = vmatpush1.bf16.msra.mxu0 %v2158
        %2165 = vmatprep.subr.bf16.mxu0 0
        %2166 = vmatpush1.bf16.msra.mxu0 0
        %2167 = vmatprep.subr.bf16.mxu0 0
        %2168 = vmatpush1.bf16.msra.mxu0 0
        %2169 = vmatprep.subr.bf16.mxu0 0
        %2170 = vmatpush1.bf16.msra.mxu0 0
        %2171 = vmatprep.subr.bf16.mxu0 0
        %2172 = vmatpush1.bf16.msra.mxu0 0
        %2173 = vmatprep.subr.bf16.mxu0 0
        %2174 = vmatpush1.bf16.msra.mxu0 0
        %2175 = vmatprep.subr.bf16.mxu0 0
        %2176 = vmatpush1.bf16.msra.mxu0 0
        %2177 = vmatprep.subr.bf16.mxu0 0
        %2178 = vmatpush1.bf16.msra.mxu0 0
        %2179 = vmatprep.subr.bf16.mxu0 0
        %2180 = vmatpush1.bf16.msra.mxu0 0
        %2181 = vmatprep.subr.bf16.mxu0 0
        %2182 = vmatpush1.bf16.msra.mxu0 0
        %2183 = vmatprep.subr.bf16.mxu0 0
        %2184 = vmatpush1.bf16.msra.mxu0 0
        %2185 = vmatprep.subr.bf16.mxu0 0
        %2186 = vmatpush1.bf16.msra.mxu0 0
        %2187 = vmatprep.subr.bf16.mxu0 0
        %2188 = vmatpush1.bf16.msra.mxu0 0
        %2189 = vmatprep.subr.bf16.mxu0 0
        %2190 = vmatpush1.bf16.msra.mxu0 0
        %2191 = vmatprep.subr.bf16.mxu0 0
        %2192 = vmatpush1.bf16.msra.mxu0 0
        %2193 = vmatprep.subr.bf16.mxu0 0
        %2194 = vmatpush1.bf16.msra.mxu0 0
        %2195 = vmatprep.mubr.bf16.mxu0 0
        %2196 = vmatmul.mubr.bf16.gmra.mrb[0].mxu0 %v2161
        %v2197 = vpop.f32.mrb[0].mxu0
        %v2198 = vadd.f32 %v2149, %v2197
        %v2199 = vpop.f32.mrb[0].mxu0
        %v2200 = vpop.f32.mrb[0].mxu0
        %v2201 = vpop.f32.mrb[0].mxu0
        %2202 = vdwg.mxu0
        %v2203 = vld [vmem:[%s8 + $0x7] sm:$0x1]
        %v2204 = vlaneseq
        %v2205 = vshrl.u32 %v2204, 7
        %v2206 = vsub.s32 0, %v2205
        %v2207 = vrot.slane %v2203, %v2206
        %v2208 = vadd.f32 %v2198, %v2207
        %v2209 = vadd.f32 %v1503, %v2208
        %v2210 = vsel %vm434, %v2209, 0.0
        %2211 = vadd.xlane.f32.xlu0 %v2210
        %v2212 = vpop.xlane.xlu0 %2211
        %v2213 = vmul.f32 %v2212, %v771
        %v2214 = vsub.f32 %v2209, %v2213
        %v2215 = vmul.f32 %v2214, %v2214
        %v2216 = vsel %vm434, %v2215, 0.0
        %2217 = vadd.xlane.f32.xlu0 %v2216
        %v2218 = vpop.xlane.xlu0 %2217
        %v2219 = vmul.f32 %v2218, %v771
        %v2220 = vadd.f32 %v2219, 1e-06
        %v2221 = vrsqrt.pop %v2220
        %v2222 = vmul.f32 %v2214, %v2221
        %v2223 = vadd.f32 %v705, 1.0
        %v2224 = vlaneseq
        %v2225 = vshrl.u32 %v2224, 7
        %v2226 = vsub.s32 0, %v2225
        %v2227 = vrot.slane %v2223, %v2226
        %v2228 = vmul.f32 %v2222, %v2227
        %v2229 = vlaneseq
        %v2230 = vshrl.u32 %v2229, 7
        %v2231 = vsub.s32 0, %v2230
        %v2232 = vrot.slane %v647, %v2231
        %v2233 = vadd.f32 %v2228, %v2232
        %v2234 = vpack.c.bf16 %v2233, %v2233
        %v2235 = vld [vmem:[%s6] sm:$0xf]
        %v2236 = vld [vmem:[%s6 + $0x4] sm:$0xf]
        %v2237 = vld [vmem:[%s6 + $0x8] sm:$0xf]
        %v2238 = vld [vmem:[%s6 + $0xc] sm:$0xf]
        %v2239 = vld [vmem:[%s10] sm:$0x1]
        %v2241 = vlaneseq
        %v2242 = vshrl.u32 %v2241, 7
        %v2243 = vsub.s32 0, %v2242
        %v2244 = vrot.slane %v2239, %v2243
        %v2250 = vunpack.c.l.b16 %v2235
        %v2251 = vunpack.c.l.b16 %v2236
        %v2252 = vunpack.c.l.b16 %v2237
        %v2253 = vunpack.c.l.b16 %v2238
        %v2254 = vpack.c.b16 %v2251, %v2250
        %v2255 = vpack.c.b16 %v2253, %v2252
        %v2259 = vsel %vm434, %v2234, 0
        %2261 = vmatprep.subr.bf16.mxu0 0
        %2262 = vmatpush1.bf16.msra.mxu0 %v2254
        %2263 = vmatprep.subr.bf16.mxu0 0
        %2264 = vmatpush1.bf16.msra.mxu0 %v2255
        %2265 = vmatprep.subr.bf16.mxu0 0
        %2266 = vmatpush1.bf16.msra.mxu0 0
        %2267 = vmatprep.subr.bf16.mxu0 0
        %2268 = vmatpush1.bf16.msra.mxu0 0
        %2269 = vmatprep.subr.bf16.mxu0 0
        %2270 = vmatpush1.bf16.msra.mxu0 0
        %2271 = vmatprep.subr.bf16.mxu0 0
        %2272 = vmatpush1.bf16.msra.mxu0 0
        %2273 = vmatprep.subr.bf16.mxu0 0
        %2274 = vmatpush1.bf16.msra.mxu0 0
        %2275 = vmatprep.subr.bf16.mxu0 0
        %2276 = vmatpush1.bf16.msra.mxu0 0
        %2277 = vmatprep.subr.bf16.mxu0 0
        %2278 = vmatpush1.bf16.msra.mxu0 0
        %2279 = vmatprep.subr.bf16.mxu0 0
        %2280 = vmatpush1.bf16.msra.mxu0 0
        %2281 = vmatprep.subr.bf16.mxu0 0
        %2282 = vmatpush1.bf16.msra.mxu0 0
        %2283 = vmatprep.subr.bf16.mxu0 0
        %2284 = vmatpush1.bf16.msra.mxu0 0
        %2285 = vmatprep.subr.bf16.mxu0 0
        %2286 = vmatpush1.bf16.msra.mxu0 0
        %2287 = vmatprep.subr.bf16.mxu0 0
        %2288 = vmatpush1.bf16.msra.mxu0 0
        %2289 = vmatprep.subr.bf16.mxu0 0
        %2290 = vmatpush1.bf16.msra.mxu0 0
        %2291 = vmatprep.subr.bf16.mxu0 0
        %2292 = vmatpush1.bf16.msra.mxu0 0
        %2293 = vmatprep.mubr.bf16.mxu0 0
        %2294 = vmatmul.mubr.bf16.gmra.mrb[0].mxu0 %v2259
        %v2295 = vpop.f32.mrb[0].mxu0
        %v2296 = vadd.f32 %v2244, %v2295
        %v2297 = vpop.f32.mrb[0].mxu0
        %v2298 = vpop.f32.mrb[0].mxu0
        %v2299 = vpop.f32.mrb[0].mxu0
        %2300 = vdwg.mxu0
        %v2301 = vmul.f32 %v2296, 0.5
        %v2302 = vmul.f32 %v2296, 0.044715
        %v2303 = vmul.f32 %v2302, %v2296
        %v2304 = vmul.f32 %v2303, %v2296
        %v2305 = vadd.f32 %v2296, %v2304
        %v2306 = vmul.f32 %v2305, 0.7978846
        %v2307 = vtanh.pop %v2306
        %v2308 = vadd.f32 %v2307, 1.0
        %v2309 = vmul.f32 %v2301, %v2308
        %v2310 = vpack.c.bf16 %v2309, %v2309
        %v2311 = vld [vmem:[%s7] sm:$0xf]
        %v2312 = vld [vmem:[%s7 + $0x4] sm:$0xf]
        %v2313 = vld [vmem:[%s7 + $0x8] sm:$0xf]
        %v2314 = vld [vmem:[%s7 + $0xc] sm:$0xf]
        %v2315 = vld [vmem:[%s7 + $0x10] sm:$0xf]
        %v2316 = vld [vmem:[%s7 + $0x14] sm:$0xf]
        %v2317 = vld [vmem:[%s7 + $0x18] sm:$0xf]
        %v2318 = vld [vmem:[%s7 + $0x1c] sm:$0xf]
        %v2319 = vld [vmem:[%s7 + $0x20] sm:$0xf]
        %v2320 = vld [vmem:[%s7 + $0x24] sm:$0xf]
        %v2321 = vld [vmem:[%s7 + $0x28] sm:$0xf]
        %v2322 = vld [vmem:[%s7 + $0x2c] sm:$0xf]
        %v2323 = vld [vmem:[%s7 + $0x30] sm:$0xf]
        %v2324 = vld [vmem:[%s7 + $0x34] sm:$0xf]
        %v2325 = vld [vmem:[%s7 + $0x38] sm:$0xf]
        %v2326 = vld [vmem:[%s7 + $0x3c] sm:$0xf]
        %v2327 = vld [vmem:[%s8 + $0x8] sm:$0x1]
        %v2328 = vlaneseq
        %v2329 = vshrl.u32 %v2328, 7
        %v2330 = vsub.s32 0, %v2329
        %v2331 = vrot.slane %v2327, %v2330
        %v2348 = vunpack.c.l.b16 %v2311
        %v2349 = vunpack.c.l.b16 %v2312
        %v2350 = vunpack.c.l.b16 %v2313
        %v2351 = vunpack.c.l.b16 %v2314
        %v2352 = vunpack.c.l.b16 %v2315
        %v2353 = vunpack.c.l.b16 %v2316
        %v2354 = vunpack.c.l.b16 %v2317
        %v2355 = vunpack.c.l.b16 %v2318
        %v2356 = vunpack.c.l.b16 %v2319
        %v2357 = vunpack.c.l.b16 %v2320
        %v2358 = vunpack.c.l.b16 %v2321
        %v2359 = vunpack.c.l.b16 %v2322
        %v2360 = vunpack.c.l.b16 %v2323
        %v2361 = vunpack.c.l.b16 %v2324
        %v2362 = vunpack.c.l.b16 %v2325
        %v2363 = vunpack.c.l.b16 %v2326
        %v2364 = vpack.c.b16 %v2349, %v2348
        %v2365 = vpack.c.b16 %v2351, %v2350
        %v2366 = vpack.c.b16 %v2353, %v2352
        %v2367 = vpack.c.b16 %v2355, %v2354
        %v2368 = vpack.c.b16 %v2357, %v2356
        %v2369 = vpack.c.b16 %v2359, %v2358
        %v2370 = vpack.c.b16 %v2361, %v2360
        %v2371 = vpack.c.b16 %v2363, %v2362
        %2380 = vmatprep.subr.bf16.mxu0 0
        %2381 = vmatpush1.bf16.msra.mxu0 %v2364
        %2382 = vmatprep.subr.bf16.mxu0 0
        %2383 = vmatpush1.bf16.msra.mxu0 %v2365
        %2384 = vmatprep.subr.bf16.mxu0 0
        %2385 = vmatpush1.bf16.msra.mxu0 %v2366
        %2386 = vmatprep.subr.bf16.mxu0 0
        %2387 = vmatpush1.bf16.msra.mxu0 %v2367
        %2388 = vmatprep.subr.bf16.mxu0 0
        %2389 = vmatpush1.bf16.msra.mxu0 %v2368
        %2390 = vmatprep.subr.bf16.mxu0 0
        %2391 = vmatpush1.bf16.msra.mxu0 %v2369
        %2392 = vmatprep.subr.bf16.mxu0 0
        %2393 = vmatpush1.bf16.msra.mxu0 %v2370
        %2394 = vmatprep.subr.bf16.mxu0 0
        %2395 = vmatpush1.bf16.msra.mxu0 %v2371
        %2396 = vmatprep.subr.bf16.mxu0 0
        %2397 = vmatpush1.bf16.msra.mxu0 0
        %2398 = vmatprep.subr.bf16.mxu0 0
        %2399 = vmatpush1.bf16.msra.mxu0 0
        %2400 = vmatprep.subr.bf16.mxu0 0
        %2401 = vmatpush1.bf16.msra.mxu0 0
        %2402 = vmatprep.subr.bf16.mxu0 0
        %2403 = vmatpush1.bf16.msra.mxu0 0
        %2404 = vmatprep.subr.bf16.mxu0 0
        %2405 = vmatpush1.bf16.msra.mxu0 0
        %2406 = vmatprep.subr.bf16.mxu0 0
        %2407 = vmatpush1.bf16.msra.mxu0 0
        %2408 = vmatprep.subr.bf16.mxu0 0
        %2409 = vmatpush1.bf16.msra.mxu0 0
        %2410 = vmatprep.subr.bf16.mxu0 0
        %2411 = vmatpush1.bf16.msra.mxu0 0
        %2412 = vmatprep.mubr.bf16.mxu0 0
        %2413 = vmatmul.mubr.bf16.gmra.mrb[0].mxu0 %v2310
        %v2414 = vpop.f32.mrb[0].mxu0
        %v2415 = vadd.f32 %v2331, %v2414
        %v2416 = vpop.f32.mrb[0].mxu0
        %v2417 = vpop.f32.mrb[0].mxu0
        %v2418 = vpop.f32.mrb[0].mxu0
        %2419 = vdwg.mxu0
        %v2420 = vlaneseq
        %v2421 = vshrl.u32 %v2420, 7
        %v2422 = vsub.s32 0, %v2421
        %v2423 = vrot.slane %v763, %v2422
        %v2424 = vmul.f32 %v2423, %v2415
        %v2425 = vadd.f32 %v2209, %v2424
        %2426 = vst.msk [vmem:[%s401] sm:$0xff] %vm434, %v2425
        %s2427 = sand.u32 %s272, 1
        %s2428 = scalar_lea.sflag [#allocation4], %s2427
        %s2429 = sand.u32 %s272, 1
        %s2430 = smul.addr %s2429, 8
        %s2431 = scalar_lea.vmem [#allocation5], %s2430
        // Predicated region
        $region69: #{sana_ms_adaln_block.1} parent=63 // pred_check
          %p2432 = pneg %p282
        $region70: #{sana_ms_adaln_block.1} parent=63 // pred_check_branch
          %2434 = sbr.rel (%p2432) target = $region72
        $region71: #{sana_ms_adaln_block.1} parent=63 // pred_region
          %s2436 = ssub.s32 128, 128
          %2437 = vsyncadd %s2428, %s2436
          %s2438 = smul.addr %s28, 128
          %s2439 = scalar_lea.hbm %s11, %s2438
          %s2441 = sshll.u32 %s2431, 4
          %s2442 = int_to_ptr.vmem [resolvable:$true] %s2441
          %2444 = dma.vmem_to_hbm [thread:$0]  %s2442, 128, %s2439, %s2428
        $region72: #{sana_ms_adaln_block.1} parent=63 // pred_fallthru
          _
      $region64: #{sana_ms_adaln_block.1} parent=5 // pred_fallthru
        _
      %p2445 = scmp.le.s32.totalorder 2, %s23
      // Predicated region
      $region73: #{sana_ms_adaln_block.1} parent=5 // pred_check
        %p2446 = pneg %p2445
      $region74: #{sana_ms_adaln_block.1} parent=5 // pred_check_branch
        %2448 = sbr.rel (%p2446) target = $region76
      $region75: #{sana_ms_adaln_block.1} parent=5 // pred_region
        %s2449 = ssub.s32 %s23, 2
        // Predicated region
        $region77: #{sana_ms_adaln_block.1} parent=75 // pred_check
          %p2450 = pneg %p288
        $region78: #{sana_ms_adaln_block.1} parent=75 // pred_check_branch
          %2452 = sbr.rel (%p2450) target = $region80
        $region79: #{sana_ms_adaln_block.1} parent=75 // pred_region
          %s2453 = sand.u32 %s273, 1
          %s2454 = scalar_lea.sflag [#allocation4], %s2453
          %s2455 = sand.u32 %s273, 1
          %s2456 = smul.addr %s2455, 8
          %s2457 = scalar_lea.vmem [#allocation5], %s2456
          %2458 = dma.done %s2454, 128
        $region80: #{sana_ms_adaln_block.1} parent=75 // pred_fallthru
          _
      $region76: #{sana_ms_adaln_block.1} parent=5 // pred_fallthru
        _
    $region6: #{sana_ms_adaln_block.1} parent=1 // loop_footer
      %s27 = sadd.s32 1, %s23
    $region7: #{sana_ms_adaln_block.1} parent=1 // loop_footer_branch
      %22 = sbr.rel target = $region3
    $region8: #{sana_ms_adaln_block.1} parent=1 // loop_exit
      _
    %2459 = vsyncpa [#allocation3], 1
    %s2460 = scalar_lea.sflag [#allocation3], 1
    %2461 = vsyncpa %s2460, 1
    %2462 = vsyncpa [#allocation4], 1
    %s2463 = scalar_lea.sflag [#allocation4], 1
    %2464 = vsyncpa %s2463, 1

</llo_original>
